<compile_context>
chip_gen: v5e
topology: v5e:2x2
jax: 0.10.0
libtpu: 0.0.40
codegen_flags: <defaults>
</compile_context>

<pallas_src>
import functools

import jax
import jax.numpy as jnp
from jax import lax
from jax.experimental import pallas as pl
from jax.experimental.pallas import tpu as pltpu

C_FEATURES = 32          # original: 256 (same layer structure, shrunk for the demo)
BN_EPS = 1e-3            # ultralytics BatchNorm2d default eps
LANE = 128
SUBLANE = 8


def _round_up(x, m):
    return (x + m - 1) // m * m


# ----------------------------------------------------------------------------
# Pallas kernel factory: fused kxk conv (+BN+SiLU) [+ optional 1x1 conv+BN+SiLU]
# ----------------------------------------------------------------------------
def _make_conv_kernel(k, s, fuse_pw):
    """Per grid step (one image):  y = SiLU(conv_kxk_s(x) * bn_scale + bn_bias)
    and optionally                 y = SiLU(y @ W_1x1 + b_1x1)   (fused pointwise conv).

    The k*k taps are static shifted slices of the s*s parity planes held in VMEM;
    each tap is one (Wo, Cin) x (Cin, Cout) bf16 matmul accumulated in f32.
    """
    taps = []
    for t in range(k * k):
        di, dj = divmod(t, k)
        taps.append(((di % s) * s + (dj % s), di // s, dj // s))  # (plane_id, row_shift, col_shift)

    def kernel(x_ref, w1_ref, b1_ref, *rest):
        if fuse_pw:
            w2_ref, b2_ref, o_ref = rest
        else:
            (o_ref,) = rest

        _, Ho, Wo, _ = o_ref.shape
        c1 = w1_ref.shape[-1]

        b1 = b1_ref[...]                      # (1, c1) f32 — hoisted out of the row loop
        if fuse_pw:
            b2 = b2_ref[...]

        def silu(v):                          # f32 epilogue; exp + approx recip use the EUP slot
            return v * pl.reciprocal(1.0 + jnp.exp(-v), approx=True)

        def row_body(i, carry):
            acc = jnp.zeros((Wo, c1), jnp.float32)
            for t, (plane, sh, sw) in enumerate(taps):
                # unstrided shifted slice of the parity plane: (Wo, cin_p) bf16
                patch = x_ref[0, plane, i + sh, pl.ds(sw, Wo), :]
                acc += jnp.dot(patch, w1_ref[t], preferred_element_type=jnp.float32)
            h = silu(acc + b1)
            if fuse_pw:
                h = silu(jnp.dot(h.astype(jnp.bfloat16), w2_ref[...],
                                 preferred_element_type=jnp.float32) + b2)
            o_ref[0, i, :, :] = h.astype(o_ref.dtype)   # lane-dense (Wo, 128) store
            return carry

        lax.fori_loop(0, Ho, row_body, 0)

    return kernel


# ----------------------------------------------------------------------------
# Glue: space-to-depth parity planes (pure layout, ~1x padded activation bytes)
# ----------------------------------------------------------------------------
def _space_to_depth(x, k, s):
    """NHWC -> (N, s*s, Hp, Wp, C): plane (a*s+b)[r, c] = x_padded[r*s + a, c*s + b].
    Every conv tap then becomes an unstrided shifted slice inside the kernel."""
    N, H, W, C = x.shape
    p = k // 2
    Ho = (H + 2 * p - k) // s + 1
    Wo = (W + 2 * p - k) // s + 1
    shift = (k - 1) // s
    Hp, Wp = Ho + shift, Wo + shift
    xp = jnp.pad(x, ((0, 0), (p, s * Hp - H - p), (p, s * Wp - W - p), (0, 0)))
    planes = xp.reshape(N, Hp, s, Wp, s, C)
    planes = jnp.transpose(planes, (0, 2, 4, 1, 3, 5)).reshape(N, s * s, Hp, Wp, C)
    return planes, Ho, Wo


def conv_block(x, prep, *, k, s, fuse_pw):
    """One ultralytics Conv block (optionally fused with a following 1x1 Conv block)
    as a single pallas_call.  x: (N, H, W, cin_p) bf16, channel-padded."""
    N = x.shape[0]
    w1, b1 = prep["w1"], prep["b1"]
    planes, Ho, Wo = _space_to_depth(x, k, s)
    _, T, Hp, Wp, cin_p = planes.shape
    c1 = w1.shape[-1]
    cout_p = prep["w2"].shape[-1] if fuse_pw else c1

    operands = [planes, w1, b1]
    in_specs = [
        pl.BlockSpec((1, T, Hp, Wp, cin_p), lambda n: (n, 0, 0, 0, 0)),
        pl.BlockSpec(w1.shape, lambda n: (0, 0, 0)),   # constant index map -> stays resident
        pl.BlockSpec(b1.shape, lambda n: (0, 0)),
    ]
    if fuse_pw:
        w2, b2 = prep["w2"], prep["b2"]
        operands += [w2, b2]
        in_specs += [pl.BlockSpec(w2.shape, lambda n: (0, 0)),
                     pl.BlockSpec(b2.shape, lambda n: (0, 0))]

    flops = 2 * N * Ho * Wo * (k * k) * cin_p * c1
    trans = N * Ho * Wo * c1
    if fuse_pw:
        flops += 2 * N * Ho * Wo * c1 * cout_p
        trans += N * Ho * Wo * cout_p
    bytes_acc = sum(int(a.size) * a.dtype.itemsize for a in operands) + N * Ho * Wo * cout_p * 2

    out = pl.pallas_call(
        _make_conv_kernel(k, s, fuse_pw),
        out_shape=jax.ShapeDtypeStruct((N, Ho, Wo, cout_p), jnp.bfloat16),
        grid=(N,),
        in_specs=in_specs,
        out_specs=pl.BlockSpec((1, Ho, Wo, cout_p), lambda n: (n, 0, 0, 0)),
        compiler_params=pltpu.CompilerParams(dimension_semantics=("parallel",)),
        cost_estimate=pl.CostEstimate(flops=flops, transcendentals=trans,
                                      bytes_accessed=bytes_acc),
    )(*operands)
    return out


# ----------------------------------------------------------------------------
# One-time parameter preparation: fold BN, pad channels, cast weights to bf16
# ----------------------------------------------------------------------------
def _fold_conv_bn(block_params, cin_p, cout_p):
    """Returns w: (k*k, cin_p, cout_p) bf16 (tap-major), b: (1, cout_p) f32."""
    w, gamma, beta, mean, var = block_params
    cout, cin, k, _ = w.shape
    inv_std = gamma / jnp.sqrt(var + BN_EPS)
    w_t = jnp.transpose(w, (2, 3, 1, 0)).reshape(k * k, cin, cout) * inv_std[None, None, :]
    b = (beta - mean * inv_std).reshape(1, cout)
    w_t = jnp.pad(w_t, ((0, 0), (0, cin_p - cin), (0, cout_p - cout))).astype(jnp.bfloat16)
    b = jnp.pad(b, ((0, 0), (0, cout_p - cout))).astype(jnp.float32)
    return w_t, b


def prepare_params(raw, in_channels=3):
    """BN folding + channel padding, done once outside the per-forward path."""
    C = C_FEATURES
    cp = lambda c: _round_up(c, LANE)
    cin0 = _round_up(in_channels, SUBLANE)   # raw image channels only padded to a sublane multiple
    prep = {}
    for name, cin_p, cout in (("stem", cin0, C // 8),
                              ("layer1", cp(C // 8), C // 4),
                              ("p3", cp(C // 4), C)):
        w1, b1 = _fold_conv_bn(raw[name], cin_p, cp(cout))
        prep[name] = {"w1": w1, "b1": b1}
    for name, k33, k11 in (("p4", "p4_0", "p4_1"), ("p5", "p5_0", "p5_1")):
        w1, b1 = _fold_conv_bn(raw[k33], cp(C), cp(C))
        w2, b2 = _fold_conv_bn(raw[k11], cp(C), cp(C))
        prep[name] = {"w1": w1, "b1": b1, "w2": w2[0], "b2": b2}
    return prep


# ----------------------------------------------------------------------------
# Backbone forward (mirrors YOLOv11Backbone.forward; NCHW in / NCHW out)
# ----------------------------------------------------------------------------
def yolov11_backbone(x_nchw, prep):
    cin = x_nchw.shape[1]
    x = jnp.transpose(x_nchw, (0, 2, 3, 1)).astype(jnp.bfloat16)   # NCHW -> NHWC, bf16 on the wire
    cin_p = _round_up(cin, SUBLANE)
    if cin_p != cin:
        x = jnp.pad(x, ((0, 0), (0, 0), (0, 0), (0, cin_p - cin)))

    x = conv_block(x, prep["stem"], k=3, s=2, fuse_pw=False)       # Conv(in, C/8, 3, 2)
    x = conv_block(x, prep["layer1"], k=3, s=2, fuse_pw=False)     # Conv(C/8, C/4, 3, 2)
    f_p3 = conv_block(x, prep["p3"], k=3, s=2, fuse_pw=False)      # Conv(C/4, C, 3, 2)
    f_p4 = conv_block(f_p3, prep["p4"], k=3, s=2, fuse_pw=True)    # Conv(C,C,3,2) + Conv(C,C,1,1) fused
    f_p5 = conv_block(f_p4, prep["p5"], k=3, s=2, fuse_pw=True)    # Conv(C,C,3,2) + Conv(C,C,1,1) fused

    def finish(t):   # drop channel padding, back to NCHW f32 like the torch module
        return jnp.transpose(t[..., :C_FEATURES].astype(jnp.float32), (0, 3, 1, 2))

    return finish(f_p3), finish(f_p4), finish(f_p5)


# ----------------------------------------------------------------------------
# Deterministic parameter init (shapes follow the module's __init__)
# ----------------------------------------------------------------------------
def _init_conv_block(key, cin, cout, k):
    kw, kg, kb, km, kv = jax.random.split(key, 5)
    w = 0.1 * jax.random.normal(kw, (cout, cin, k, k), jnp.float32)   # OIHW, bias=False
    gamma = 1.0 + 0.1 * jax.random.normal(kg, (cout,), jnp.float32)
    beta = 0.1 * jax.random.normal(kb, (cout,), jnp.float32)
    mean = 0.1 * jax.random.normal(km, (cout,), jnp.float32)
    var = jnp.abs(1.0 + 0.1 * jax.random.normal(kv, (cout,), jnp.float32))
    return (w, gamma, beta, mean, var)


def init_params(key, in_channels=3):
    C = C_FEATURES
    keys = jax.random.split(key, 7)
    return {
        "stem":   _init_conv_block(keys[0], in_channels, C // 8, 3),
        "layer1": _init_conv_block(keys[1], C // 8, C // 4, 3),
        "p3":     _init_conv_block(keys[2], C // 4, C, 3),
        "p4_0":   _init_conv_block(keys[3], C, C, 3),
        "p4_1":   _init_conv_block(keys[4], C, C, 1),
        "p5_0":   _init_conv_block(keys[5], C, C, 3),
        "p5_1":   _init_conv_block(keys[6], C, C, 1),
    }


# ----------------------------------------------------------------------------
# Pure-JAX f32 reference (lax.conv) for a correctness sanity check
# ----------------------------------------------------------------------------
def _ref_conv_bn_silu(x_nhwc, params, k, s):
    w_oihw, gamma, beta, mean, var = params
    p = k // 2
    y = lax.conv_general_dilated(
        x_nhwc, jnp.transpose(w_oihw, (2, 3, 1, 0)), (s, s), ((p, p), (p, p)),
        dimension_numbers=("NHWC", "HWIO", "NHWC"))
    inv_std = gamma / jnp.sqrt(var + BN_EPS)
    y = (y - mean) * inv_std + beta
    return y * jax.nn.sigmoid(y)


def _ref_backbone(x_nchw, params):
    x = jnp.transpose(x_nchw, (0, 2, 3, 1))
    x = _ref_conv_bn_silu(x, params["stem"], 3, 2)
    x = _ref_conv_bn_silu(x, params["layer1"], 3, 2)
    f_p3 = _ref_conv_bn_silu(x, params["p3"], 3, 2)
    x_p4 = _ref_conv_bn_silu(f_p3, params["p4_0"], 3, 2)
    f_p4 = _ref_conv_bn_silu(x_p4, params["p4_1"], 1, 1)
    x_p5 = _ref_conv_bn_silu(f_p4, params["p5_0"], 3, 2)
    f_p5 = _ref_conv_bn_silu(x_p5, params["p5_1"], 1, 1)
    to_nchw = lambda t: jnp.transpose(t, (0, 3, 1, 2))
    return to_nchw(f_p3), to_nchw(f_p4), to_nchw(f_p5)


if __name__ == "__main__":
    key = jax.random.PRNGKey(0)
    k_param, k_x = jax.random.split(key)
    raw_params = init_params(k_param, in_channels=3)
    prep = prepare_params(raw_params, in_channels=3)   # BN fold + pad + bf16 cast, once

    # Small synthetic input: batch=2, channels=3, 64x64 -> P3/P4/P5 at strides 8/16/32.
    x = jax.random.normal(k_x, (2, 3, 64, 64), jnp.float32)

    fwd = jax.jit(yolov11_backbone)
    f_p3, f_p4, f_p5 = jax.block_until_ready(fwd(x, prep))

    assert f_p3.shape == (2, C_FEATURES, 8, 8)
    assert f_p4.shape == (2, C_FEATURES, 4, 4)
    assert f_p5.shape == (2, C_FEATURES, 2, 2)

    # Sanity check against an f32 lax.conv reference.  Tolerance accounts for the bf16
    # activation/weight path (MXU inputs bf16, f32 accumulation) across 7 stacked layers.
    r_p3, r_p4, r_p5 = _ref_backbone(x, raw_params)
    for got, ref in ((f_p3, r_p3), (f_p4, r_p4), (f_p5, r_p5)):
        max_err = float(jnp.max(jnp.abs(got - ref)))
        assert jnp.allclose(got, ref, rtol=5e-2, atol=5e-2), f"mismatch vs reference (max abs err {max_err})"

    print("KERNEL_OK")
</pallas_src>

<mosaic_0001>
module attributes {stable_mosaic.version = 11 : i64} {
  func.func @kernel(%arg0: i32, %arg1: memref<1x4x33x33x8xbf16, #tpu.memory_space<vmem>>, %arg2: memref<9x8x128xbf16, #tpu.memory_space<vmem>>, %arg3: memref<1x128xf32, #tpu.memory_space<vmem>>, %arg4: memref<1x32x32x128xbf16, #tpu.memory_space<vmem>>) attributes {dimension_semantics = [#tpu.dimension_semantics<parallel>], iteration_bounds = array<i64: 2>, scalar_prefetch = 0 : i64, scratch_operands = 0 : i64, tpu.core_type = #tpu.core_type<tc>, window_params = [{transform_indices = @transform_0, window_bounds = array<i64: 1, 4, 33, 33, 8>}, {pipeline_mode = #tpu.pipeline_mode<synchronous>, transform_indices = @transform_1, window_bounds = array<i64: 9, 8, 128>}, {pipeline_mode = #tpu.pipeline_mode<synchronous>, transform_indices = @transform_2, window_bounds = array<i64: 1, 128>}, {transform_indices = @transform_3, window_bounds = array<i64: 1, 32, 32, 128>}]} {
    %c0 = arith.constant 0 : index
    %c0_0 = arith.constant 0 : index
    %0 = vector.load %arg3[%c0, %c0_0] : memref<1x128xf32, #tpu.memory_space<vmem>>, vector<1x128xf32>
    %c0_i32 = arith.constant 0 : i32
    %c32_i32 = arith.constant 32 : i32
    %1 = arith.addi %c0_i32, %c32_i32 : i32
    %c1_i32 = arith.constant 1 : i32
    scf.for %arg5 = %c0_i32 to %1 step %c1_i32  : i32 {
      %cst = arith.constant 0.000000e+00 : f32
      %2 = vector.broadcast %cst : f32 to vector<32x128xf32>
      %c0_i32_2 = arith.constant 0 : i32
      %3 = arith.addi %arg5, %c0_i32_2 : i32
      %c0_3 = arith.constant 0 : index
      %c0_4 = arith.constant 0 : index
      %4 = arith.index_cast %3 : i32 to index
      %c0_5 = arith.constant 0 : index
      %c0_6 = arith.constant 0 : index
      %5 = vector.load %arg1[%c0_3, %c0_4, %4, %c0_5, %c0_6] : memref<1x4x33x33x8xbf16, #tpu.memory_space<vmem>>, vector<1x1x1x32x8xbf16>
      %6 = vector.shape_cast %5 : vector<1x1x1x32x8xbf16> to vector<32x8xbf16>
      %c0_7 = arith.constant 0 : index
      %c0_8 = arith.constant 0 : index
      %c0_9 = arith.constant 0 : index
      %7 = vector.load %arg2[%c0_7, %c0_8, %c0_9] : memref<9x8x128xbf16, #tpu.memory_space<vmem>>, vector<1x8x128xbf16>
      %8 = vector.shape_cast %7 : vector<1x8x128xbf16> to vector<8x128xbf16>
      %cst_10 = arith.constant dense<0.000000e+00> : vector<32x128xf32>
      %9 = tpu.matmul %6, %8, %cst_10 {dimension_numbers = #tpu.dot_dimension_numbers<[1], [0], [0], [1], [0, 0, 1, 1], [], []>} : vector<32x8xbf16>, vector<8x128xbf16>, vector<32x128xf32> -> vector<32x128xf32>
      %10 = arith.addf %2, %9 : vector<32x128xf32>
      %c0_i32_11 = arith.constant 0 : i32
      %11 = arith.addi %arg5, %c0_i32_11 : i32
      %c0_12 = arith.constant 0 : index
      %c1 = arith.constant 1 : index
      %12 = arith.index_cast %11 : i32 to index
      %c0_13 = arith.constant 0 : index
      %c0_14 = arith.constant 0 : index
      %13 = vector.load %arg1[%c0_12, %c1, %12, %c0_13, %c0_14] : memref<1x4x33x33x8xbf16, #tpu.memory_space<vmem>>, vector<1x1x1x32x8xbf16>
      %14 = vector.shape_cast %13 : vector<1x1x1x32x8xbf16> to vector<32x8xbf16>
      %c1_15 = arith.constant 1 : index
      %c0_16 = arith.constant 0 : index
      %c0_17 = arith.constant 0 : index
      %15 = vector.load %arg2[%c1_15, %c0_16, %c0_17] : memref<9x8x128xbf16, #tpu.memory_space<vmem>>, vector<1x8x128xbf16>
      %16 = vector.shape_cast %15 : vector<1x8x128xbf16> to vector<8x128xbf16>
      %cst_18 = arith.constant dense<0.000000e+00> : vector<32x128xf32>
      %17 = tpu.matmul %14, %16, %cst_18 {dimension_numbers = #tpu.dot_dimension_numbers<[1], [0], [0], [1], [0, 0, 1, 1], [], []>} : vector<32x8xbf16>, vector<8x128xbf16>, vector<32x128xf32> -> vector<32x128xf32>
      %18 = arith.addf %10, %17 : vector<32x128xf32>
      %c0_i32_19 = arith.constant 0 : i32
      %19 = arith.addi %arg5, %c0_i32_19 : i32
      %c0_20 = arith.constant 0 : index
      %c0_21 = arith.constant 0 : index
      %20 = arith.index_cast %19 : i32 to index
      %c1_22 = arith.constant 1 : index
      %c0_23 = arith.constant 0 : index
      %21 = vector.load %arg1[%c0_20, %c0_21, %20, %c1_22, %c0_23] : memref<1x4x33x33x8xbf16, #tpu.memory_space<vmem>>, vector<1x1x1x32x8xbf16>
      %22 = vector.shape_cast %21 : vector<1x1x1x32x8xbf16> to vector<32x8xbf16>
      %c2 = arith.constant 2 : index
      %c0_24 = arith.constant 0 : index
      %c0_25 = arith.constant 0 : index
      %23 = vector.load %arg2[%c2, %c0_24, %c0_25] : memref<9x8x128xbf16, #tpu.memory_space<vmem>>, vector<1x8x128xbf16>
      %24 = vector.shape_cast %23 : vector<1x8x128xbf16> to vector<8x128xbf16>
      %cst_26 = arith.constant dense<0.000000e+00> : vector<32x128xf32>
      %25 = tpu.matmul %22, %24, %cst_26 {dimension_numbers = #tpu.dot_dimension_numbers<[1], [0], [0], [1], [0, 0, 1, 1], [], []>} : vector<32x8xbf16>, vector<8x128xbf16>, vector<32x128xf32> -> vector<32x128xf32>
      %26 = arith.addf %18, %25 : vector<32x128xf32>
      %c0_i32_27 = arith.constant 0 : i32
      %27 = arith.addi %arg5, %c0_i32_27 : i32
      %c0_28 = arith.constant 0 : index
      %c2_29 = arith.constant 2 : index
      %28 = arith.index_cast %27 : i32 to index
      %c0_30 = arith.constant 0 : index
      %c0_31 = arith.constant 0 : index
      %29 = vector.load %arg1[%c0_28, %c2_29, %28, %c0_30, %c0_31] : memref<1x4x33x33x8xbf16, #tpu.memory_space<vmem>>, vector<1x1x1x32x8xbf16>
      %30 = vector.shape_cast %29 : vector<1x1x1x32x8xbf16> to vector<32x8xbf16>
      %c3 = arith.constant 3 : index
      %c0_32 = arith.constant 0 : index
      %c0_33 = arith.constant 0 : index
      %31 = vector.load %arg2[%c3, %c0_32, %c0_33] : memref<9x8x128xbf16, #tpu.memory_space<vmem>>, vector<1x8x128xbf16>
      %32 = vector.shape_cast %31 : vector<1x8x128xbf16> to vector<8x128xbf16>
      %cst_34 = arith.constant dense<0.000000e+00> : vector<32x128xf32>
      %33 = tpu.matmul %30, %32, %cst_34 {dimension_numbers = #tpu.dot_dimension_numbers<[1], [0], [0], [1], [0, 0, 1, 1], [], []>} : vector<32x8xbf16>, vector<8x128xbf16>, vector<32x128xf32> -> vector<32x128xf32>
      %34 = arith.addf %26, %33 : vector<32x128xf32>
      %c0_i32_35 = arith.constant 0 : i32
      %35 = arith.addi %arg5, %c0_i32_35 : i32
      %c0_36 = arith.constant 0 : index
      %c3_37 = arith.constant 3 : index
      %36 = arith.index_cast %35 : i32 to index
      %c0_38 = arith.constant 0 : index
      %c0_39 = arith.constant 0 : index
      %37 = vector.load %arg1[%c0_36, %c3_37, %36, %c0_38, %c0_39] : memref<1x4x33x33x8xbf16, #tpu.memory_space<vmem>>, vector<1x1x1x32x8xbf16>
      %38 = vector.shape_cast %37 : vector<1x1x1x32x8xbf16> to vector<32x8xbf16>
      %c4 = arith.constant 4 : index
      %c0_40 = arith.constant 0 : index
      %c0_41 = arith.constant 0 : index
      %39 = vector.load %arg2[%c4, %c0_40, %c0_41] : memref<9x8x128xbf16, #tpu.memory_space<vmem>>, vector<1x8x128xbf16>
      %40 = vector.shape_cast %39 : vector<1x8x128xbf16> to vector<8x128xbf16>
      %cst_42 = arith.constant dense<0.000000e+00> : vector<32x128xf32>
      %41 = tpu.matmul %38, %40, %cst_42 {dimension_numbers = #tpu.dot_dimension_numbers<[1], [0], [0], [1], [0, 0, 1, 1], [], []>} : vector<32x8xbf16>, vector<8x128xbf16>, vector<32x128xf32> -> vector<32x128xf32>
      %42 = arith.addf %34, %41 : vector<32x128xf32>
      %c0_i32_43 = arith.constant 0 : i32
      %43 = arith.addi %arg5, %c0_i32_43 : i32
      %c0_44 = arith.constant 0 : index
      %c2_45 = arith.constant 2 : index
      %44 = arith.index_cast %43 : i32 to index
      %c1_46 = arith.constant 1 : index
      %c0_47 = arith.constant 0 : index
      %45 = vector.load %arg1[%c0_44, %c2_45, %44, %c1_46, %c0_47] : memref<1x4x33x33x8xbf16, #tpu.memory_space<vmem>>, vector<1x1x1x32x8xbf16>
      %46 = vector.shape_cast %45 : vector<1x1x1x32x8xbf16> to vector<32x8xbf16>
      %c5 = arith.constant 5 : index
      %c0_48 = arith.constant 0 : index
      %c0_49 = arith.constant 0 : index
      %47 = vector.load %arg2[%c5, %c0_48, %c0_49] : memref<9x8x128xbf16, #tpu.memory_space<vmem>>, vector<1x8x128xbf16>
      %48 = vector.shape_cast %47 : vector<1x8x128xbf16> to vector<8x128xbf16>
      %cst_50 = arith.constant dense<0.000000e+00> : vector<32x128xf32>
      %49 = tpu.matmul %46, %48, %cst_50 {dimension_numbers = #tpu.dot_dimension_numbers<[1], [0], [0], [1], [0, 0, 1, 1], [], []>} : vector<32x8xbf16>, vector<8x128xbf16>, vector<32x128xf32> -> vector<32x128xf32>
      %50 = arith.addf %42, %49 : vector<32x128xf32>
      %c1_i32_51 = arith.constant 1 : i32
      %51 = arith.addi %arg5, %c1_i32_51 : i32
      %c0_52 = arith.constant 0 : index
      %c0_53 = arith.constant 0 : index
      %52 = arith.index_cast %51 : i32 to index
      %c0_54 = arith.constant 0 : index
      %c0_55 = arith.constant 0 : index
      %53 = vector.load %arg1[%c0_52, %c0_53, %52, %c0_54, %c0_55] : memref<1x4x33x33x8xbf16, #tpu.memory_space<vmem>>, vector<1x1x1x32x8xbf16>
      %54 = vector.shape_cast %53 : vector<1x1x1x32x8xbf16> to vector<32x8xbf16>
      %c6 = arith.constant 6 : index
      %c0_56 = arith.constant 0 : index
      %c0_57 = arith.constant 0 : index
      %55 = vector.load %arg2[%c6, %c0_56, %c0_57] : memref<9x8x128xbf16, #tpu.memory_space<vmem>>, vector<1x8x128xbf16>
      %56 = vector.shape_cast %55 : vector<1x8x128xbf16> to vector<8x128xbf16>
      %cst_58 = arith.constant dense<0.000000e+00> : vector<32x128xf32>
      %57 = tpu.matmul %54, %56, %cst_58 {dimension_numbers = #tpu.dot_dimension_numbers<[1], [0], [0], [1], [0, 0, 1, 1], [], []>} : vector<32x8xbf16>, vector<8x128xbf16>, vector<32x128xf32> -> vector<32x128xf32>
      %58 = arith.addf %50, %57 : vector<32x128xf32>
      %c1_i32_59 = arith.constant 1 : i32
      %59 = arith.addi %arg5, %c1_i32_59 : i32
      %c0_60 = arith.constant 0 : index
      %c1_61 = arith.constant 1 : index
      %60 = arith.index_cast %59 : i32 to index
      %c0_62 = arith.constant 0 : index
      %c0_63 = arith.constant 0 : index
      %61 = vector.load %arg1[%c0_60, %c1_61, %60, %c0_62, %c0_63] : memref<1x4x33x33x8xbf16, #tpu.memory_space<vmem>>, vector<1x1x1x32x8xbf16>
      %62 = vector.shape_cast %61 : vector<1x1x1x32x8xbf16> to vector<32x8xbf16>
      %c7 = arith.constant 7 : index
      %c0_64 = arith.constant 0 : index
      %c0_65 = arith.constant 0 : index
      %63 = vector.load %arg2[%c7, %c0_64, %c0_65] : memref<9x8x128xbf16, #tpu.memory_space<vmem>>, vector<1x8x128xbf16>
      %64 = vector.shape_cast %63 : vector<1x8x128xbf16> to vector<8x128xbf16>
      %cst_66 = arith.constant dense<0.000000e+00> : vector<32x128xf32>
      %65 = tpu.matmul %62, %64, %cst_66 {dimension_numbers = #tpu.dot_dimension_numbers<[1], [0], [0], [1], [0, 0, 1, 1], [], []>} : vector<32x8xbf16>, vector<8x128xbf16>, vector<32x128xf32> -> vector<32x128xf32>
      %66 = arith.addf %58, %65 : vector<32x128xf32>
      %c1_i32_67 = arith.constant 1 : i32
      %67 = arith.addi %arg5, %c1_i32_67 : i32
      %c0_68 = arith.constant 0 : index
      %c0_69 = arith.constant 0 : index
      %68 = arith.index_cast %67 : i32 to index
      %c1_70 = arith.constant 1 : index
      %c0_71 = arith.constant 0 : index
      %69 = vector.load %arg1[%c0_68, %c0_69, %68, %c1_70, %c0_71] : memref<1x4x33x33x8xbf16, #tpu.memory_space<vmem>>, vector<1x1x1x32x8xbf16>
      %70 = vector.shape_cast %69 : vector<1x1x1x32x8xbf16> to vector<32x8xbf16>
      %c8 = arith.constant 8 : index
      %c0_72 = arith.constant 0 : index
      %c0_73 = arith.constant 0 : index
      %71 = vector.load %arg2[%c8, %c0_72, %c0_73] : memref<9x8x128xbf16, #tpu.memory_space<vmem>>, vector<1x8x128xbf16>
      %72 = vector.shape_cast %71 : vector<1x8x128xbf16> to vector<8x128xbf16>
      %cst_74 = arith.constant dense<0.000000e+00> : vector<32x128xf32>
      %73 = tpu.matmul %70, %72, %cst_74 {dimension_numbers = #tpu.dot_dimension_numbers<[1], [0], [0], [1], [0, 0, 1, 1], [], []>} : vector<32x8xbf16>, vector<8x128xbf16>, vector<32x128xf32> -> vector<32x128xf32>
      %74 = arith.addf %66, %73 : vector<32x128xf32>
      %75 = vector.broadcast %0 : vector<1x128xf32> to vector<32x128xf32>
      %76 = arith.addf %74, %75 : vector<32x128xf32>
      %cst_75 = arith.constant 0.000000e+00 : f32
      %77 = vector.broadcast %cst_75 : f32 to vector<32x128xf32>
      %78 = arith.subf %77, %76 : vector<32x128xf32>
      %79 = math.exp %78 : vector<32x128xf32>
      %cst_76 = arith.constant 1.000000e+00 : f32
      %80 = vector.broadcast %cst_76 : f32 to vector<32x128xf32>
      %81 = arith.addf %80, %79 : vector<32x128xf32>
      %82 = tpu.reciprocal %81 {approx = true} : vector<32x128xf32> -> vector<32x128xf32>
      %83 = arith.mulf %76, %82 : vector<32x128xf32>
      %84 = arith.truncf %83 : vector<32x128xf32> to vector<32x128xbf16>
      %c0_77 = arith.constant 0 : index
      %85 = arith.index_cast %arg5 : i32 to index
      %c0_78 = arith.constant 0 : index
      %c0_79 = arith.constant 0 : index
      %86 = vector.load %arg4[%c0_77, %85, %c0_78, %c0_79] : memref<1x32x32x128xbf16, #tpu.memory_space<vmem>>, vector<1x1x32x128xbf16>
      %87 = vector.shape_cast %86 : vector<1x1x32x128xbf16> to vector<32x128xbf16>
      %88 = vector.shape_cast %84 : vector<32x128xbf16> to vector<1x1x32x128xbf16>
      tpu.vector_store %arg4[%c0_77, %85, %c0_78, %c0_79], %88 {strides = array<i32>} : memref<1x32x32x128xbf16, #tpu.memory_space<vmem>>, vector<1x1x32x128xbf16>,
    }
    %c32_i32_1 = arith.constant 32 : i32
    return
  }
  func.func @transform_0(%arg0: i32) -> (i32, i32, i32, i32, i32) {
    %c0_i32 = arith.constant 0 : i32
    %c0_i32_0 = arith.constant 0 : i32
    %c0_i32_1 = arith.constant 0 : i32
    %c0_i32_2 = arith.constant 0 : i32
    %c0_i32_3 = arith.constant 0 : i32
    return %arg0, %c0_i32, %c0_i32_0, %c0_i32_1, %c0_i32_2 : i32, i32, i32, i32, i32
  }
  func.func @transform_1(%arg0: i32) -> (i32, i32, i32) {
    %c0_i32 = arith.constant 0 : i32
    %c0_i32_0 = arith.constant 0 : i32
    %c0_i32_1 = arith.constant 0 : i32
    %c0_i32_2 = arith.constant 0 : i32
    return %c0_i32, %c0_i32_0, %c0_i32_1 : i32, i32, i32
  }
  func.func @transform_2(%arg0: i32) -> (i32, i32) {
    %c0_i32 = arith.constant 0 : i32
    %c0_i32_0 = arith.constant 0 : i32
    %c0_i32_1 = arith.constant 0 : i32
    return %c0_i32, %c0_i32_0 : i32, i32
  }
  func.func @transform_3(%arg0: i32) -> (i32, i32, i32, i32) {
    %c0_i32 = arith.constant 0 : i32
    %c0_i32_0 = arith.constant 0 : i32
    %c0_i32_1 = arith.constant 0 : i32
    %c0_i32_2 = arith.constant 0 : i32
    return %arg0, %c0_i32, %c0_i32_0, %c0_i32_1 : i32, i32, i32, i32
  }
}

module attributes {stable_mosaic.version = 11 : i64} {
  func.func @kernel(%arg0: i32, %arg1: memref<1x4x17x17x128xbf16, #tpu.memory_space<vmem>>, %arg2: memref<9x128x128xbf16, #tpu.memory_space<vmem>>, %arg3: memref<1x128xf32, #tpu.memory_space<vmem>>, %arg4: memref<1x16x16x128xbf16, #tpu.memory_space<vmem>>) attributes {dimension_semantics = [#tpu.dimension_semantics<parallel>], iteration_bounds = array<i64: 2>, scalar_prefetch = 0 : i64, scratch_operands = 0 : i64, tpu.core_type = #tpu.core_type<tc>, window_params = [{transform_indices = @transform_0, window_bounds = array<i64: 1, 4, 17, 17, 128>}, {pipeline_mode = #tpu.pipeline_mode<synchronous>, transform_indices = @transform_1, window_bounds = array<i64: 9, 128, 128>}, {pipeline_mode = #tpu.pipeline_mode<synchronous>, transform_indices = @transform_2, window_bounds = array<i64: 1, 128>}, {transform_indices = @transform_3, window_bounds = array<i64: 1, 16, 16, 128>}]} {
    %c0 = arith.constant 0 : index
    %c0_0 = arith.constant 0 : index
    %0 = vector.load %arg3[%c0, %c0_0] : memref<1x128xf32, #tpu.memory_space<vmem>>, vector<1x128xf32>
    %c0_i32 = arith.constant 0 : i32
    %c16_i32 = arith.constant 16 : i32
    %1 = arith.addi %c0_i32, %c16_i32 : i32
    %c1_i32 = arith.constant 1 : i32
    scf.for %arg5 = %c0_i32 to %1 step %c1_i32  : i32 {
      %cst = arith.constant 0.000000e+00 : f32
      %2 = vector.broadcast %cst : f32 to vector<16x128xf32>
      %c0_i32_2 = arith.constant 0 : i32
      %3 = arith.addi %arg5, %c0_i32_2 : i32
      %c0_3 = arith.constant 0 : index
      %c0_4 = arith.constant 0 : index
      %4 = arith.index_cast %3 : i32 to index
      %c0_5 = arith.constant 0 : index
      %c0_6 = arith.constant 0 : index
      %5 = vector.load %arg1[%c0_3, %c0_4, %4, %c0_5, %c0_6] : memref<1x4x17x17x128xbf16, #tpu.memory_space<vmem>>, vector<1x1x1x16x128xbf16>
      %6 = vector.shape_cast %5 : vector<1x1x1x16x128xbf16> to vector<16x128xbf16>
      %c0_7 = arith.constant 0 : index
      %c0_8 = arith.constant 0 : index
      %c0_9 = arith.constant 0 : index
      %7 = vector.load %arg2[%c0_7, %c0_8, %c0_9] : memref<9x128x128xbf16, #tpu.memory_space<vmem>>, vector<1x128x128xbf16>
      %8 = vector.shape_cast %7 : vector<1x128x128xbf16> to vector<128x128xbf16>
      %cst_10 = arith.constant dense<0.000000e+00> : vector<16x128xf32>
      %9 = tpu.matmul %6, %8, %cst_10 {dimension_numbers = #tpu.dot_dimension_numbers<[1], [0], [0], [1], [0, 0, 1, 1], [], []>} : vector<16x128xbf16>, vector<128x128xbf16>, vector<16x128xf32> -> vector<16x128xf32>
      %10 = arith.addf %2, %9 : vector<16x128xf32>
      %c0_i32_11 = arith.constant 0 : i32
      %11 = arith.addi %arg5, %c0_i32_11 : i32
      %c0_12 = arith.constant 0 : index
      %c1 = arith.constant 1 : index
      %12 = arith.index_cast %11 : i32 to index
      %c0_13 = arith.constant 0 : index
      %c0_14 = arith.constant 0 : index
      %13 = vector.load %arg1[%c0_12, %c1, %12, %c0_13, %c0_14] : memref<1x4x17x17x128xbf16, #tpu.memory_space<vmem>>, vector<1x1x1x16x128xbf16>
      %14 = vector.shape_cast %13 : vector<1x1x1x16x128xbf16> to vector<16x128xbf16>
      %c1_15 = arith.constant 1 : index
      %c0_16 = arith.constant 0 : index
      %c0_17 = arith.constant 0 : index
      %15 = vector.load %arg2[%c1_15, %c0_16, %c0_17] : memref<9x128x128xbf16, #tpu.memory_space<vmem>>, vector<1x128x128xbf16>
      %16 = vector.shape_cast %15 : vector<1x128x128xbf16> to vector<128x128xbf16>
      %cst_18 = arith.constant dense<0.000000e+00> : vector<16x128xf32>
      %17 = tpu.matmul %14, %16, %cst_18 {dimension_numbers = #tpu.dot_dimension_numbers<[1], [0], [0], [1], [0, 0, 1, 1], [], []>} : vector<16x128xbf16>, vector<128x128xbf16>, vector<16x128xf32> -> vector<16x128xf32>
      %18 = arith.addf %10, %17 : vector<16x128xf32>
      %c0_i32_19 = arith.constant 0 : i32
      %19 = arith.addi %arg5, %c0_i32_19 : i32
      %c0_20 = arith.constant 0 : index
      %c0_21 = arith.constant 0 : index
      %20 = arith.index_cast %19 : i32 to index
      %c1_22 = arith.constant 1 : index
      %c0_23 = arith.constant 0 : index
      %21 = vector.load %arg1[%c0_20, %c0_21, %20, %c1_22, %c0_23] : memref<1x4x17x17x128xbf16, #tpu.memory_space<vmem>>, vector<1x1x1x16x128xbf16>
      %22 = vector.shape_cast %21 : vector<1x1x1x16x128xbf16> to vector<16x128xbf16>
      %c2 = arith.constant 2 : index
      %c0_24 = arith.constant 0 : index
      %c0_25 = arith.constant 0 : index
      %23 = vector.load %arg2[%c2, %c0_24, %c0_25] : memref<9x128x128xbf16, #tpu.memory_space<vmem>>, vector<1x128x128xbf16>
      %24 = vector.shape_cast %23 : vector<1x128x128xbf16> to vector<128x128xbf16>
      %cst_26 = arith.constant dense<0.000000e+00> : vector<16x128xf32>
      %25 = tpu.matmul %22, %24, %cst_26 {dimension_numbers = #tpu.dot_dimension_numbers<[1], [0], [0], [1], [0, 0, 1, 1], [], []>} : vector<16x128xbf16>, vector<128x128xbf16>, vector<16x128xf32> -> vector<16x128xf32>
      %26 = arith.addf %18, %25 : vector<16x128xf32>
      %c0_i32_27 = arith.constant 0 : i32
      %27 = arith.addi %arg5, %c0_i32_27 : i32
      %c0_28 = arith.constant 0 : index
      %c2_29 = arith.constant 2 : index
      %28 = arith.index_cast %27 : i32 to index
      %c0_30 = arith.constant 0 : index
      %c0_31 = arith.constant 0 : index
      %29 = vector.load %arg1[%c0_28, %c2_29, %28, %c0_30, %c0_31] : memref<1x4x17x17x128xbf16, #tpu.memory_space<vmem>>, vector<1x1x1x16x128xbf16>
      %30 = vector.shape_cast %29 : vector<1x1x1x16x128xbf16> to vector<16x128xbf16>
      %c3 = arith.constant 3 : index
      %c0_32 = arith.constant 0 : index
      %c0_33 = arith.constant 0 : index
      %31 = vector.load %arg2[%c3, %c0_32, %c0_33] : memref<9x128x128xbf16, #tpu.memory_space<vmem>>, vector<1x128x128xbf16>
      %32 = vector.shape_cast %31 : vector<1x128x128xbf16> to vector<128x128xbf16>
      %cst_34 = arith.constant dense<0.000000e+00> : vector<16x128xf32>
      %33 = tpu.matmul %30, %32, %cst_34 {dimension_numbers = #tpu.dot_dimension_numbers<[1], [0], [0], [1], [0, 0, 1, 1], [], []>} : vector<16x128xbf16>, vector<128x128xbf16>, vector<16x128xf32> -> vector<16x128xf32>
      %34 = arith.addf %26, %33 : vector<16x128xf32>
      %c0_i32_35 = arith.constant 0 : i32
      %35 = arith.addi %arg5, %c0_i32_35 : i32
      %c0_36 = arith.constant 0 : index
      %c3_37 = arith.constant 3 : index
      %36 = arith.index_cast %35 : i32 to index
      %c0_38 = arith.constant 0 : index
      %c0_39 = arith.constant 0 : index
      %37 = vector.load %arg1[%c0_36, %c3_37, %36, %c0_38, %c0_39] : memref<1x4x17x17x128xbf16, #tpu.memory_space<vmem>>, vector<1x1x1x16x128xbf16>
      %38 = vector.shape_cast %37 : vector<1x1x1x16x128xbf16> to vector<16x128xbf16>
      %c4 = arith.constant 4 : index
      %c0_40 = arith.constant 0 : index
      %c0_41 = arith.constant 0 : index
      %39 = vector.load %arg2[%c4, %c0_40, %c0_41] : memref<9x128x128xbf16, #tpu.memory_space<vmem>>, vector<1x128x128xbf16>
      %40 = vector.shape_cast %39 : vector<1x128x128xbf16> to vector<128x128xbf16>
      %cst_42 = arith.constant dense<0.000000e+00> : vector<16x128xf32>
      %41 = tpu.matmul %38, %40, %cst_42 {dimension_numbers = #tpu.dot_dimension_numbers<[1], [0], [0], [1], [0, 0, 1, 1], [], []>} : vector<16x128xbf16>, vector<128x128xbf16>, vector<16x128xf32> -> vector<16x128xf32>
      %42 = arith.addf %34, %41 : vector<16x128xf32>
      %c0_i32_43 = arith.constant 0 : i32
      %43 = arith.addi %arg5, %c0_i32_43 : i32
      %c0_44 = arith.constant 0 : index
      %c2_45 = arith.constant 2 : index
      %44 = arith.index_cast %43 : i32 to index
      %c1_46 = arith.constant 1 : index
      %c0_47 = arith.constant 0 : index
      %45 = vector.load %arg1[%c0_44, %c2_45, %44, %c1_46, %c0_47] : memref<1x4x17x17x128xbf16, #tpu.memory_space<vmem>>, vector<1x1x1x16x128xbf16>
      %46 = vector.shape_cast %45 : vector<1x1x1x16x128xbf16> to vector<16x128xbf16>
      %c5 = arith.constant 5 : index
      %c0_48 = arith.constant 0 : index
      %c0_49 = arith.constant 0 : index
      %47 = vector.load %arg2[%c5, %c0_48, %c0_49] : memref<9x128x128xbf16, #tpu.memory_space<vmem>>, vector<1x128x128xbf16>
      %48 = vector.shape_cast %47 : vector<1x128x128xbf16> to vector<128x128xbf16>
      %cst_50 = arith.constant dense<0.000000e+00> : vector<16x128xf32>
      %49 = tpu.matmul %46, %48, %cst_50 {dimension_numbers = #tpu.dot_dimension_numbers<[1], [0], [0], [1], [0, 0, 1, 1], [], []>} : vector<16x128xbf16>, vector<128x128xbf16>, vector<16x128xf32> -> vector<16x128xf32>
      %50 = arith.addf %42, %49 : vector<16x128xf32>
      %c1_i32_51 = arith.constant 1 : i32
      %51 = arith.addi %arg5, %c1_i32_51 : i32
      %c0_52 = arith.constant 0 : index
      %c0_53 = arith.constant 0 : index
      %52 = arith.index_cast %51 : i32 to index
      %c0_54 = arith.constant 0 : index
      %c0_55 = arith.constant 0 : index
      %53 = vector.load %arg1[%c0_52, %c0_53, %52, %c0_54, %c0_55] : memref<1x4x17x17x128xbf16, #tpu.memory_space<vmem>>, vector<1x1x1x16x128xbf16>
      %54 = vector.shape_cast %53 : vector<1x1x1x16x128xbf16> to vector<16x128xbf16>
      %c6 = arith.constant 6 : index
      %c0_56 = arith.constant 0 : index
      %c0_57 = arith.constant 0 : index
      %55 = vector.load %arg2[%c6, %c0_56, %c0_57] : memref<9x128x128xbf16, #tpu.memory_space<vmem>>, vector<1x128x128xbf16>
      %56 = vector.shape_cast %55 : vector<1x128x128xbf16> to vector<128x128xbf16>
      %cst_58 = arith.constant dense<0.000000e+00> : vector<16x128xf32>
      %57 = tpu.matmul %54, %56, %cst_58 {dimension_numbers = #tpu.dot_dimension_numbers<[1], [0], [0], [1], [0, 0, 1, 1], [], []>} : vector<16x128xbf16>, vector<128x128xbf16>, vector<16x128xf32> -> vector<16x128xf32>
      %58 = arith.addf %50, %57 : vector<16x128xf32>
      %c1_i32_59 = arith.constant 1 : i32
      %59 = arith.addi %arg5, %c1_i32_59 : i32
      %c0_60 = arith.constant 0 : index
      %c1_61 = arith.constant 1 : index
      %60 = arith.index_cast %59 : i32 to index
      %c0_62 = arith.constant 0 : index
      %c0_63 = arith.constant 0 : index
      %61 = vector.load %arg1[%c0_60, %c1_61, %60, %c0_62, %c0_63] : memref<1x4x17x17x128xbf16, #tpu.memory_space<vmem>>, vector<1x1x1x16x128xbf16>
      %62 = vector.shape_cast %61 : vector<1x1x1x16x128xbf16> to vector<16x128xbf16>
      %c7 = arith.constant 7 : index
      %c0_64 = arith.constant 0 : index
      %c0_65 = arith.constant 0 : index
      %63 = vector.load %arg2[%c7, %c0_64, %c0_65] : memref<9x128x128xbf16, #tpu.memory_space<vmem>>, vector<1x128x128xbf16>
      %64 = vector.shape_cast %63 : vector<1x128x128xbf16> to vector<128x128xbf16>
      %cst_66 = arith.constant dense<0.000000e+00> : vector<16x128xf32>
      %65 = tpu.matmul %62, %64, %cst_66 {dimension_numbers = #tpu.dot_dimension_numbers<[1], [0], [0], [1], [0, 0, 1, 1], [], []>} : vector<16x128xbf16>, vector<128x128xbf16>, vector<16x128xf32> -> vector<16x128xf32>
      %66 = arith.addf %58, %65 : vector<16x128xf32>
      %c1_i32_67 = arith.constant 1 : i32
      %67 = arith.addi %arg5, %c1_i32_67 : i32
      %c0_68 = arith.constant 0 : index
      %c0_69 = arith.constant 0 : index
      %68 = arith.index_cast %67 : i32 to index
      %c1_70 = arith.constant 1 : index
      %c0_71 = arith.constant 0 : index
      %69 = vector.load %arg1[%c0_68, %c0_69, %68, %c1_70, %c0_71] : memref<1x4x17x17x128xbf16, #tpu.memory_space<vmem>>, vector<1x1x1x16x128xbf16>
      %70 = vector.shape_cast %69 : vector<1x1x1x16x128xbf16> to vector<16x128xbf16>
      %c8 = arith.constant 8 : index
      %c0_72 = arith.constant 0 : index
      %c0_73 = arith.constant 0 : index
      %71 = vector.load %arg2[%c8, %c0_72, %c0_73] : memref<9x128x128xbf16, #tpu.memory_space<vmem>>, vector<1x128x128xbf16>
      %72 = vector.shape_cast %71 : vector<1x128x128xbf16> to vector<128x128xbf16>
      %cst_74 = arith.constant dense<0.000000e+00> : vector<16x128xf32>
      %73 = tpu.matmul %70, %72, %cst_74 {dimension_numbers = #tpu.dot_dimension_numbers<[1], [0], [0], [1], [0, 0, 1, 1], [], []>} : vector<16x128xbf16>, vector<128x128xbf16>, vector<16x128xf32> -> vector<16x128xf32>
      %74 = arith.addf %66, %73 : vector<16x128xf32>
      %75 = vector.broadcast %0 : vector<1x128xf32> to vector<16x128xf32>
      %76 = arith.addf %74, %75 : vector<16x128xf32>
      %cst_75 = arith.constant 0.000000e+00 : f32
      %77 = vector.broadcast %cst_75 : f32 to vector<16x128xf32>
      %78 = arith.subf %77, %76 : vector<16x128xf32>
      %79 = math.exp %78 : vector<16x128xf32>
      %cst_76 = arith.constant 1.000000e+00 : f32
      %80 = vector.broadcast %cst_76 : f32 to vector<16x128xf32>
      %81 = arith.addf %80, %79 : vector<16x128xf32>
      %82 = tpu.reciprocal %81 {approx = true} : vector<16x128xf32> -> vector<16x128xf32>
      %83 = arith.mulf %76, %82 : vector<16x128xf32>
      %84 = arith.truncf %83 : vector<16x128xf32> to vector<16x128xbf16>
      %c0_77 = arith.constant 0 : index
      %85 = arith.index_cast %arg5 : i32 to index
      %c0_78 = arith.constant 0 : index
      %c0_79 = arith.constant 0 : index
      %86 = vector.load %arg4[%c0_77, %85, %c0_78, %c0_79] : memref<1x16x16x128xbf16, #tpu.memory_space<vmem>>, vector<1x1x16x128xbf16>
      %87 = vector.shape_cast %86 : vector<1x1x16x128xbf16> to vector<16x128xbf16>
      %88 = vector.shape_cast %84 : vector<16x128xbf16> to vector<1x1x16x128xbf16>
      tpu.vector_store %arg4[%c0_77, %85, %c0_78, %c0_79], %88 {strides = array<i32>} : memref<1x16x16x128xbf16, #tpu.memory_space<vmem>>, vector<1x1x16x128xbf16>,
    }
    %c16_i32_1 = arith.constant 16 : i32
    return
  }
  func.func @transform_0(%arg0: i32) -> (i32, i32, i32, i32, i32) {
    %c0_i32 = arith.constant 0 : i32
    %c0_i32_0 = arith.constant 0 : i32
    %c0_i32_1 = arith.constant 0 : i32
    %c0_i32_2 = arith.constant 0 : i32
    %c0_i32_3 = arith.constant 0 : i32
    return %arg0, %c0_i32, %c0_i32_0, %c0_i32_1, %c0_i32_2 : i32, i32, i32, i32, i32
  }
  func.func @transform_1(%arg0: i32) -> (i32, i32, i32) {
    %c0_i32 = arith.constant 0 : i32
    %c0_i32_0 = arith.constant 0 : i32
    %c0_i32_1 = arith.constant 0 : i32
    %c0_i32_2 = arith.constant 0 : i32
    return %c0_i32, %c0_i32_0, %c0_i32_1 : i32, i32, i32
  }
  func.func @transform_2(%arg0: i32) -> (i32, i32) {
    %c0_i32 = arith.constant 0 : i32
    %c0_i32_0 = arith.constant 0 : i32
    %c0_i32_1 = arith.constant 0 : i32
    return %c0_i32, %c0_i32_0 : i32, i32
  }
  func.func @transform_3(%arg0: i32) -> (i32, i32, i32, i32) {
    %c0_i32 = arith.constant 0 : i32
    %c0_i32_0 = arith.constant 0 : i32
    %c0_i32_1 = arith.constant 0 : i32
    %c0_i32_2 = arith.constant 0 : i32
    return %arg0, %c0_i32, %c0_i32_0, %c0_i32_1 : i32, i32, i32, i32
  }
}

module attributes {stable_mosaic.version = 11 : i64} {
  func.func @kernel(%arg0: i32, %arg1: memref<1x4x9x9x128xbf16, #tpu.memory_space<vmem>>, %arg2: memref<9x128x128xbf16, #tpu.memory_space<vmem>>, %arg3: memref<1x128xf32, #tpu.memory_space<vmem>>, %arg4: memref<1x8x8x128xbf16, #tpu.memory_space<vmem>>) attributes {dimension_semantics = [#tpu.dimension_semantics<parallel>], iteration_bounds = array<i64: 2>, scalar_prefetch = 0 : i64, scratch_operands = 0 : i64, tpu.core_type = #tpu.core_type<tc>, window_params = [{transform_indices = @transform_0, window_bounds = array<i64: 1, 4, 9, 9, 128>}, {pipeline_mode = #tpu.pipeline_mode<synchronous>, transform_indices = @transform_1, window_bounds = array<i64: 9, 128, 128>}, {pipeline_mode = #tpu.pipeline_mode<synchronous>, transform_indices = @transform_2, window_bounds = array<i64: 1, 128>}, {transform_indices = @transform_3, window_bounds = array<i64: 1, 8, 8, 128>}]} {
    %c0 = arith.constant 0 : index
    %c0_0 = arith.constant 0 : index
    %0 = vector.load %arg3[%c0, %c0_0] : memref<1x128xf32, #tpu.memory_space<vmem>>, vector<1x128xf32>
    %c0_i32 = arith.constant 0 : i32
    %c8_i32 = arith.constant 8 : i32
    %1 = arith.addi %c0_i32, %c8_i32 : i32
    %c1_i32 = arith.constant 1 : i32
    scf.for %arg5 = %c0_i32 to %1 step %c1_i32  : i32 {
      %cst = arith.constant 0.000000e+00 : f32
      %2 = vector.broadcast %cst : f32 to vector<8x128xf32>
      %c0_i32_2 = arith.constant 0 : i32
      %3 = arith.addi %arg5, %c0_i32_2 : i32
      %c0_3 = arith.constant 0 : index
      %c0_4 = arith.constant 0 : index
      %4 = arith.index_cast %3 : i32 to index
      %c0_5 = arith.constant 0 : index
      %c0_6 = arith.constant 0 : index
      %5 = vector.load %arg1[%c0_3, %c0_4, %4, %c0_5, %c0_6] : memref<1x4x9x9x128xbf16, #tpu.memory_space<vmem>>, vector<1x1x1x8x128xbf16>
      %6 = vector.shape_cast %5 : vector<1x1x1x8x128xbf16> to vector<8x128xbf16>
      %c0_7 = arith.constant 0 : index
      %c0_8 = arith.constant 0 : index
      %c0_9 = arith.constant 0 : index
      %7 = vector.load %arg2[%c0_7, %c0_8, %c0_9] : memref<9x128x128xbf16, #tpu.memory_space<vmem>>, vector<1x128x128xbf16>
      %8 = vector.shape_cast %7 : vector<1x128x128xbf16> to vector<128x128xbf16>
      %cst_10 = arith.constant dense<0.000000e+00> : vector<8x128xf32>
      %9 = tpu.matmul %6, %8, %cst_10 {dimension_numbers = #tpu.dot_dimension_numbers<[1], [0], [0], [1], [0, 0, 1, 1], [], []>} : vector<8x128xbf16>, vector<128x128xbf16>, vector<8x128xf32> -> vector<8x128xf32>
      %10 = arith.addf %2, %9 : vector<8x128xf32>
      %c0_i32_11 = arith.constant 0 : i32
      %11 = arith.addi %arg5, %c0_i32_11 : i32
      %c0_12 = arith.constant 0 : index
      %c1 = arith.constant 1 : index
      %12 = arith.index_cast %11 : i32 to index
      %c0_13 = arith.constant 0 : index
      %c0_14 = arith.constant 0 : index
      %13 = vector.load %arg1[%c0_12, %c1, %12, %c0_13, %c0_14] : memref<1x4x9x9x128xbf16, #tpu.memory_space<vmem>>, vector<1x1x1x8x128xbf16>
      %14 = vector.shape_cast %13 : vector<1x1x1x8x128xbf16> to vector<8x128xbf16>
      %c1_15 = arith.constant 1 : index
      %c0_16 = arith.constant 0 : index
      %c0_17 = arith.constant 0 : index
      %15 = vector.load %arg2[%c1_15, %c0_16, %c0_17] : memref<9x128x128xbf16, #tpu.memory_space<vmem>>, vector<1x128x128xbf16>
      %16 = vector.shape_cast %15 : vector<1x128x128xbf16> to vector<128x128xbf16>
      %cst_18 = arith.constant dense<0.000000e+00> : vector<8x128xf32>
      %17 = tpu.matmul %14, %16, %cst_18 {dimension_numbers = #tpu.dot_dimension_numbers<[1], [0], [0], [1], [0, 0, 1, 1], [], []>} : vector<8x128xbf16>, vector<128x128xbf16>, vector<8x128xf32> -> vector<8x128xf32>
      %18 = arith.addf %10, %17 : vector<8x128xf32>
      %c0_i32_19 = arith.constant 0 : i32
      %19 = arith.addi %arg5, %c0_i32_19 : i32
      %c0_20 = arith.constant 0 : index
      %c0_21 = arith.constant 0 : index
      %20 = arith.index_cast %19 : i32 to index
      %c1_22 = arith.constant 1 : index
      %c0_23 = arith.constant 0 : index
      %21 = vector.load %arg1[%c0_20, %c0_21, %20, %c1_22, %c0_23] : memref<1x4x9x9x128xbf16, #tpu.memory_space<vmem>>, vector<1x1x1x8x128xbf16>
      %22 = vector.shape_cast %21 : vector<1x1x1x8x128xbf16> to vector<8x128xbf16>
      %c2 = arith.constant 2 : index
      %c0_24 = arith.constant 0 : index
      %c0_25 = arith.constant 0 : index
      %23 = vector.load %arg2[%c2, %c0_24, %c0_25] : memref<9x128x128xbf16, #tpu.memory_space<vmem>>, vector<1x128x128xbf16>
      %24 = vector.shape_cast %23 : vector<1x128x128xbf16> to vector<128x128xbf16>
      %cst_26 = arith.constant dense<0.000000e+00> : vector<8x128xf32>
      %25 = tpu.matmul %22, %24, %cst_26 {dimension_numbers = #tpu.dot_dimension_numbers<[1], [0], [0], [1], [0, 0, 1, 1], [], []>} : vector<8x128xbf16>, vector<128x128xbf16>, vector<8x128xf32> -> vector<8x128xf32>
      %26 = arith.addf %18, %25 : vector<8x128xf32>
      %c0_i32_27 = arith.constant 0 : i32
      %27 = arith.addi %arg5, %c0_i32_27 : i32
      %c0_28 = arith.constant 0 : index
      %c2_29 = arith.constant 2 : index
      %28 = arith.index_cast %27 : i32 to index
      %c0_30 = arith.constant 0 : index
      %c0_31 = arith.constant 0 : index
      %29 = vector.load %arg1[%c0_28, %c2_29, %28, %c0_30, %c0_31] : memref<1x4x9x9x128xbf16, #tpu.memory_space<vmem>>, vector<1x1x1x8x128xbf16>
      %30 = vector.shape_cast %29 : vector<1x1x1x8x128xbf16> to vector<8x128xbf16>
      %c3 = arith.constant 3 : index
      %c0_32 = arith.constant 0 : index
      %c0_33 = arith.constant 0 : index
      %31 = vector.load %arg2[%c3, %c0_32, %c0_33] : memref<9x128x128xbf16, #tpu.memory_space<vmem>>, vector<1x128x128xbf16>
      %32 = vector.shape_cast %31 : vector<1x128x128xbf16> to vector<128x128xbf16>
      %cst_34 = arith.constant dense<0.000000e+00> : vector<8x128xf32>
      %33 = tpu.matmul %30, %32, %cst_34 {dimension_numbers = #tpu.dot_dimension_numbers<[1], [0], [0], [1], [0, 0, 1, 1], [], []>} : vector<8x128xbf16>, vector<128x128xbf16>, vector<8x128xf32> -> vector<8x128xf32>
      %34 = arith.addf %26, %33 : vector<8x128xf32>
      %c0_i32_35 = arith.constant 0 : i32
      %35 = arith.addi %arg5, %c0_i32_35 : i32
      %c0_36 = arith.constant 0 : index
      %c3_37 = arith.constant 3 : index
      %36 = arith.index_cast %35 : i32 to index
      %c0_38 = arith.constant 0 : index
      %c0_39 = arith.constant 0 : index
      %37 = vector.load %arg1[%c0_36, %c3_37, %36, %c0_38, %c0_39] : memref<1x4x9x9x128xbf16, #tpu.memory_space<vmem>>, vector<1x1x1x8x128xbf16>
      %38 = vector.shape_cast %37 : vector<1x1x1x8x128xbf16> to vector<8x128xbf16>
      %c4 = arith.constant 4 : index
      %c0_40 = arith.constant 0 : index
      %c0_41 = arith.constant 0 : index
      %39 = vector.load %arg2[%c4, %c0_40, %c0_41] : memref<9x128x128xbf16, #tpu.memory_space<vmem>>, vector<1x128x128xbf16>
      %40 = vector.shape_cast %39 : vector<1x128x128xbf16> to vector<128x128xbf16>
      %cst_42 = arith.constant dense<0.000000e+00> : vector<8x128xf32>
      %41 = tpu.matmul %38, %40, %cst_42 {dimension_numbers = #tpu.dot_dimension_numbers<[1], [0], [0], [1], [0, 0, 1, 1], [], []>} : vector<8x128xbf16>, vector<128x128xbf16>, vector<8x128xf32> -> vector<8x128xf32>
      %42 = arith.addf %34, %41 : vector<8x128xf32>
      %c0_i32_43 = arith.constant 0 : i32
      %43 = arith.addi %arg5, %c0_i32_43 : i32
      %c0_44 = arith.constant 0 : index
      %c2_45 = arith.constant 2 : index
      %44 = arith.index_cast %43 : i32 to index
      %c1_46 = arith.constant 1 : index
      %c0_47 = arith.constant 0 : index
      %45 = vector.load %arg1[%c0_44, %c2_45, %44, %c1_46, %c0_47] : memref<1x4x9x9x128xbf16, #tpu.memory_space<vmem>>, vector<1x1x1x8x128xbf16>
      %46 = vector.shape_cast %45 : vector<1x1x1x8x128xbf16> to vector<8x128xbf16>
      %c5 = arith.constant 5 : index
      %c0_48 = arith.constant 0 : index
      %c0_49 = arith.constant 0 : index
      %47 = vector.load %arg2[%c5, %c0_48, %c0_49] : memref<9x128x128xbf16, #tpu.memory_space<vmem>>, vector<1x128x128xbf16>
      %48 = vector.shape_cast %47 : vector<1x128x128xbf16> to vector<128x128xbf16>
      %cst_50 = arith.constant dense<0.000000e+00> : vector<8x128xf32>
      %49 = tpu.matmul %46, %48, %cst_50 {dimension_numbers = #tpu.dot_dimension_numbers<[1], [0], [0], [1], [0, 0, 1, 1], [], []>} : vector<8x128xbf16>, vector<128x128xbf16>, vector<8x128xf32> -> vector<8x128xf32>
      %50 = arith.addf %42, %49 : vector<8x128xf32>
      %c1_i32_51 = arith.constant 1 : i32
      %51 = arith.addi %arg5, %c1_i32_51 : i32
      %c0_52 = arith.constant 0 : index
      %c0_53 = arith.constant 0 : index
      %52 = arith.index_cast %51 : i32 to index
      %c0_54 = arith.constant 0 : index
      %c0_55 = arith.constant 0 : index
      %53 = vector.load %arg1[%c0_52, %c0_53, %52, %c0_54, %c0_55] : memref<1x4x9x9x128xbf16, #tpu.memory_space<vmem>>, vector<1x1x1x8x128xbf16>
      %54 = vector.shape_cast %53 : vector<1x1x1x8x128xbf16> to vector<8x128xbf16>
      %c6 = arith.constant 6 : index
      %c0_56 = arith.constant 0 : index
      %c0_57 = arith.constant 0 : index
      %55 = vector.load %arg2[%c6, %c0_56, %c0_57] : memref<9x128x128xbf16, #tpu.memory_space<vmem>>, vector<1x128x128xbf16>
      %56 = vector.shape_cast %55 : vector<1x128x128xbf16> to vector<128x128xbf16>
      %cst_58 = arith.constant dense<0.000000e+00> : vector<8x128xf32>
      %57 = tpu.matmul %54, %56, %cst_58 {dimension_numbers = #tpu.dot_dimension_numbers<[1], [0], [0], [1], [0, 0, 1, 1], [], []>} : vector<8x128xbf16>, vector<128x128xbf16>, vector<8x128xf32> -> vector<8x128xf32>
      %58 = arith.addf %50, %57 : vector<8x128xf32>
      %c1_i32_59 = arith.constant 1 : i32
      %59 = arith.addi %arg5, %c1_i32_59 : i32
      %c0_60 = arith.constant 0 : index
      %c1_61 = arith.constant 1 : index
      %60 = arith.index_cast %59 : i32 to index
      %c0_62 = arith.constant 0 : index
      %c0_63 = arith.constant 0 : index
      %61 = vector.load %arg1[%c0_60, %c1_61, %60, %c0_62, %c0_63] : memref<1x4x9x9x128xbf16, #tpu.memory_space<vmem>>, vector<1x1x1x8x128xbf16>
      %62 = vector.shape_cast %61 : vector<1x1x1x8x128xbf16> to vector<8x128xbf16>
      %c7 = arith.constant 7 : index
      %c0_64 = arith.constant 0 : index
      %c0_65 = arith.constant 0 : index
      %63 = vector.load %arg2[%c7, %c0_64, %c0_65] : memref<9x128x128xbf16, #tpu.memory_space<vmem>>, vector<1x128x128xbf16>
      %64 = vector.shape_cast %63 : vector<1x128x128xbf16> to vector<128x128xbf16>
      %cst_66 = arith.constant dense<0.000000e+00> : vector<8x128xf32>
      %65 = tpu.matmul %62, %64, %cst_66 {dimension_numbers = #tpu.dot_dimension_numbers<[1], [0], [0], [1], [0, 0, 1, 1], [], []>} : vector<8x128xbf16>, vector<128x128xbf16>, vector<8x128xf32> -> vector<8x128xf32>
      %66 = arith.addf %58, %65 : vector<8x128xf32>
      %c1_i32_67 = arith.constant 1 : i32
      %67 = arith.addi %arg5, %c1_i32_67 : i32
      %c0_68 = arith.constant 0 : index
      %c0_69 = arith.constant 0 : index
      %68 = arith.index_cast %67 : i32 to index
      %c1_70 = arith.constant 1 : index
      %c0_71 = arith.constant 0 : index
      %69 = vector.load %arg1[%c0_68, %c0_69, %68, %c1_70, %c0_71] : memref<1x4x9x9x128xbf16, #tpu.memory_space<vmem>>, vector<1x1x1x8x128xbf16>
      %70 = vector.shape_cast %69 : vector<1x1x1x8x128xbf16> to vector<8x128xbf16>
      %c8 = arith.constant 8 : index
      %c0_72 = arith.constant 0 : index
      %c0_73 = arith.constant 0 : index
      %71 = vector.load %arg2[%c8, %c0_72, %c0_73] : memref<9x128x128xbf16, #tpu.memory_space<vmem>>, vector<1x128x128xbf16>
      %72 = vector.shape_cast %71 : vector<1x128x128xbf16> to vector<128x128xbf16>
      %cst_74 = arith.constant dense<0.000000e+00> : vector<8x128xf32>
      %73 = tpu.matmul %70, %72, %cst_74 {dimension_numbers = #tpu.dot_dimension_numbers<[1], [0], [0], [1], [0, 0, 1, 1], [], []>} : vector<8x128xbf16>, vector<128x128xbf16>, vector<8x128xf32> -> vector<8x128xf32>
      %74 = arith.addf %66, %73 : vector<8x128xf32>
      %75 = vector.broadcast %0 : vector<1x128xf32> to vector<8x128xf32>
      %76 = arith.addf %74, %75 : vector<8x128xf32>
      %cst_75 = arith.constant 0.000000e+00 : f32
      %77 = vector.broadcast %cst_75 : f32 to vector<8x128xf32>
      %78 = arith.subf %77, %76 : vector<8x128xf32>
      %79 = math.exp %78 : vector<8x128xf32>
      %cst_76 = arith.constant 1.000000e+00 : f32
      %80 = vector.broadcast %cst_76 : f32 to vector<8x128xf32>
      %81 = arith.addf %80, %79 : vector<8x128xf32>
      %82 = tpu.reciprocal %81 {approx = true} : vector<8x128xf32> -> vector<8x128xf32>
      %83 = arith.mulf %76, %82 : vector<8x128xf32>
      %84 = arith.truncf %83 : vector<8x128xf32> to vector<8x128xbf16>
      %c0_77 = arith.constant 0 : index
      %85 = arith.index_cast %arg5 : i32 to index
      %c0_78 = arith.constant 0 : index
      %c0_79 = arith.constant 0 : index
      %86 = vector.load %arg4[%c0_77, %85, %c0_78, %c0_79] : memref<1x8x8x128xbf16, #tpu.memory_space<vmem>>, vector<1x1x8x128xbf16>
      %87 = vector.shape_cast %86 : vector<1x1x8x128xbf16> to vector<8x128xbf16>
      %88 = vector.shape_cast %84 : vector<8x128xbf16> to vector<1x1x8x128xbf16>
      tpu.vector_store %arg4[%c0_77, %85, %c0_78, %c0_79], %88 {strides = array<i32>} : memref<1x8x8x128xbf16, #tpu.memory_space<vmem>>, vector<1x1x8x128xbf16>,
    }
    %c8_i32_1 = arith.constant 8 : i32
    return
  }
  func.func @transform_0(%arg0: i32) -> (i32, i32, i32, i32, i32) {
    %c0_i32 = arith.constant 0 : i32
    %c0_i32_0 = arith.constant 0 : i32
    %c0_i32_1 = arith.constant 0 : i32
    %c0_i32_2 = arith.constant 0 : i32
    %c0_i32_3 = arith.constant 0 : i32
    return %arg0, %c0_i32, %c0_i32_0, %c0_i32_1, %c0_i32_2 : i32, i32, i32, i32, i32
  }
  func.func @transform_1(%arg0: i32) -> (i32, i32, i32) {
    %c0_i32 = arith.constant 0 : i32
    %c0_i32_0 = arith.constant 0 : i32
    %c0_i32_1 = arith.constant 0 : i32
    %c0_i32_2 = arith.constant 0 : i32
    return %c0_i32, %c0_i32_0, %c0_i32_1 : i32, i32, i32
  }
  func.func @transform_2(%arg0: i32) -> (i32, i32) {
    %c0_i32 = arith.constant 0 : i32
    %c0_i32_0 = arith.constant 0 : i32
    %c0_i32_1 = arith.constant 0 : i32
    return %c0_i32, %c0_i32_0 : i32, i32
  }
  func.func @transform_3(%arg0: i32) -> (i32, i32, i32, i32) {
    %c0_i32 = arith.constant 0 : i32
    %c0_i32_0 = arith.constant 0 : i32
    %c0_i32_1 = arith.constant 0 : i32
    %c0_i32_2 = arith.constant 0 : i32
    return %arg0, %c0_i32, %c0_i32_0, %c0_i32_1 : i32, i32, i32, i32
  }
}

module attributes {stable_mosaic.version = 11 : i64} {
  func.func @kernel(%arg0: i32, %arg1: memref<1x4x5x5x128xbf16, #tpu.memory_space<vmem>>, %arg2: memref<9x128x128xbf16, #tpu.memory_space<vmem>>, %arg3: memref<1x128xf32, #tpu.memory_space<vmem>>, %arg4: memref<128x128xbf16, #tpu.memory_space<vmem>>, %arg5: memref<1x128xf32, #tpu.memory_space<vmem>>, %arg6: memref<1x4x4x128xbf16, #tpu.memory_space<vmem>>) attributes {dimension_semantics = [#tpu.dimension_semantics<parallel>], iteration_bounds = array<i64: 2>, scalar_prefetch = 0 : i64, scratch_operands = 0 : i64, tpu.core_type = #tpu.core_type<tc>, window_params = [{transform_indices = @transform_0, window_bounds = array<i64: 1, 4, 5, 5, 128>}, {pipeline_mode = #tpu.pipeline_mode<synchronous>, transform_indices = @transform_1, window_bounds = array<i64: 9, 128, 128>}, {pipeline_mode = #tpu.pipeline_mode<synchronous>, transform_indices = @transform_2, window_bounds = array<i64: 1, 128>}, {pipeline_mode = #tpu.pipeline_mode<synchronous>, transform_indices = @transform_3, window_bounds = array<i64: 128, 128>}, {pipeline_mode = #tpu.pipeline_mode<synchronous>, transform_indices = @transform_4, window_bounds = array<i64: 1, 128>}, {transform_indices = @transform_5, window_bounds = array<i64: 1, 4, 4, 128>}]} {
    %c0 = arith.constant 0 : index
    %c0_0 = arith.constant 0 : index
    %0 = vector.load %arg3[%c0, %c0_0] : memref<1x128xf32, #tpu.memory_space<vmem>>, vector<1x128xf32>
    %c0_1 = arith.constant 0 : index
    %c0_2 = arith.constant 0 : index
    %1 = vector.load %arg5[%c0_1, %c0_2] : memref<1x128xf32, #tpu.memory_space<vmem>>, vector<1x128xf32>
    %c0_i32 = arith.constant 0 : i32
    %c4_i32 = arith.constant 4 : i32
    %2 = arith.addi %c0_i32, %c4_i32 : i32
    %c1_i32 = arith.constant 1 : i32
    scf.for %arg7 = %c0_i32 to %2 step %c1_i32  : i32 {
      %cst = arith.constant 0.000000e+00 : f32
      %3 = vector.broadcast %cst : f32 to vector<4x128xf32>
      %c0_i32_4 = arith.constant 0 : i32
      %4 = arith.addi %arg7, %c0_i32_4 : i32
      %c0_5 = arith.constant 0 : index
      %c0_6 = arith.constant 0 : index
      %5 = arith.index_cast %4 : i32 to index
      %c0_7 = arith.constant 0 : index
      %c0_8 = arith.constant 0 : index
      %6 = vector.load %arg1[%c0_5, %c0_6, %5, %c0_7, %c0_8] : memref<1x4x5x5x128xbf16, #tpu.memory_space<vmem>>, vector<1x1x1x4x128xbf16>
      %7 = vector.shape_cast %6 : vector<1x1x1x4x128xbf16> to vector<4x128xbf16>
      %c0_9 = arith.constant 0 : index
      %c0_10 = arith.constant 0 : index
      %c0_11 = arith.constant 0 : index
      %8 = vector.load %arg2[%c0_9, %c0_10, %c0_11] : memref<9x128x128xbf16, #tpu.memory_space<vmem>>, vector<1x128x128xbf16>
      %9 = vector.shape_cast %8 : vector<1x128x128xbf16> to vector<128x128xbf16>
      %cst_12 = arith.constant dense<0.000000e+00> : vector<4x128xf32>
      %10 = tpu.matmul %7, %9, %cst_12 {dimension_numbers = #tpu.dot_dimension_numbers<[1], [0], [0], [1], [0, 0, 1, 1], [], []>} : vector<4x128xbf16>, vector<128x128xbf16>, vector<4x128xf32> -> vector<4x128xf32>
      %11 = arith.addf %3, %10 : vector<4x128xf32>
      %c0_i32_13 = arith.constant 0 : i32
      %12 = arith.addi %arg7, %c0_i32_13 : i32
      %c0_14 = arith.constant 0 : index
      %c1 = arith.constant 1 : index
      %13 = arith.index_cast %12 : i32 to index
      %c0_15 = arith.constant 0 : index
      %c0_16 = arith.constant 0 : index
      %14 = vector.load %arg1[%c0_14, %c1, %13, %c0_15, %c0_16] : memref<1x4x5x5x128xbf16, #tpu.memory_space<vmem>>, vector<1x1x1x4x128xbf16>
      %15 = vector.shape_cast %14 : vector<1x1x1x4x128xbf16> to vector<4x128xbf16>
      %c1_17 = arith.constant 1 : index
      %c0_18 = arith.constant 0 : index
      %c0_19 = arith.constant 0 : index
      %16 = vector.load %arg2[%c1_17, %c0_18, %c0_19] : memref<9x128x128xbf16, #tpu.memory_space<vmem>>, vector<1x128x128xbf16>
      %17 = vector.shape_cast %16 : vector<1x128x128xbf16> to vector<128x128xbf16>
      %cst_20 = arith.constant dense<0.000000e+00> : vector<4x128xf32>
      %18 = tpu.matmul %15, %17, %cst_20 {dimension_numbers = #tpu.dot_dimension_numbers<[1], [0], [0], [1], [0, 0, 1, 1], [], []>} : vector<4x128xbf16>, vector<128x128xbf16>, vector<4x128xf32> -> vector<4x128xf32>
      %19 = arith.addf %11, %18 : vector<4x128xf32>
      %c0_i32_21 = arith.constant 0 : i32
      %20 = arith.addi %arg7, %c0_i32_21 : i32
      %c0_22 = arith.constant 0 : index
      %c0_23 = arith.constant 0 : index
      %21 = arith.index_cast %20 : i32 to index
      %c1_24 = arith.constant 1 : index
      %c0_25 = arith.constant 0 : index
      %22 = vector.load %arg1[%c0_22, %c0_23, %21, %c1_24, %c0_25] : memref<1x4x5x5x128xbf16, #tpu.memory_space<vmem>>, vector<1x1x1x4x128xbf16>
      %23 = vector.shape_cast %22 : vector<1x1x1x4x128xbf16> to vector<4x128xbf16>
      %c2 = arith.constant 2 : index
      %c0_26 = arith.constant 0 : index
      %c0_27 = arith.constant 0 : index
      %24 = vector.load %arg2[%c2, %c0_26, %c0_27] : memref<9x128x128xbf16, #tpu.memory_space<vmem>>, vector<1x128x128xbf16>
      %25 = vector.shape_cast %24 : vector<1x128x128xbf16> to vector<128x128xbf16>
      %cst_28 = arith.constant dense<0.000000e+00> : vector<4x128xf32>
      %26 = tpu.matmul %23, %25, %cst_28 {dimension_numbers = #tpu.dot_dimension_numbers<[1], [0], [0], [1], [0, 0, 1, 1], [], []>} : vector<4x128xbf16>, vector<128x128xbf16>, vector<4x128xf32> -> vector<4x128xf32>
      %27 = arith.addf %19, %26 : vector<4x128xf32>
      %c0_i32_29 = arith.constant 0 : i32
      %28 = arith.addi %arg7, %c0_i32_29 : i32
      %c0_30 = arith.constant 0 : index
      %c2_31 = arith.constant 2 : index
      %29 = arith.index_cast %28 : i32 to index
      %c0_32 = arith.constant 0 : index
      %c0_33 = arith.constant 0 : index
      %30 = vector.load %arg1[%c0_30, %c2_31, %29, %c0_32, %c0_33] : memref<1x4x5x5x128xbf16, #tpu.memory_space<vmem>>, vector<1x1x1x4x128xbf16>
      %31 = vector.shape_cast %30 : vector<1x1x1x4x128xbf16> to vector<4x128xbf16>
      %c3 = arith.constant 3 : index
      %c0_34 = arith.constant 0 : index
      %c0_35 = arith.constant 0 : index
      %32 = vector.load %arg2[%c3, %c0_34, %c0_35] : memref<9x128x128xbf16, #tpu.memory_space<vmem>>, vector<1x128x128xbf16>
      %33 = vector.shape_cast %32 : vector<1x128x128xbf16> to vector<128x128xbf16>
      %cst_36 = arith.constant dense<0.000000e+00> : vector<4x128xf32>
      %34 = tpu.matmul %31, %33, %cst_36 {dimension_numbers = #tpu.dot_dimension_numbers<[1], [0], [0], [1], [0, 0, 1, 1], [], []>} : vector<4x128xbf16>, vector<128x128xbf16>, vector<4x128xf32> -> vector<4x128xf32>
      %35 = arith.addf %27, %34 : vector<4x128xf32>
      %c0_i32_37 = arith.constant 0 : i32
      %36 = arith.addi %arg7, %c0_i32_37 : i32
      %c0_38 = arith.constant 0 : index
      %c3_39 = arith.constant 3 : index
      %37 = arith.index_cast %36 : i32 to index
      %c0_40 = arith.constant 0 : index
      %c0_41 = arith.constant 0 : index
      %38 = vector.load %arg1[%c0_38, %c3_39, %37, %c0_40, %c0_41] : memref<1x4x5x5x128xbf16, #tpu.memory_space<vmem>>, vector<1x1x1x4x128xbf16>
      %39 = vector.shape_cast %38 : vector<1x1x1x4x128xbf16> to vector<4x128xbf16>
      %c4 = arith.constant 4 : index
      %c0_42 = arith.constant 0 : index
      %c0_43 = arith.constant 0 : index
      %40 = vector.load %arg2[%c4, %c0_42, %c0_43] : memref<9x128x128xbf16, #tpu.memory_space<vmem>>, vector<1x128x128xbf16>
      %41 = vector.shape_cast %40 : vector<1x128x128xbf16> to vector<128x128xbf16>
      %cst_44 = arith.constant dense<0.000000e+00> : vector<4x128xf32>
      %42 = tpu.matmul %39, %41, %cst_44 {dimension_numbers = #tpu.dot_dimension_numbers<[1], [0], [0], [1], [0, 0, 1, 1], [], []>} : vector<4x128xbf16>, vector<128x128xbf16>, vector<4x128xf32> -> vector<4x128xf32>
      %43 = arith.addf %35, %42 : vector<4x128xf32>
      %c0_i32_45 = arith.constant 0 : i32
      %44 = arith.addi %arg7, %c0_i32_45 : i32
      %c0_46 = arith.constant 0 : index
      %c2_47 = arith.constant 2 : index
      %45 = arith.index_cast %44 : i32 to index
      %c1_48 = arith.constant 1 : index
      %c0_49 = arith.constant 0 : index
      %46 = vector.load %arg1[%c0_46, %c2_47, %45, %c1_48, %c0_49] : memref<1x4x5x5x128xbf16, #tpu.memory_space<vmem>>, vector<1x1x1x4x128xbf16>
      %47 = vector.shape_cast %46 : vector<1x1x1x4x128xbf16> to vector<4x128xbf16>
      %c5 = arith.constant 5 : index
      %c0_50 = arith.constant 0 : index
      %c0_51 = arith.constant 0 : index
      %48 = vector.load %arg2[%c5, %c0_50, %c0_51] : memref<9x128x128xbf16, #tpu.memory_space<vmem>>, vector<1x128x128xbf16>
      %49 = vector.shape_cast %48 : vector<1x128x128xbf16> to vector<128x128xbf16>
      %cst_52 = arith.constant dense<0.000000e+00> : vector<4x128xf32>
      %50 = tpu.matmul %47, %49, %cst_52 {dimension_numbers = #tpu.dot_dimension_numbers<[1], [0], [0], [1], [0, 0, 1, 1], [], []>} : vector<4x128xbf16>, vector<128x128xbf16>, vector<4x128xf32> -> vector<4x128xf32>
      %51 = arith.addf %43, %50 : vector<4x128xf32>
      %c1_i32_53 = arith.constant 1 : i32
      %52 = arith.addi %arg7, %c1_i32_53 : i32
      %c0_54 = arith.constant 0 : index
      %c0_55 = arith.constant 0 : index
      %53 = arith.index_cast %52 : i32 to index
      %c0_56 = arith.constant 0 : index
      %c0_57 = arith.constant 0 : index
      %54 = vector.load %arg1[%c0_54, %c0_55, %53, %c0_56, %c0_57] : memref<1x4x5x5x128xbf16, #tpu.memory_space<vmem>>, vector<1x1x1x4x128xbf16>
      %55 = vector.shape_cast %54 : vector<1x1x1x4x128xbf16> to vector<4x128xbf16>
      %c6 = arith.constant 6 : index
      %c0_58 = arith.constant 0 : index
      %c0_59 = arith.constant 0 : index
      %56 = vector.load %arg2[%c6, %c0_58, %c0_59] : memref<9x128x128xbf16, #tpu.memory_space<vmem>>, vector<1x128x128xbf16>
      %57 = vector.shape_cast %56 : vector<1x128x128xbf16> to vector<128x128xbf16>
      %cst_60 = arith.constant dense<0.000000e+00> : vector<4x128xf32>
      %58 = tpu.matmul %55, %57, %cst_60 {dimension_numbers = #tpu.dot_dimension_numbers<[1], [0], [0], [1], [0, 0, 1, 1], [], []>} : vector<4x128xbf16>, vector<128x128xbf16>, vector<4x128xf32> -> vector<4x128xf32>
      %59 = arith.addf %51, %58 : vector<4x128xf32>
      %c1_i32_61 = arith.constant 1 : i32
      %60 = arith.addi %arg7, %c1_i32_61 : i32
      %c0_62 = arith.constant 0 : index
      %c1_63 = arith.constant 1 : index
      %61 = arith.index_cast %60 : i32 to index
      %c0_64 = arith.constant 0 : index
      %c0_65 = arith.constant 0 : index
      %62 = vector.load %arg1[%c0_62, %c1_63, %61, %c0_64, %c0_65] : memref<1x4x5x5x128xbf16, #tpu.memory_space<vmem>>, vector<1x1x1x4x128xbf16>
      %63 = vector.shape_cast %62 : vector<1x1x1x4x128xbf16> to vector<4x128xbf16>
      %c7 = arith.constant 7 : index
      %c0_66 = arith.constant 0 : index
      %c0_67 = arith.constant 0 : index
      %64 = vector.load %arg2[%c7, %c0_66, %c0_67] : memref<9x128x128xbf16, #tpu.memory_space<vmem>>, vector<1x128x128xbf16>
      %65 = vector.shape_cast %64 : vector<1x128x128xbf16> to vector<128x128xbf16>
      %cst_68 = arith.constant dense<0.000000e+00> : vector<4x128xf32>
      %66 = tpu.matmul %63, %65, %cst_68 {dimension_numbers = #tpu.dot_dimension_numbers<[1], [0], [0], [1], [0, 0, 1, 1], [], []>} : vector<4x128xbf16>, vector<128x128xbf16>, vector<4x128xf32> -> vector<4x128xf32>
      %67 = arith.addf %59, %66 : vector<4x128xf32>
      %c1_i32_69 = arith.constant 1 : i32
      %68 = arith.addi %arg7, %c1_i32_69 : i32
      %c0_70 = arith.constant 0 : index
      %c0_71 = arith.constant 0 : index
      %69 = arith.index_cast %68 : i32 to index
      %c1_72 = arith.constant 1 : index
      %c0_73 = arith.constant 0 : index
      %70 = vector.load %arg1[%c0_70, %c0_71, %69, %c1_72, %c0_73] : memref<1x4x5x5x128xbf16, #tpu.memory_space<vmem>>, vector<1x1x1x4x128xbf16>
      %71 = vector.shape_cast %70 : vector<1x1x1x4x128xbf16> to vector<4x128xbf16>
      %c8 = arith.constant 8 : index
      %c0_74 = arith.constant 0 : index
      %c0_75 = arith.constant 0 : index
      %72 = vector.load %arg2[%c8, %c0_74, %c0_75] : memref<9x128x128xbf16, #tpu.memory_space<vmem>>, vector<1x128x128xbf16>
      %73 = vector.shape_cast %72 : vector<1x128x128xbf16> to vector<128x128xbf16>
      %cst_76 = arith.constant dense<0.000000e+00> : vector<4x128xf32>
      %74 = tpu.matmul %71, %73, %cst_76 {dimension_numbers = #tpu.dot_dimension_numbers<[1], [0], [0], [1], [0, 0, 1, 1], [], []>} : vector<4x128xbf16>, vector<128x128xbf16>, vector<4x128xf32> -> vector<4x128xf32>
      %75 = arith.addf %67, %74 : vector<4x128xf32>
      %76 = vector.broadcast %0 : vector<1x128xf32> to vector<4x128xf32>
      %77 = arith.addf %75, %76 : vector<4x128xf32>
      %cst_77 = arith.constant 0.000000e+00 : f32
      %78 = vector.broadcast %cst_77 : f32 to vector<4x128xf32>
      %79 = arith.subf %78, %77 : vector<4x128xf32>
      %80 = math.exp %79 : vector<4x128xf32>
      %cst_78 = arith.constant 1.000000e+00 : f32
      %81 = vector.broadcast %cst_78 : f32 to vector<4x128xf32>
      %82 = arith.addf %81, %80 : vector<4x128xf32>
      %83 = tpu.reciprocal %82 {approx = true} : vector<4x128xf32> -> vector<4x128xf32>
      %84 = arith.mulf %77, %83 : vector<4x128xf32>
      %85 = arith.truncf %84 : vector<4x128xf32> to vector<4x128xbf16>
      %c0_79 = arith.constant 0 : index
      %c0_80 = arith.constant 0 : index
      %86 = vector.load %arg4[%c0_79, %c0_80] : memref<128x128xbf16, #tpu.memory_space<vmem>>, vector<128x128xbf16>
      %cst_81 = arith.constant dense<0.000000e+00> : vector<4x128xf32>
      %87 = tpu.matmul %85, %86, %cst_81 {dimension_numbers = #tpu.dot_dimension_numbers<[1], [0], [0], [1], [0, 0, 1, 1], [], []>} : vector<4x128xbf16>, vector<128x128xbf16>, vector<4x128xf32> -> vector<4x128xf32>
      %88 = vector.broadcast %1 : vector<1x128xf32> to vector<4x128xf32>
      %89 = arith.addf %87, %88 : vector<4x128xf32>
      %cst_82 = arith.constant 0.000000e+00 : f32
      %90 = vector.broadcast %cst_82 : f32 to vector<4x128xf32>
      %91 = arith.subf %90, %89 : vector<4x128xf32>
      %92 = math.exp %91 : vector<4x128xf32>
      %cst_83 = arith.constant 1.000000e+00 : f32
      %93 = vector.broadcast %cst_83 : f32 to vector<4x128xf32>
      %94 = arith.addf %93, %92 : vector<4x128xf32>
      %95 = tpu.reciprocal %94 {approx = true} : vector<4x128xf32> -> vector<4x128xf32>
      %96 = arith.mulf %89, %95 : vector<4x128xf32>
      %97 = arith.truncf %96 : vector<4x128xf32> to vector<4x128xbf16>
      %c0_84 = arith.constant 0 : index
      %98 = arith.index_cast %arg7 : i32 to index
      %c0_85 = arith.constant 0 : index
      %c0_86 = arith.constant 0 : index
      %99 = vector.load %arg6[%c0_84, %98, %c0_85, %c0_86] : memref<1x4x4x128xbf16, #tpu.memory_space<vmem>>, vector<1x1x4x128xbf16>
      %100 = vector.shape_cast %99 : vector<1x1x4x128xbf16> to vector<4x128xbf16>
      %101 = vector.shape_cast %97 : vector<4x128xbf16> to vector<1x1x4x128xbf16>
      tpu.vector_store %arg6[%c0_84, %98, %c0_85, %c0_86], %101 {strides = array<i32>} : memref<1x4x4x128xbf16, #tpu.memory_space<vmem>>, vector<1x1x4x128xbf16>,
    }
    %c4_i32_3 = arith.constant 4 : i32
    return
  }
  func.func @transform_0(%arg0: i32) -> (i32, i32, i32, i32, i32) {
    %c0_i32 = arith.constant 0 : i32
    %c0_i32_0 = arith.constant 0 : i32
    %c0_i32_1 = arith.constant 0 : i32
    %c0_i32_2 = arith.constant 0 : i32
    %c0_i32_3 = arith.constant 0 : i32
    return %arg0, %c0_i32, %c0_i32_0, %c0_i32_1, %c0_i32_2 : i32, i32, i32, i32, i32
  }
  func.func @transform_1(%arg0: i32) -> (i32, i32, i32) {
    %c0_i32 = arith.constant 0 : i32
    %c0_i32_0 = arith.constant 0 : i32
    %c0_i32_1 = arith.constant 0 : i32
    %c0_i32_2 = arith.constant 0 : i32
    return %c0_i32, %c0_i32_0, %c0_i32_1 : i32, i32, i32
  }
  func.func @transform_2(%arg0: i32) -> (i32, i32) {
    %c0_i32 = arith.constant 0 : i32
    %c0_i32_0 = arith.constant 0 : i32
    %c0_i32_1 = arith.constant 0 : i32
    return %c0_i32, %c0_i32_0 : i32, i32
  }
  func.func @transform_3(%arg0: i32) -> (i32, i32) {
    %c0_i32 = arith.constant 0 : i32
    %c0_i32_0 = arith.constant 0 : i32
    %c0_i32_1 = arith.constant 0 : i32
    return %c0_i32, %c0_i32_0 : i32, i32
  }
  func.func @transform_4(%arg0: i32) -> (i32, i32) {
    %c0_i32 = arith.constant 0 : i32
    %c0_i32_0 = arith.constant 0 : i32
    %c0_i32_1 = arith.constant 0 : i32
    return %c0_i32, %c0_i32_0 : i32, i32
  }
  func.func @transform_5(%arg0: i32) -> (i32, i32, i32, i32) {
    %c0_i32 = arith.constant 0 : i32
    %c0_i32_0 = arith.constant 0 : i32
    %c0_i32_1 = arith.constant 0 : i32
    %c0_i32_2 = arith.constant 0 : i32
    return %arg0, %c0_i32, %c0_i32_0, %c0_i32_1 : i32, i32, i32, i32
  }
}

module attributes {stable_mosaic.version = 11 : i64} {
  func.func @kernel(%arg0: i32, %arg1: memref<1x4x3x3x128xbf16, #tpu.memory_space<vmem>>, %arg2: memref<9x128x128xbf16, #tpu.memory_space<vmem>>, %arg3: memref<1x128xf32, #tpu.memory_space<vmem>>, %arg4: memref<128x128xbf16, #tpu.memory_space<vmem>>, %arg5: memref<1x128xf32, #tpu.memory_space<vmem>>, %arg6: memref<1x2x2x128xbf16, #tpu.memory_space<vmem>>) attributes {dimension_semantics = [#tpu.dimension_semantics<parallel>], iteration_bounds = array<i64: 2>, scalar_prefetch = 0 : i64, scratch_operands = 0 : i64, tpu.core_type = #tpu.core_type<tc>, window_params = [{transform_indices = @transform_0, window_bounds = array<i64: 1, 4, 3, 3, 128>}, {pipeline_mode = #tpu.pipeline_mode<synchronous>, transform_indices = @transform_1, window_bounds = array<i64: 9, 128, 128>}, {pipeline_mode = #tpu.pipeline_mode<synchronous>, transform_indices = @transform_2, window_bounds = array<i64: 1, 128>}, {pipeline_mode = #tpu.pipeline_mode<synchronous>, transform_indices = @transform_3, window_bounds = array<i64: 128, 128>}, {pipeline_mode = #tpu.pipeline_mode<synchronous>, transform_indices = @transform_4, window_bounds = array<i64: 1, 128>}, {transform_indices = @transform_5, window_bounds = array<i64: 1, 2, 2, 128>}]} {
    %c0 = arith.constant 0 : index
    %c0_0 = arith.constant 0 : index
    %0 = vector.load %arg3[%c0, %c0_0] : memref<1x128xf32, #tpu.memory_space<vmem>>, vector<1x128xf32>
    %c0_1 = arith.constant 0 : index
    %c0_2 = arith.constant 0 : index
    %1 = vector.load %arg5[%c0_1, %c0_2] : memref<1x128xf32, #tpu.memory_space<vmem>>, vector<1x128xf32>
    %c0_i32 = arith.constant 0 : i32
    %c2_i32 = arith.constant 2 : i32
    %2 = arith.addi %c0_i32, %c2_i32 : i32
    %c1_i32 = arith.constant 1 : i32
    scf.for %arg7 = %c0_i32 to %2 step %c1_i32  : i32 {
      %cst = arith.constant 0.000000e+00 : f32
      %3 = vector.broadcast %cst : f32 to vector<2x128xf32>
      %c0_i32_4 = arith.constant 0 : i32
      %4 = arith.addi %arg7, %c0_i32_4 : i32
      %c0_5 = arith.constant 0 : index
      %c0_6 = arith.constant 0 : index
      %5 = arith.index_cast %4 : i32 to index
      %c0_7 = arith.constant 0 : index
      %c0_8 = arith.constant 0 : index
      %6 = vector.load %arg1[%c0_5, %c0_6, %5, %c0_7, %c0_8] : memref<1x4x3x3x128xbf16, #tpu.memory_space<vmem>>, vector<1x1x1x2x128xbf16>
      %7 = vector.shape_cast %6 : vector<1x1x1x2x128xbf16> to vector<2x128xbf16>
      %c0_9 = arith.constant 0 : index
      %c0_10 = arith.constant 0 : index
      %c0_11 = arith.constant 0 : index
      %8 = vector.load %arg2[%c0_9, %c0_10, %c0_11] : memref<9x128x128xbf16, #tpu.memory_space<vmem>>, vector<1x128x128xbf16>
      %9 = vector.shape_cast %8 : vector<1x128x128xbf16> to vector<128x128xbf16>
      %cst_12 = arith.constant dense<0.000000e+00> : vector<2x128xf32>
      %10 = tpu.matmul %7, %9, %cst_12 {dimension_numbers = #tpu.dot_dimension_numbers<[1], [0], [0], [1], [0, 0, 1, 1], [], []>} : vector<2x128xbf16>, vector<128x128xbf16>, vector<2x128xf32> -> vector<2x128xf32>
      %11 = arith.addf %3, %10 : vector<2x128xf32>
      %c0_i32_13 = arith.constant 0 : i32
      %12 = arith.addi %arg7, %c0_i32_13 : i32
      %c0_14 = arith.constant 0 : index
      %c1 = arith.constant 1 : index
      %13 = arith.index_cast %12 : i32 to index
      %c0_15 = arith.constant 0 : index
      %c0_16 = arith.constant 0 : index
      %14 = vector.load %arg1[%c0_14, %c1, %13, %c0_15, %c0_16] : memref<1x4x3x3x128xbf16, #tpu.memory_space<vmem>>, vector<1x1x1x2x128xbf16>
      %15 = vector.shape_cast %14 : vector<1x1x1x2x128xbf16> to vector<2x128xbf16>
      %c1_17 = arith.constant 1 : index
      %c0_18 = arith.constant 0 : index
      %c0_19 = arith.constant 0 : index
      %16 = vector.load %arg2[%c1_17, %c0_18, %c0_19] : memref<9x128x128xbf16, #tpu.memory_space<vmem>>, vector<1x128x128xbf16>
      %17 = vector.shape_cast %16 : vector<1x128x128xbf16> to vector<128x128xbf16>
      %cst_20 = arith.constant dense<0.000000e+00> : vector<2x128xf32>
      %18 = tpu.matmul %15, %17, %cst_20 {dimension_numbers = #tpu.dot_dimension_numbers<[1], [0], [0], [1], [0, 0, 1, 1], [], []>} : vector<2x128xbf16>, vector<128x128xbf16>, vector<2x128xf32> -> vector<2x128xf32>
      %19 = arith.addf %11, %18 : vector<2x128xf32>
      %c0_i32_21 = arith.constant 0 : i32
      %20 = arith.addi %arg7, %c0_i32_21 : i32
      %c0_22 = arith.constant 0 : index
      %c0_23 = arith.constant 0 : index
      %21 = arith.index_cast %20 : i32 to index
      %c1_24 = arith.constant 1 : index
      %c0_25 = arith.constant 0 : index
      %22 = vector.load %arg1[%c0_22, %c0_23, %21, %c1_24, %c0_25] : memref<1x4x3x3x128xbf16, #tpu.memory_space<vmem>>, vector<1x1x1x2x128xbf16>
      %23 = vector.shape_cast %22 : vector<1x1x1x2x128xbf16> to vector<2x128xbf16>
      %c2 = arith.constant 2 : index
      %c0_26 = arith.constant 0 : index
      %c0_27 = arith.constant 0 : index
      %24 = vector.load %arg2[%c2, %c0_26, %c0_27] : memref<9x128x128xbf16, #tpu.memory_space<vmem>>, vector<1x128x128xbf16>
      %25 = vector.shape_cast %24 : vector<1x128x128xbf16> to vector<128x128xbf16>
      %cst_28 = arith.constant dense<0.000000e+00> : vector<2x128xf32>
      %26 = tpu.matmul %23, %25, %cst_28 {dimension_numbers = #tpu.dot_dimension_numbers<[1], [0], [0], [1], [0, 0, 1, 1], [], []>} : vector<2x128xbf16>, vector<128x128xbf16>, vector<2x128xf32> -> vector<2x128xf32>
      %27 = arith.addf %19, %26 : vector<2x128xf32>
      %c0_i32_29 = arith.constant 0 : i32
      %28 = arith.addi %arg7, %c0_i32_29 : i32
      %c0_30 = arith.constant 0 : index
      %c2_31 = arith.constant 2 : index
      %29 = arith.index_cast %28 : i32 to index
      %c0_32 = arith.constant 0 : index
      %c0_33 = arith.constant 0 : index
      %30 = vector.load %arg1[%c0_30, %c2_31, %29, %c0_32, %c0_33] : memref<1x4x3x3x128xbf16, #tpu.memory_space<vmem>>, vector<1x1x1x2x128xbf16>
      %31 = vector.shape_cast %30 : vector<1x1x1x2x128xbf16> to vector<2x128xbf16>
      %c3 = arith.constant 3 : index
      %c0_34 = arith.constant 0 : index
      %c0_35 = arith.constant 0 : index
      %32 = vector.load %arg2[%c3, %c0_34, %c0_35] : memref<9x128x128xbf16, #tpu.memory_space<vmem>>, vector<1x128x128xbf16>
      %33 = vector.shape_cast %32 : vector<1x128x128xbf16> to vector<128x128xbf16>
      %cst_36 = arith.constant dense<0.000000e+00> : vector<2x128xf32>
      %34 = tpu.matmul %31, %33, %cst_36 {dimension_numbers = #tpu.dot_dimension_numbers<[1], [0], [0], [1], [0, 0, 1, 1], [], []>} : vector<2x128xbf16>, vector<128x128xbf16>, vector<2x128xf32> -> vector<2x128xf32>
      %35 = arith.addf %27, %34 : vector<2x128xf32>
      %c0_i32_37 = arith.constant 0 : i32
      %36 = arith.addi %arg7, %c0_i32_37 : i32
      %c0_38 = arith.constant 0 : index
      %c3_39 = arith.constant 3 : index
      %37 = arith.index_cast %36 : i32 to index
      %c0_40 = arith.constant 0 : index
      %c0_41 = arith.constant 0 : index
      %38 = vector.load %arg1[%c0_38, %c3_39, %37, %c0_40, %c0_41] : memref<1x4x3x3x128xbf16, #tpu.memory_space<vmem>>, vector<1x1x1x2x128xbf16>
      %39 = vector.shape_cast %38 : vector<1x1x1x2x128xbf16> to vector<2x128xbf16>
      %c4 = arith.constant 4 : index
      %c0_42 = arith.constant 0 : index
      %c0_43 = arith.constant 0 : index
      %40 = vector.load %arg2[%c4, %c0_42, %c0_43] : memref<9x128x128xbf16, #tpu.memory_space<vmem>>, vector<1x128x128xbf16>
      %41 = vector.shape_cast %40 : vector<1x128x128xbf16> to vector<128x128xbf16>
      %cst_44 = arith.constant dense<0.000000e+00> : vector<2x128xf32>
      %42 = tpu.matmul %39, %41, %cst_44 {dimension_numbers = #tpu.dot_dimension_numbers<[1], [0], [0], [1], [0, 0, 1, 1], [], []>} : vector<2x128xbf16>, vector<128x128xbf16>, vector<2x128xf32> -> vector<2x128xf32>
      %43 = arith.addf %35, %42 : vector<2x128xf32>
      %c0_i32_45 = arith.constant 0 : i32
      %44 = arith.addi %arg7, %c0_i32_45 : i32
      %c0_46 = arith.constant 0 : index
      %c2_47 = arith.constant 2 : index
      %45 = arith.index_cast %44 : i32 to index
      %c1_48 = arith.constant 1 : index
      %c0_49 = arith.constant 0 : index
      %46 = vector.load %arg1[%c0_46, %c2_47, %45, %c1_48, %c0_49] : memref<1x4x3x3x128xbf16, #tpu.memory_space<vmem>>, vector<1x1x1x2x128xbf16>
      %47 = vector.shape_cast %46 : vector<1x1x1x2x128xbf16> to vector<2x128xbf16>
      %c5 = arith.constant 5 : index
      %c0_50 = arith.constant 0 : index
      %c0_51 = arith.constant 0 : index
      %48 = vector.load %arg2[%c5, %c0_50, %c0_51] : memref<9x128x128xbf16, #tpu.memory_space<vmem>>, vector<1x128x128xbf16>
      %49 = vector.shape_cast %48 : vector<1x128x128xbf16> to vector<128x128xbf16>
      %cst_52 = arith.constant dense<0.000000e+00> : vector<2x128xf32>
      %50 = tpu.matmul %47, %49, %cst_52 {dimension_numbers = #tpu.dot_dimension_numbers<[1], [0], [0], [1], [0, 0, 1, 1], [], []>} : vector<2x128xbf16>, vector<128x128xbf16>, vector<2x128xf32> -> vector<2x128xf32>
      %51 = arith.addf %43, %50 : vector<2x128xf32>
      %c1_i32_53 = arith.constant 1 : i32
      %52 = arith.addi %arg7, %c1_i32_53 : i32
      %c0_54 = arith.constant 0 : index
      %c0_55 = arith.constant 0 : index
      %53 = arith.index_cast %52 : i32 to index
      %c0_56 = arith.constant 0 : index
      %c0_57 = arith.constant 0 : index
      %54 = vector.load %arg1[%c0_54, %c0_55, %53, %c0_56, %c0_57] : memref<1x4x3x3x128xbf16, #tpu.memory_space<vmem>>, vector<1x1x1x2x128xbf16>
      %55 = vector.shape_cast %54 : vector<1x1x1x2x128xbf16> to vector<2x128xbf16>
      %c6 = arith.constant 6 : index
      %c0_58 = arith.constant 0 : index
      %c0_59 = arith.constant 0 : index
      %56 = vector.load %arg2[%c6, %c0_58, %c0_59] : memref<9x128x128xbf16, #tpu.memory_space<vmem>>, vector<1x128x128xbf16>
      %57 = vector.shape_cast %56 : vector<1x128x128xbf16> to vector<128x128xbf16>
      %cst_60 = arith.constant dense<0.000000e+00> : vector<2x128xf32>
      %58 = tpu.matmul %55, %57, %cst_60 {dimension_numbers = #tpu.dot_dimension_numbers<[1], [0], [0], [1], [0, 0, 1, 1], [], []>} : vector<2x128xbf16>, vector<128x128xbf16>, vector<2x128xf32> -> vector<2x128xf32>
      %59 = arith.addf %51, %58 : vector<2x128xf32>
      %c1_i32_61 = arith.constant 1 : i32
      %60 = arith.addi %arg7, %c1_i32_61 : i32
      %c0_62 = arith.constant 0 : index
      %c1_63 = arith.constant 1 : index
      %61 = arith.index_cast %60 : i32 to index
      %c0_64 = arith.constant 0 : index
      %c0_65 = arith.constant 0 : index
      %62 = vector.load %arg1[%c0_62, %c1_63, %61, %c0_64, %c0_65] : memref<1x4x3x3x128xbf16, #tpu.memory_space<vmem>>, vector<1x1x1x2x128xbf16>
      %63 = vector.shape_cast %62 : vector<1x1x1x2x128xbf16> to vector<2x128xbf16>
      %c7 = arith.constant 7 : index
      %c0_66 = arith.constant 0 : index
      %c0_67 = arith.constant 0 : index
      %64 = vector.load %arg2[%c7, %c0_66, %c0_67] : memref<9x128x128xbf16, #tpu.memory_space<vmem>>, vector<1x128x128xbf16>
      %65 = vector.shape_cast %64 : vector<1x128x128xbf16> to vector<128x128xbf16>
      %cst_68 = arith.constant dense<0.000000e+00> : vector<2x128xf32>
      %66 = tpu.matmul %63, %65, %cst_68 {dimension_numbers = #tpu.dot_dimension_numbers<[1], [0], [0], [1], [0, 0, 1, 1], [], []>} : vector<2x128xbf16>, vector<128x128xbf16>, vector<2x128xf32> -> vector<2x128xf32>
      %67 = arith.addf %59, %66 : vector<2x128xf32>
      %c1_i32_69 = arith.constant 1 : i32
      %68 = arith.addi %arg7, %c1_i32_69 : i32
      %c0_70 = arith.constant 0 : index
      %c0_71 = arith.constant 0 : index
      %69 = arith.index_cast %68 : i32 to index
      %c1_72 = arith.constant 1 : index
      %c0_73 = arith.constant 0 : index
      %70 = vector.load %arg1[%c0_70, %c0_71, %69, %c1_72, %c0_73] : memref<1x4x3x3x128xbf16, #tpu.memory_space<vmem>>, vector<1x1x1x2x128xbf16>
      %71 = vector.shape_cast %70 : vector<1x1x1x2x128xbf16> to vector<2x128xbf16>
      %c8 = arith.constant 8 : index
      %c0_74 = arith.constant 0 : index
      %c0_75 = arith.constant 0 : index
      %72 = vector.load %arg2[%c8, %c0_74, %c0_75] : memref<9x128x128xbf16, #tpu.memory_space<vmem>>, vector<1x128x128xbf16>
      %73 = vector.shape_cast %72 : vector<1x128x128xbf16> to vector<128x128xbf16>
      %cst_76 = arith.constant dense<0.000000e+00> : vector<2x128xf32>
      %74 = tpu.matmul %71, %73, %cst_76 {dimension_numbers = #tpu.dot_dimension_numbers<[1], [0], [0], [1], [0, 0, 1, 1], [], []>} : vector<2x128xbf16>, vector<128x128xbf16>, vector<2x128xf32> -> vector<2x128xf32>
      %75 = arith.addf %67, %74 : vector<2x128xf32>
      %76 = vector.broadcast %0 : vector<1x128xf32> to vector<2x128xf32>
      %77 = arith.addf %75, %76 : vector<2x128xf32>
      %cst_77 = arith.constant 0.000000e+00 : f32
      %78 = vector.broadcast %cst_77 : f32 to vector<2x128xf32>
      %79 = arith.subf %78, %77 : vector<2x128xf32>
      %80 = math.exp %79 : vector<2x128xf32>
      %cst_78 = arith.constant 1.000000e+00 : f32
      %81 = vector.broadcast %cst_78 : f32 to vector<2x128xf32>
      %82 = arith.addf %81, %80 : vector<2x128xf32>
      %83 = tpu.reciprocal %82 {approx = true} : vector<2x128xf32> -> vector<2x128xf32>
      %84 = arith.mulf %77, %83 : vector<2x128xf32>
      %85 = arith.truncf %84 : vector<2x128xf32> to vector<2x128xbf16>
      %c0_79 = arith.constant 0 : index
      %c0_80 = arith.constant 0 : index
      %86 = vector.load %arg4[%c0_79, %c0_80] : memref<128x128xbf16, #tpu.memory_space<vmem>>, vector<128x128xbf16>
      %cst_81 = arith.constant dense<0.000000e+00> : vector<2x128xf32>
      %87 = tpu.matmul %85, %86, %cst_81 {dimension_numbers = #tpu.dot_dimension_numbers<[1], [0], [0], [1], [0, 0, 1, 1], [], []>} : vector<2x128xbf16>, vector<128x128xbf16>, vector<2x128xf32> -> vector<2x128xf32>
      %88 = vector.broadcast %1 : vector<1x128xf32> to vector<2x128xf32>
      %89 = arith.addf %87, %88 : vector<2x128xf32>
      %cst_82 = arith.constant 0.000000e+00 : f32
      %90 = vector.broadcast %cst_82 : f32 to vector<2x128xf32>
      %91 = arith.subf %90, %89 : vector<2x128xf32>
      %92 = math.exp %91 : vector<2x128xf32>
      %cst_83 = arith.constant 1.000000e+00 : f32
      %93 = vector.broadcast %cst_83 : f32 to vector<2x128xf32>
      %94 = arith.addf %93, %92 : vector<2x128xf32>
      %95 = tpu.reciprocal %94 {approx = true} : vector<2x128xf32> -> vector<2x128xf32>
      %96 = arith.mulf %89, %95 : vector<2x128xf32>
      %97 = arith.truncf %96 : vector<2x128xf32> to vector<2x128xbf16>
      %c0_84 = arith.constant 0 : index
      %98 = arith.index_cast %arg7 : i32 to index
      %c0_85 = arith.constant 0 : index
      %c0_86 = arith.constant 0 : index
      %99 = vector.load %arg6[%c0_84, %98, %c0_85, %c0_86] : memref<1x2x2x128xbf16, #tpu.memory_space<vmem>>, vector<1x1x2x128xbf16>
      %100 = vector.shape_cast %99 : vector<1x1x2x128xbf16> to vector<2x128xbf16>
      %101 = vector.shape_cast %97 : vector<2x128xbf16> to vector<1x1x2x128xbf16>
      tpu.vector_store %arg6[%c0_84, %98, %c0_85, %c0_86], %101 {strides = array<i32>} : memref<1x2x2x128xbf16, #tpu.memory_space<vmem>>, vector<1x1x2x128xbf16>,
    }
    %c2_i32_3 = arith.constant 2 : i32
    return
  }
  func.func @transform_0(%arg0: i32) -> (i32, i32, i32, i32, i32) {
    %c0_i32 = arith.constant 0 : i32
    %c0_i32_0 = arith.constant 0 : i32
    %c0_i32_1 = arith.constant 0 : i32
    %c0_i32_2 = arith.constant 0 : i32
    %c0_i32_3 = arith.constant 0 : i32
    return %arg0, %c0_i32, %c0_i32_0, %c0_i32_1, %c0_i32_2 : i32, i32, i32, i32, i32
  }
  func.func @transform_1(%arg0: i32) -> (i32, i32, i32) {
    %c0_i32 = arith.constant 0 : i32
    %c0_i32_0 = arith.constant 0 : i32
    %c0_i32_1 = arith.constant 0 : i32
    %c0_i32_2 = arith.constant 0 : i32
    return %c0_i32, %c0_i32_0, %c0_i32_1 : i32, i32, i32
  }
  func.func @transform_2(%arg0: i32) -> (i32, i32) {
    %c0_i32 = arith.constant 0 : i32
    %c0_i32_0 = arith.constant 0 : i32
    %c0_i32_1 = arith.constant 0 : i32
    return %c0_i32, %c0_i32_0 : i32, i32
  }
  func.func @transform_3(%arg0: i32) -> (i32, i32) {
    %c0_i32 = arith.constant 0 : i32
    %c0_i32_0 = arith.constant 0 : i32
    %c0_i32_1 = arith.constant 0 : i32
    return %c0_i32, %c0_i32_0 : i32, i32
  }
  func.func @transform_4(%arg0: i32) -> (i32, i32) {
    %c0_i32 = arith.constant 0 : i32
    %c0_i32_0 = arith.constant 0 : i32
    %c0_i32_1 = arith.constant 0 : i32
    return %c0_i32, %c0_i32_0 : i32, i32
  }
  func.func @transform_5(%arg0: i32) -> (i32, i32, i32, i32) {
    %c0_i32 = arith.constant 0 : i32
    %c0_i32_0 = arith.constant 0 : i32
    %c0_i32_1 = arith.constant 0 : i32
    %c0_i32_2 = arith.constant 0 : i32
    return %arg0, %c0_i32, %c0_i32_0, %c0_i32_1 : i32, i32, i32, i32
  }
}

</mosaic_0001>

<llo_original>
// kernel: yolov11_backbone.5
$region0: #{yolov11_backbone.5}
  #allocation0 [shape = 'u32[]', space=smem, size = 0x4, offset = 0x4, fixed_abs, tag = 'smem constant byte address 0x4 - core index']
  #allocation1 [shape = 'u32[72,128]{1,0:T(1,128)}', space=vmem, size = 0x9000, scoped, tag = 'internal scratch']
  %s0 = inlined_call_operand.vmem [shape: bf16[2,4,33,33,8], index: 0, kind: input, shape index: {}]
  %s1 = inlined_call_operand.vmem [shape: bf16[9,8,128], index: 1, kind: input, shape index: {}]
  %s2 = inlined_call_operand.vmem [shape: f32[1,128], index: 2, kind: input, shape index: {}]
  %s3 = inlined_call_operand.vmem [shape: bf16[2,32,32,128], index: 3, kind: output, shape index: {}]
  %s4 = sld [smem:[#allocation0]]
  $region52: #{yolov11_backbone.5} parent=0
    _
  %s6 = ssub.s32 1, %s4
  %s7 = scalar_select 0, %s6, %s4
  loop: start=0, step=1, limit=4
  $region2: #{yolov11_backbone.5} parent=0 // loop_pre_header
    _
  $region3: #{yolov11_backbone.5} parent=0 // loop_header
    %s9 = sphi 0, %s13
    %p10 = scmp.ge.s32.totalorder %s9, 4
    %s19 = sphi 0, %s21
    %s22 = sphi 0, %s19
    %s23 = sphi 0, %s22
    %s39 = sphi 0, %s23
    %s43 = sphi 0, %s43
    %s45 = sphi 0, %s43
    %s46 = sphi 0, %s45
    %s60 = sphi 0, %s46
    %s64 = sphi 0, %s64
    %s66 = sphi 0, %s64
    %s67 = sphi 0, %s66
    %s81 = sphi 0, %s67
    %s87 = sphi 0, %s89
    %s90 = sphi 0, %s87
    %s91 = sphi 0, %s90
    %s107 = sphi 0, %s91
  $region4: #{yolov11_backbone.5} parent=0 // loop_header_branch
    %12 = sbr.rel (%p10) target = $region8
  $region5: #{yolov11_backbone.5} parent=0 // loop_body
    %s14 = ssub.s32 %s9, 1
    %s15 = ssub.s32 %s9, 2
    %s16 = sadd.s32 %s9, 1
    %s17 = ssub.s32 %s9, %s16
    %p18 = scmp.eq.s32.totalorder %s17, 0
    %s20 = sadd.s32 %s19, 1
    %s21 = scalar_select %p18, %s19, %s20
    %p24 = pneg %p18
    %p25 = scmp.eq.s32.totalorder %s9, 1
    %p26 = por %p24, %p25
    %p27 = scmp.ne.s32.totalorder %s19, %s22
    %p28 = scmp.eq.s32.totalorder %s9, 0
    %p29 = por %p27, %p28
    %p30 = scmp.ne.s32.totalorder %s19, %s22
    %p31 = scmp.eq.s32.totalorder %s14, 1
    %p32 = por %p30, %p31
    %p33 = scmp.ne.s32.totalorder %s22, %s23
    %p34 = scmp.eq.s32.totalorder %s14, 0
    %p35 = por %p33, %p34
    %p36 = scmp.ne.s32.totalorder %s22, %s23
    %p37 = scmp.eq.s32.totalorder %s15, 1
    %p38 = por %p36, %p37
    %p40 = scmp.ne.s32.totalorder %s23, %s39
    %p41 = scmp.eq.s32.totalorder %s15, 0
    %p42 = por %p40, %p41
    %s44 = sadd.s32 %s43, 1
    %p47 = scmp.eq.s32.totalorder %s9, 1
    %p48 = scmp.ne.s32.totalorder %s43, %s45
    %p49 = scmp.eq.s32.totalorder %s9, 0
    %p50 = por %p48, %p49
    %p51 = scmp.ne.s32.totalorder %s43, %s45
    %p52 = scmp.eq.s32.totalorder %s14, 1
    %p53 = por %p51, %p52
    %p54 = scmp.ne.s32.totalorder %s45, %s46
    %p55 = scmp.eq.s32.totalorder %s14, 0
    %p56 = por %p54, %p55
    %p57 = scmp.ne.s32.totalorder %s45, %s46
    %p58 = scmp.eq.s32.totalorder %s15, 1
    %p59 = por %p57, %p58
    %p61 = scmp.ne.s32.totalorder %s46, %s60
    %p62 = scmp.eq.s32.totalorder %s15, 0
    %p63 = por %p61, %p62
    %s65 = sadd.s32 %s64, 1
    %p68 = scmp.eq.s32.totalorder %s9, 1
    %p69 = scmp.ne.s32.totalorder %s64, %s66
    %p70 = scmp.eq.s32.totalorder %s9, 0
    %p71 = por %p69, %p70
    %p72 = scmp.ne.s32.totalorder %s64, %s66
    %p73 = scmp.eq.s32.totalorder %s14, 1
    %p74 = por %p72, %p73
    %p75 = scmp.ne.s32.totalorder %s66, %s67
    %p76 = scmp.eq.s32.totalorder %s14, 0
    %p77 = por %p75, %p76
    %p78 = scmp.ne.s32.totalorder %s66, %s67
    %p79 = scmp.eq.s32.totalorder %s15, 1
    %p80 = por %p78, %p79
    %p82 = scmp.ne.s32.totalorder %s67, %s81
    %p83 = scmp.eq.s32.totalorder %s15, 0
    %p84 = por %p82, %p83
    %s85 = ssub.s32 %s9, %s16
    %p86 = scmp.eq.s32.totalorder %s85, 0
    %s88 = sadd.s32 %s87, 1
    %s89 = scalar_select %p86, %s87, %s88
    %p92 = pneg %p86
    %p93 = scmp.eq.s32.totalorder %s9, 1
    %p94 = por %p92, %p93
    %p95 = scmp.ne.s32.totalorder %s87, %s90
    %p96 = scmp.eq.s32.totalorder %s9, 0
    %p97 = por %p95, %p96
    %p98 = scmp.ne.s32.totalorder %s87, %s90
    %p99 = scmp.eq.s32.totalorder %s14, 1
    %p100 = por %p98, %p99
    %p101 = scmp.ne.s32.totalorder %s90, %s91
    %p102 = scmp.eq.s32.totalorder %s14, 0
    %p103 = por %p101, %p102
    %p104 = scmp.ne.s32.totalorder %s90, %s91
    %p105 = scmp.eq.s32.totalorder %s15, 1
    %p106 = por %p104, %p105
    %p108 = scmp.ne.s32.totalorder %s91, %s107
    %p109 = scmp.eq.s32.totalorder %s15, 0
    %p110 = por %p108, %p109
    %p111 = scmp.le.s32.totalorder 1, %s9
    %p112 = scmp.lt.s32.totalorder %s9, 3
    %p113 = pnand %p111, %p112
    %p114 = pneg %p113
    // Predicated region
    $region9: #{yolov11_backbone.5} parent=5 // pred_check
      _
    $region10: #{yolov11_backbone.5} parent=5 // pred_check_branch
      %116 = sbr.rel (%p113) target = $region12
    $region11: #{yolov11_backbone.5} parent=5 // pred_region
      %s117 = ssub.s32 %s9, 1
      // Predicated region
      $region13: #{yolov11_backbone.5} parent=11 // pred_check
        %p118 = pneg %p56
      $region14: #{yolov11_backbone.5} parent=11 // pred_check_branch
        %120 = sbr.rel (%p118) target = $region16
      $region15: #{yolov11_backbone.5} parent=11 // pred_region
        _
      $region16: #{yolov11_backbone.5} parent=11 // pred_fallthru
        _
      // Predicated region
      $region17: #{yolov11_backbone.5} parent=11 // pred_check
        %p121 = pneg %p77
      $region18: #{yolov11_backbone.5} parent=11 // pred_check_branch
        %123 = sbr.rel (%p121) target = $region20
      $region19: #{yolov11_backbone.5} parent=11 // pred_region
        _
      $region20: #{yolov11_backbone.5} parent=11 // pred_fallthru
        _
    $region12: #{yolov11_backbone.5} parent=5 // pred_fallthru
      _
    %p124 = scmp.lt.s32.totalorder %s9, 2
    // Predicated region
    $region21: #{yolov11_backbone.5} parent=5 // pred_check
      %p125 = pneg %p124
    $region22: #{yolov11_backbone.5} parent=5 // pred_check_branch
      %127 = sbr.rel (%p125) target = $region24
    $region23: #{yolov11_backbone.5} parent=5 // pred_region
      // Predicated region
      $region25: #{yolov11_backbone.5} parent=23 // pred_check
        %p128 = pneg %p29
      $region26: #{yolov11_backbone.5} parent=23 // pred_check_branch
        %130 = sbr.rel (%p128) target = $region28
      $region27: #{yolov11_backbone.5} parent=23 // pred_region
        %p131 = scmp.lt.s32.totalorder %s9, 1
        %s132 = scalar_select %p131, %s9, 1
        %s133 = smul.addr %s132, 660
        %s134 = smul.addr %s133, 4
        %s135 = scalar_lea.vmem %s0, %s134
      $region28: #{yolov11_backbone.5} parent=23 // pred_fallthru
        _
    $region24: #{yolov11_backbone.5} parent=5 // pred_fallthru
      _
    %p136 = scmp.le.s32.totalorder 1, %s9
    %p137 = scmp.lt.s32.totalorder %s9, 3
    %p138 = pnand %p136, %p137
    %p139 = pneg %p138
    // Predicated region
    $region29: #{yolov11_backbone.5} parent=5 // pred_check
      _
    $region30: #{yolov11_backbone.5} parent=5 // pred_check_branch
      %141 = sbr.rel (%p138) target = $region32
    $region31: #{yolov11_backbone.5} parent=5 // pred_region
      %s142 = ssub.s32 %s9, 1
      %p143 = scmp.lt.s32.totalorder %s14, 1
      %s144 = scalar_select %p143, %s14, 1
      %s145 = smul.addr %s144, 660
      %s146 = smul.addr %s145, 4
      %s147 = scalar_lea.vmem %s0, %s146
      %p148 = pneg %p35
      %p149 = pneg %p32
      %p150 = pneg %p56
      %p151 = pneg %p53
      %p152 = pneg %p77
      %p153 = pneg %p74
      %p154 = pneg %p103
      %p155 = pneg %p100
      %p156 = scmp.lt.s32.totalorder %s14, 1
      %s157 = scalar_select %p156, %s14, 1
      %s158 = smul.addr %s157, 128
      %s159 = smul.addr %s158, 4
      %s160 = scalar_lea.vmem %s3, %s159
      %p161 = scmp.lt.s32.totalorder %s14, 1
      %s162 = scalar_select %p161, %s14, 1
      %s163 = smul.addr %s162, 660
      %s164 = smul.addr %s163, 4
      %s165 = scalar_lea.vmem %s0, %s164
      %p166 = scmp.lt.s32.totalorder %s14, 1
      %s167 = scalar_select %p166, %s14, 1
      %s168 = smul.addr %s167, 128
      %s169 = smul.addr %s168, 4
      %s170 = scalar_lea.vmem %s3, %s169
      %v172 = vld [vmem:[%s2] sm:$0x1]
      loop: start=0, step=1, limit=32
      $region33: #{yolov11_backbone.5} parent=31 // loop_pre_header
        _
      $region34: #{yolov11_backbone.5} parent=31 // loop_header
        %s174 = sphi 0, %s178
        %p175 = scmp.ge.s32.totalorder %s174, 32
      $region35: #{yolov11_backbone.5} parent=31 // loop_header_branch
        %177 = sbr.rel (%p175) target = $region39
      $region36: #{yolov11_backbone.5} parent=31 // loop_body
        %s179 = smul.u32 %s174, 5
        %s180 = smul.addr %s179, 4
        %s181 = scalar_lea.vmem %s165, %s180
        %v182 = vld [vmem:[%s181] sm:$0xf]
        %v183 = vld [vmem:[%s181 + $0x4] sm:$0xf]
        %v184 = vld [vmem:[%s181 + $0x8] sm:$0xf]
        %v185 = vld [vmem:[%s181 + $0xc] sm:$0xf]
        %v186 = vld [vmem:[%s1] sm:$0xf]
        %s187 = sadd.s32 %s179, 165
        %s188 = smul.addr %s187, 4
        %s189 = scalar_lea.vmem %s165, %s188
        %v190 = vld [vmem:[%s189] sm:$0xf]
        %v191 = vld [vmem:[%s189 + $0x4] sm:$0xf]
        %v192 = vld [vmem:[%s189 + $0x8] sm:$0xf]
        %v193 = vld [vmem:[%s189 + $0xc] sm:$0xf]
        %s194 = scalar_lea.vmem %s1, 4
        %v195 = vld [vmem:[%s194] sm:$0xf]
        %v200 = vunpack.c.l.b16 %v190
        %v201 = vunpack.c.l.b16 %v191
        %v202 = vunpack.c.l.b16 %v192
        %v203 = vunpack.c.l.b16 %v193
        %v204 = vpack.c.b16 %v201, %v200
        %v205 = vpack.c.b16 %v203, %v202
        %vm206 = vcmask 64512
        %v208 = vsel %vm206, %v204, 0
        %v211 = vsel %vm206, %v205, 0
        %vm213 = vcmask 1043456
        %v215 = vsel %vm213, %v195, 0
        %217 = vmatpush.bf16.msra.mxu0 0
        %218 = vmatpush.bf16.msra.mxu0 0
        %219 = vmatpush.bf16.msra.mxu0 0
        %220 = vmatpush.bf16.msra.mxu0 0
        %221 = vmatpush.bf16.msra.mxu0 0
        %222 = vmatpush.bf16.msra.mxu0 0
        %223 = vmatpush.bf16.msra.mxu0 0
        %224 = vmatpush.bf16.msra.mxu0 %v215
        %225 = vmatmul.bf16.gmra.mxu0 %v208
        %v226 = vpop.f32.mrf.mxu0
        %v227 = vadd.f32 0.0, %v226
        %v228 = vpop.f32.mrf.mxu0
        %v229 = vadd.f32 0.0, %v228
        %230 = vmatmul.bf16.gmra.mxu0 %v211
        %v231 = vpop.f32.mrf.mxu0
        %v232 = vadd.f32 0.0, %v231
        %v233 = vpop.f32.mrf.mxu0
        %v234 = vadd.f32 0.0, %v233
        %235 = vdwg.mxu0
        %v240 = vunpack.c.l.b16 %v182
        %v241 = vunpack.c.l.b16 %v183
        %v242 = vunpack.c.l.b16 %v184
        %v243 = vunpack.c.l.b16 %v185
        %v244 = vpack.c.b16 %v241, %v240
        %v245 = vpack.c.b16 %v243, %v242
        %v247 = vsel %vm206, %v244, 0
        %v250 = vsel %vm206, %v245, 0
        %v253 = vsel %vm213, %v186, 0
        %255 = vmatpush.bf16.msra.mxu0 0
        %256 = vmatpush.bf16.msra.mxu0 0
        %257 = vmatpush.bf16.msra.mxu0 0
        %258 = vmatpush.bf16.msra.mxu0 0
        %259 = vmatpush.bf16.msra.mxu0 0
        %260 = vmatpush.bf16.msra.mxu0 0
        %261 = vmatpush.bf16.msra.mxu0 0
        %262 = vmatpush.bf16.msra.mxu0 %v253
        %263 = vmatmul.bf16.gmra.mxu0 %v247
        %v264 = vpop.f32.mrf.mxu0
        %v265 = vadd.f32 %v227, %v264
        %v266 = vpop.f32.mrf.mxu0
        %v267 = vadd.f32 %v229, %v266
        %268 = vmatmul.bf16.gmra.mxu0 %v250
        %v269 = vpop.f32.mrf.mxu0
        %v270 = vadd.f32 %v232, %v269
        %v271 = vpop.f32.mrf.mxu0
        %v272 = vadd.f32 %v234, %v271
        %273 = vdwg.mxu0
        %v274 = vld [vmem:[%s181] sm:$0xf]
        %v275 = vld [vmem:[%s181 + $0x4] sm:$0xf]
        %v276 = vld [vmem:[%s181 + $0x8] sm:$0xf]
        %v277 = vld [vmem:[%s181 + $0xc] sm:$0xf]
        %v278 = vld [vmem:[%s181 + $0x10] sm:$0x1]
        %s279 = scalar_lea.vmem %s1, 8
        %v280 = vld [vmem:[%s279] sm:$0xf]
        %v286 = vunpack.c.l.b16 %v274
        %v287 = vunpack.c.l.b16 %v275
        %v288 = vunpack.c.l.b16 %v276
        %v289 = vunpack.c.l.b16 %v277
        %v290 = vunpack.c.l.b16 %v278
        %v291 = vpack.c.b16 %v287, %v286
        %v292 = vpack.c.b16 %v289, %v288
        %v293 = vpack.c.b16 %v290, %v290
        %vm294 = vsmask.f32 7424
        %v296 = vshrl.u32 %v291, 16
        %v298 = vshll.u32 %v291, 16
        %v300 = vrot.slane %v298, 1
        %v301 = vor.u32 %v296, %v300
        %v303 = vshll.u32 %v292, 16
        %v305 = vrot.slane %v303, 1
        %v306 = vsel %vm294, %v301, %v305
        %v307 = vshrl.u32 %v292, 16
        %v309 = vor.u32 %v307, %v305
        %v311 = vshll.u32 %v293, 16
        %v313 = vrot.slane %v311, 1
        %v314 = vsel %vm294, %v309, %v313
        %v316 = vsel %vm206, %v306, 0
        %v319 = vsel %vm206, %v314, 0
        %v322 = vsel %vm213, %v280, 0
        %324 = vmatpush.bf16.msra.mxu0 0
        %325 = vmatpush.bf16.msra.mxu0 0
        %326 = vmatpush.bf16.msra.mxu0 0
        %327 = vmatpush.bf16.msra.mxu0 0
        %328 = vmatpush.bf16.msra.mxu0 0
        %329 = vmatpush.bf16.msra.mxu0 0
        %330 = vmatpush.bf16.msra.mxu0 0
        %331 = vmatpush.bf16.msra.mxu0 %v322
        %332 = vmatmul.bf16.gmra.mxu0 %v316
        %v333 = vpop.f32.mrf.mxu0
        %v334 = vadd.f32 0.0, %v333
        %v335 = vpop.f32.mrf.mxu0
        %v336 = vadd.f32 0.0, %v335
        %337 = vmatmul.bf16.gmra.mxu0 %v319
        %v338 = vpop.f32.mrf.mxu0
        %v339 = vadd.f32 0.0, %v338
        %v340 = vpop.f32.mrf.mxu0
        %v341 = vadd.f32 0.0, %v340
        %342 = vdwg.mxu0
        %v343 = vadd.f32 %v265, %v334
        %v344 = vadd.f32 %v267, %v336
        %v345 = vadd.f32 %v270, %v339
        %v346 = vadd.f32 %v272, %v341
        %s347 = sadd.s32 %s179, 330
        %s348 = smul.addr %s347, 4
        %s349 = scalar_lea.vmem %s165, %s348
        %v350 = vld [vmem:[%s349] sm:$0xf]
        %v351 = vld [vmem:[%s349 + $0x4] sm:$0xf]
        %v352 = vld [vmem:[%s349 + $0x8] sm:$0xf]
        %v353 = vld [vmem:[%s349 + $0xc] sm:$0xf]
        %s354 = scalar_lea.vmem %s1, 12
        %v355 = vld [vmem:[%s354] sm:$0xf]
        %v360 = vunpack.c.l.b16 %v350
        %v361 = vunpack.c.l.b16 %v351
        %v362 = vunpack.c.l.b16 %v352
        %v363 = vunpack.c.l.b16 %v353
        %v364 = vpack.c.b16 %v361, %v360
        %v365 = vpack.c.b16 %v363, %v362
        %v367 = vsel %vm206, %v364, 0
        %v370 = vsel %vm206, %v365, 0
        %v373 = vsel %vm213, %v355, 0
        %375 = vmatpush.bf16.msra.mxu0 0
        %376 = vmatpush.bf16.msra.mxu0 0
        %377 = vmatpush.bf16.msra.mxu0 0
        %378 = vmatpush.bf16.msra.mxu0 0
        %379 = vmatpush.bf16.msra.mxu0 0
        %380 = vmatpush.bf16.msra.mxu0 0
        %381 = vmatpush.bf16.msra.mxu0 0
        %382 = vmatpush.bf16.msra.mxu0 %v373
        %383 = vmatmul.bf16.gmra.mxu0 %v367
        %v384 = vpop.f32.mrf.mxu0
        %v385 = vadd.f32 0.0, %v384
        %v386 = vpop.f32.mrf.mxu0
        %v387 = vadd.f32 0.0, %v386
        %388 = vmatmul.bf16.gmra.mxu0 %v370
        %v389 = vpop.f32.mrf.mxu0
        %v390 = vadd.f32 0.0, %v389
        %v391 = vpop.f32.mrf.mxu0
        %v392 = vadd.f32 0.0, %v391
        %393 = vdwg.mxu0
        %v394 = vadd.f32 %v343, %v385
        %v395 = vadd.f32 %v344, %v387
        %v396 = vadd.f32 %v345, %v390
        %v397 = vadd.f32 %v346, %v392
        %s398 = sadd.s32 %s179, 495
        %s399 = smul.addr %s398, 4
        %s400 = scalar_lea.vmem %s165, %s399
        %v401 = vld [vmem:[%s400] sm:$0xf]
        %v402 = vld [vmem:[%s400 + $0x4] sm:$0xf]
        %v403 = vld [vmem:[%s400 + $0x8] sm:$0xf]
        %v404 = vld [vmem:[%s400 + $0xc] sm:$0xf]
        %s405 = scalar_lea.vmem %s1, 16
        %v406 = vld [vmem:[%s405] sm:$0xf]
        %v411 = vunpack.c.l.b16 %v401
        %v412 = vunpack.c.l.b16 %v402
        %v413 = vunpack.c.l.b16 %v403
        %v414 = vunpack.c.l.b16 %v404
        %v415 = vpack.c.b16 %v412, %v411
        %v416 = vpack.c.b16 %v414, %v413
        %v418 = vsel %vm206, %v415, 0
        %v421 = vsel %vm206, %v416, 0
        %v424 = vsel %vm213, %v406, 0
        %426 = vmatpush.bf16.msra.mxu0 0
        %427 = vmatpush.bf16.msra.mxu0 0
        %428 = vmatpush.bf16.msra.mxu0 0
        %429 = vmatpush.bf16.msra.mxu0 0
        %430 = vmatpush.bf16.msra.mxu0 0
        %431 = vmatpush.bf16.msra.mxu0 0
        %432 = vmatpush.bf16.msra.mxu0 0
        %433 = vmatpush.bf16.msra.mxu0 %v424
        %434 = vmatmul.bf16.gmra.mxu0 %v418
        %v435 = vpop.f32.mrf.mxu0
        %v436 = vadd.f32 0.0, %v435
        %v437 = vpop.f32.mrf.mxu0
        %v438 = vadd.f32 0.0, %v437
        %439 = vmatmul.bf16.gmra.mxu0 %v421
        %v440 = vpop.f32.mrf.mxu0
        %v441 = vadd.f32 0.0, %v440
        %v442 = vpop.f32.mrf.mxu0
        %v443 = vadd.f32 0.0, %v442
        %444 = vdwg.mxu0
        %v445 = vadd.f32 %v394, %v436
        %v446 = vadd.f32 %v395, %v438
        %v447 = vadd.f32 %v396, %v441
        %v448 = vadd.f32 %v397, %v443
        %v449 = vld [vmem:[%s349] sm:$0xf]
        %v450 = vld [vmem:[%s349 + $0x4] sm:$0xf]
        %v451 = vld [vmem:[%s349 + $0x8] sm:$0xf]
        %v452 = vld [vmem:[%s349 + $0xc] sm:$0xf]
        %v453 = vld [vmem:[%s349 + $0x10] sm:$0x1]
        %s454 = scalar_lea.vmem %s1, 20
        %v455 = vld [vmem:[%s454] sm:$0xf]
        %v461 = vunpack.c.l.b16 %v449
        %v462 = vunpack.c.l.b16 %v450
        %v463 = vunpack.c.l.b16 %v451
        %v464 = vunpack.c.l.b16 %v452
        %v465 = vunpack.c.l.b16 %v453
        %v466 = vpack.c.b16 %v462, %v461
        %v467 = vpack.c.b16 %v464, %v463
        %v468 = vpack.c.b16 %v465, %v465
        %v470 = vshrl.u32 %v466, 16
        %v472 = vshll.u32 %v466, 16
        %v474 = vrot.slane %v472, 1
        %v475 = vor.u32 %v470, %v474
        %v477 = vshll.u32 %v467, 16
        %v479 = vrot.slane %v477, 1
        %v480 = vsel %vm294, %v475, %v479
        %v481 = vshrl.u32 %v467, 16
        %v483 = vor.u32 %v481, %v479
        %v485 = vshll.u32 %v468, 16
        %v487 = vrot.slane %v485, 1
        %v488 = vsel %vm294, %v483, %v487
        %v490 = vsel %vm206, %v480, 0
        %v493 = vsel %vm206, %v488, 0
        %v496 = vsel %vm213, %v455, 0
        %498 = vmatpush.bf16.msra.mxu0 0
        %499 = vmatpush.bf16.msra.mxu0 0
        %500 = vmatpush.bf16.msra.mxu0 0
        %501 = vmatpush.bf16.msra.mxu0 0
        %502 = vmatpush.bf16.msra.mxu0 0
        %503 = vmatpush.bf16.msra.mxu0 0
        %504 = vmatpush.bf16.msra.mxu0 0
        %505 = vmatpush.bf16.msra.mxu0 %v496
        %506 = vmatmul.bf16.gmra.mxu0 %v490
        %v507 = vpop.f32.mrf.mxu0
        %v508 = vadd.f32 0.0, %v507
        %v509 = vpop.f32.mrf.mxu0
        %v510 = vadd.f32 0.0, %v509
        %511 = vmatmul.bf16.gmra.mxu0 %v493
        %v512 = vpop.f32.mrf.mxu0
        %v513 = vadd.f32 0.0, %v512
        %v514 = vpop.f32.mrf.mxu0
        %v515 = vadd.f32 0.0, %v514
        %516 = vdwg.mxu0
        %v517 = vadd.f32 %v445, %v508
        %v518 = vadd.f32 %v446, %v510
        %v519 = vadd.f32 %v447, %v513
        %v520 = vadd.f32 %v448, %v515
        %s521 = sadd.s32 %s174, 1
        %s522 = smul.u32 %s521, 5
        %s523 = smul.addr %s522, 4
        %s524 = scalar_lea.vmem %s165, %s523
        %v525 = vld [vmem:[%s524] sm:$0xf]
        %v526 = vld [vmem:[%s524 + $0x4] sm:$0xf]
        %v527 = vld [vmem:[%s524 + $0x8] sm:$0xf]
        %v528 = vld [vmem:[%s524 + $0xc] sm:$0xf]
        %s529 = scalar_lea.vmem %s1, 24
        %v530 = vld [vmem:[%s529] sm:$0xf]
        %v535 = vunpack.c.l.b16 %v525
        %v536 = vunpack.c.l.b16 %v526
        %v537 = vunpack.c.l.b16 %v527
        %v538 = vunpack.c.l.b16 %v528
        %v539 = vpack.c.b16 %v536, %v535
        %v540 = vpack.c.b16 %v538, %v537
        %v542 = vsel %vm206, %v539, 0
        %v545 = vsel %vm206, %v540, 0
        %v548 = vsel %vm213, %v530, 0
        %550 = vmatpush.bf16.msra.mxu0 0
        %551 = vmatpush.bf16.msra.mxu0 0
        %552 = vmatpush.bf16.msra.mxu0 0
        %553 = vmatpush.bf16.msra.mxu0 0
        %554 = vmatpush.bf16.msra.mxu0 0
        %555 = vmatpush.bf16.msra.mxu0 0
        %556 = vmatpush.bf16.msra.mxu0 0
        %557 = vmatpush.bf16.msra.mxu0 %v548
        %558 = vmatmul.bf16.gmra.mxu0 %v542
        %v559 = vpop.f32.mrf.mxu0
        %v560 = vadd.f32 0.0, %v559
        %v561 = vpop.f32.mrf.mxu0
        %v562 = vadd.f32 0.0, %v561
        %563 = vmatmul.bf16.gmra.mxu0 %v545
        %v564 = vpop.f32.mrf.mxu0
        %v565 = vadd.f32 0.0, %v564
        %v566 = vpop.f32.mrf.mxu0
        %v567 = vadd.f32 0.0, %v566
        %568 = vdwg.mxu0
        %v569 = vadd.f32 %v517, %v560
        %v570 = vadd.f32 %v518, %v562
        %v571 = vadd.f32 %v519, %v565
        %v572 = vadd.f32 %v520, %v567
        %s573 = sadd.s32 %s522, 165
        %s574 = smul.addr %s573, 4
        %s575 = scalar_lea.vmem %s165, %s574
        %v576 = vld [vmem:[%s575] sm:$0xf]
        %v577 = vld [vmem:[%s575 + $0x4] sm:$0xf]
        %v578 = vld [vmem:[%s575 + $0x8] sm:$0xf]
        %v579 = vld [vmem:[%s575 + $0xc] sm:$0xf]
        %s580 = scalar_lea.vmem %s1, 28
        %v581 = vld [vmem:[%s580] sm:$0xf]
        %v586 = vunpack.c.l.b16 %v576
        %v587 = vunpack.c.l.b16 %v577
        %v588 = vunpack.c.l.b16 %v578
        %v589 = vunpack.c.l.b16 %v579
        %v590 = vpack.c.b16 %v587, %v586
        %v591 = vpack.c.b16 %v589, %v588
        %v593 = vsel %vm206, %v590, 0
        %v596 = vsel %vm206, %v591, 0
        %v599 = vsel %vm213, %v581, 0
        %601 = vmatpush.bf16.msra.mxu0 0
        %602 = vmatpush.bf16.msra.mxu0 0
        %603 = vmatpush.bf16.msra.mxu0 0
        %604 = vmatpush.bf16.msra.mxu0 0
        %605 = vmatpush.bf16.msra.mxu0 0
        %606 = vmatpush.bf16.msra.mxu0 0
        %607 = vmatpush.bf16.msra.mxu0 0
        %608 = vmatpush.bf16.msra.mxu0 %v599
        %609 = vmatmul.bf16.gmra.mxu0 %v593
        %v610 = vpop.f32.mrf.mxu0
        %v611 = vadd.f32 0.0, %v610
        %v612 = vpop.f32.mrf.mxu0
        %v613 = vadd.f32 0.0, %v612
        %614 = vmatmul.bf16.gmra.mxu0 %v596
        %v615 = vpop.f32.mrf.mxu0
        %v616 = vadd.f32 0.0, %v615
        %v617 = vpop.f32.mrf.mxu0
        %v618 = vadd.f32 0.0, %v617
        %619 = vdwg.mxu0
        %v620 = vadd.f32 %v569, %v611
        %v621 = vadd.f32 %v570, %v613
        %v622 = vadd.f32 %v571, %v616
        %v623 = vadd.f32 %v572, %v618
        %v624 = vld [vmem:[%s524] sm:$0xf]
        %v625 = vld [vmem:[%s524 + $0x4] sm:$0xf]
        %v626 = vld [vmem:[%s524 + $0x8] sm:$0xf]
        %v627 = vld [vmem:[%s524 + $0xc] sm:$0xf]
        %v628 = vld [vmem:[%s524 + $0x10] sm:$0x1]
        %s629 = scalar_lea.vmem %s1, 32
        %v630 = vld [vmem:[%s629] sm:$0xf]
        %v636 = vunpack.c.l.b16 %v624
        %v637 = vunpack.c.l.b16 %v625
        %v638 = vunpack.c.l.b16 %v626
        %v639 = vunpack.c.l.b16 %v627
        %v640 = vunpack.c.l.b16 %v628
        %v641 = vpack.c.b16 %v637, %v636
        %v642 = vpack.c.b16 %v639, %v638
        %v643 = vpack.c.b16 %v640, %v640
        %v645 = vshrl.u32 %v641, 16
        %v647 = vshll.u32 %v641, 16
        %v649 = vrot.slane %v647, 1
        %v650 = vor.u32 %v645, %v649
        %v652 = vshll.u32 %v642, 16
        %v654 = vrot.slane %v652, 1
        %v655 = vsel %vm294, %v650, %v654
        %v656 = vshrl.u32 %v642, 16
        %v658 = vor.u32 %v656, %v654
        %v660 = vshll.u32 %v643, 16
        %v662 = vrot.slane %v660, 1
        %v663 = vsel %vm294, %v658, %v662
        %v665 = vsel %vm206, %v655, 0
        %v668 = vsel %vm206, %v663, 0
        %v671 = vsel %vm213, %v630, 0
        %673 = vmatpush.bf16.msra.mxu0 0
        %674 = vmatpush.bf16.msra.mxu0 0
        %675 = vmatpush.bf16.msra.mxu0 0
        %676 = vmatpush.bf16.msra.mxu0 0
        %677 = vmatpush.bf16.msra.mxu0 0
        %678 = vmatpush.bf16.msra.mxu0 0
        %679 = vmatpush.bf16.msra.mxu0 0
        %680 = vmatpush.bf16.msra.mxu0 %v671
        %681 = vmatmul.bf16.gmra.mxu0 %v665
        %v682 = vpop.f32.mrf.mxu0
        %v683 = vadd.f32 0.0, %v682
        %v684 = vpop.f32.mrf.mxu0
        %v685 = vadd.f32 0.0, %v684
        %686 = vmatmul.bf16.gmra.mxu0 %v668
        %v687 = vpop.f32.mrf.mxu0
        %v688 = vadd.f32 0.0, %v687
        %v689 = vpop.f32.mrf.mxu0
        %v690 = vadd.f32 0.0, %v689
        %691 = vdwg.mxu0
        %v692 = vadd.f32 %v620, %v683
        %v693 = vadd.f32 %v621, %v685
        %v694 = vadd.f32 %v622, %v688
        %v695 = vadd.f32 %v623, %v690
        %v697 = vperm.slane %v172, 0
        %v699 = vadd.f32 %v692, %v697
        %v700 = vadd.f32 %v693, %v697
        %v701 = vadd.f32 %v694, %v697
        %v702 = vadd.f32 %v695, %v697
        %v703 = vsub.f32 0.0, %v699
        %v704 = vsub.f32 0.0, %v700
        %v705 = vsub.f32 0.0, %v701
        %v706 = vsub.f32 0.0, %v702
        %v707 = vmul.f32 %v703, 1.442695
        %v708 = vpow.pop %v707
        %v709 = vmul.f32 %v704, 1.442695
        %v710 = vpow.pop %v709
        %v711 = vmul.f32 %v705, 1.442695
        %v712 = vpow.pop %v711
        %v713 = vmul.f32 %v706, 1.442695
        %v714 = vpow.pop %v713
        %v715 = vadd.f32 %v708, 1.0
        %v716 = vadd.f32 %v710, 1.0
        %v717 = vadd.f32 %v712, 1.0
        %v718 = vadd.f32 %v714, 1.0
        %v719 = vrcp.pop %v715
        %v720 = vrcp.pop %v716
        %v721 = vrcp.pop %v717
        %v722 = vrcp.pop %v718
        %v723 = vmul.f32 %v699, %v719
        %v724 = vmul.f32 %v700, %v720
        %v725 = vmul.f32 %v701, %v721
        %v726 = vmul.f32 %v702, %v722
        %v727 = vpack.c.bf16 %v723, %v723
        %v728 = vpack.c.bf16 %v724, %v724
        %v729 = vpack.c.bf16 %v725, %v725
        %v730 = vpack.c.bf16 %v726, %v726
        %s731 = smul.u32 %s174, 4
        %s732 = smul.addr %s731, 4
        %s733 = scalar_lea.vmem %s170, %s732
        %734 = vst [vmem:[%s733] sm:$0xf] %v727
        %735 = vst [vmem:[%s733 + $0x4] sm:$0xf] %v728
        %736 = vst [vmem:[%s733 + $0x8] sm:$0xf] %v729
        %737 = vst [vmem:[%s733 + $0xc] sm:$0xf] %v730
      $region37: #{yolov11_backbone.5} parent=31 // loop_footer
        %s178 = sadd.s32 1, %s174
      $region38: #{yolov11_backbone.5} parent=31 // loop_footer_branch
        %173 = sbr.rel target = $region34
      $region39: #{yolov11_backbone.5} parent=31 // loop_exit
        _
      %p738 = scmp.lt.s32.totalorder %s14, 1
      %s739 = scalar_select %p738, %s14, 1
      %s740 = smul.addr %s739, 128
      %s741 = smul.addr %s740, 4
      %s742 = scalar_lea.vmem %s3, %s741
      // Predicated region
      $region40: #{yolov11_backbone.5} parent=31 // pred_check
        %p743 = pneg %p100
      $region41: #{yolov11_backbone.5} parent=31 // pred_check_branch
        %745 = sbr.rel (%p743) target = $region43
      $region42: #{yolov11_backbone.5} parent=31 // pred_region
        _
      $region43: #{yolov11_backbone.5} parent=31 // pred_fallthru
        _
    $region32: #{yolov11_backbone.5} parent=5 // pred_fallthru
      _
    %p746 = scmp.le.s32.totalorder 2, %s9
    // Predicated region
    $region44: #{yolov11_backbone.5} parent=5 // pred_check
      %p747 = pneg %p746
    $region45: #{yolov11_backbone.5} parent=5 // pred_check_branch
      %749 = sbr.rel (%p747) target = $region47
    $region46: #{yolov11_backbone.5} parent=5 // pred_region
      %s750 = ssub.s32 %s9, 2
      // Predicated region
      $region48: #{yolov11_backbone.5} parent=46 // pred_check
        %p751 = pneg %p106
      $region49: #{yolov11_backbone.5} parent=46 // pred_check_branch
        %753 = sbr.rel (%p751) target = $region51
      $region50: #{yolov11_backbone.5} parent=46 // pred_region
        %p754 = scmp.lt.s32.totalorder %s15, 1
        %s755 = scalar_select %p754, %s15, 1
        %s756 = smul.addr %s755, 128
        %s757 = smul.addr %s756, 4
        %s758 = scalar_lea.vmem %s3, %s757
      $region51: #{yolov11_backbone.5} parent=46 // pred_fallthru
        _
    $region47: #{yolov11_backbone.5} parent=5 // pred_fallthru
      _
  $region6: #{yolov11_backbone.5} parent=0 // loop_footer
    %s13 = sadd.s32 1, %s9
  $region7: #{yolov11_backbone.5} parent=0 // loop_footer_branch
    %8 = sbr.rel target = $region3
  $region8: #{yolov11_backbone.5} parent=0 // loop_exit
    _

// kernel: yolov11_backbone.6
$region0: #{yolov11_backbone.6}
  #allocation0 [shape = 'u32[]', space=smem, size = 0x4, offset = 0x4, fixed_abs, tag = 'smem constant byte address 0x4 - core index']
  #allocation1 [shape = 'u32[72,128]{1,0:T(1,128)}', space=vmem, size = 0x9000, scoped, tag = 'internal scratch']
  %s0 = inlined_call_operand.vmem [shape: bf16[2,4,17,17,128], index: 0, kind: input, shape index: {}]
  %s1 = inlined_call_operand.vmem [shape: bf16[9,128,128], index: 1, kind: input, shape index: {}]
  %s2 = inlined_call_operand.vmem [shape: f32[1,128], index: 2, kind: input, shape index: {}]
  %s3 = inlined_call_operand.vmem [shape: bf16[2,16,16,128], index: 3, kind: output, shape index: {}]
  %s4 = sld [smem:[#allocation0]]
  $region52: #{yolov11_backbone.6} parent=0
    _
  %s6 = ssub.s32 1, %s4
  %s7 = scalar_select 0, %s6, %s4
  loop: start=0, step=1, limit=4
  $region2: #{yolov11_backbone.6} parent=0 // loop_pre_header
    _
  $region3: #{yolov11_backbone.6} parent=0 // loop_header
    %s9 = sphi 0, %s13
    %p10 = scmp.ge.s32.totalorder %s9, 4
    %s19 = sphi 0, %s21
    %s22 = sphi 0, %s19
    %s23 = sphi 0, %s22
    %s39 = sphi 0, %s23
    %s43 = sphi 0, %s43
    %s45 = sphi 0, %s43
    %s46 = sphi 0, %s45
    %s60 = sphi 0, %s46
    %s64 = sphi 0, %s64
    %s66 = sphi 0, %s64
    %s67 = sphi 0, %s66
    %s81 = sphi 0, %s67
    %s87 = sphi 0, %s89
    %s90 = sphi 0, %s87
    %s91 = sphi 0, %s90
    %s107 = sphi 0, %s91
  $region4: #{yolov11_backbone.6} parent=0 // loop_header_branch
    %12 = sbr.rel (%p10) target = $region8
  $region5: #{yolov11_backbone.6} parent=0 // loop_body
    %s14 = ssub.s32 %s9, 1
    %s15 = ssub.s32 %s9, 2
    %s16 = sadd.s32 %s9, 1
    %s17 = ssub.s32 %s9, %s16
    %p18 = scmp.eq.s32.totalorder %s17, 0
    %s20 = sadd.s32 %s19, 1
    %s21 = scalar_select %p18, %s19, %s20
    %p24 = pneg %p18
    %p25 = scmp.eq.s32.totalorder %s9, 1
    %p26 = por %p24, %p25
    %p27 = scmp.ne.s32.totalorder %s19, %s22
    %p28 = scmp.eq.s32.totalorder %s9, 0
    %p29 = por %p27, %p28
    %p30 = scmp.ne.s32.totalorder %s19, %s22
    %p31 = scmp.eq.s32.totalorder %s14, 1
    %p32 = por %p30, %p31
    %p33 = scmp.ne.s32.totalorder %s22, %s23
    %p34 = scmp.eq.s32.totalorder %s14, 0
    %p35 = por %p33, %p34
    %p36 = scmp.ne.s32.totalorder %s22, %s23
    %p37 = scmp.eq.s32.totalorder %s15, 1
    %p38 = por %p36, %p37
    %p40 = scmp.ne.s32.totalorder %s23, %s39
    %p41 = scmp.eq.s32.totalorder %s15, 0
    %p42 = por %p40, %p41
    %s44 = sadd.s32 %s43, 1
    %p47 = scmp.eq.s32.totalorder %s9, 1
    %p48 = scmp.ne.s32.totalorder %s43, %s45
    %p49 = scmp.eq.s32.totalorder %s9, 0
    %p50 = por %p48, %p49
    %p51 = scmp.ne.s32.totalorder %s43, %s45
    %p52 = scmp.eq.s32.totalorder %s14, 1
    %p53 = por %p51, %p52
    %p54 = scmp.ne.s32.totalorder %s45, %s46
    %p55 = scmp.eq.s32.totalorder %s14, 0
    %p56 = por %p54, %p55
    %p57 = scmp.ne.s32.totalorder %s45, %s46
    %p58 = scmp.eq.s32.totalorder %s15, 1
    %p59 = por %p57, %p58
    %p61 = scmp.ne.s32.totalorder %s46, %s60
    %p62 = scmp.eq.s32.totalorder %s15, 0
    %p63 = por %p61, %p62
    %s65 = sadd.s32 %s64, 1
    %p68 = scmp.eq.s32.totalorder %s9, 1
    %p69 = scmp.ne.s32.totalorder %s64, %s66
    %p70 = scmp.eq.s32.totalorder %s9, 0
    %p71 = por %p69, %p70
    %p72 = scmp.ne.s32.totalorder %s64, %s66
    %p73 = scmp.eq.s32.totalorder %s14, 1
    %p74 = por %p72, %p73
    %p75 = scmp.ne.s32.totalorder %s66, %s67
    %p76 = scmp.eq.s32.totalorder %s14, 0
    %p77 = por %p75, %p76
    %p78 = scmp.ne.s32.totalorder %s66, %s67
    %p79 = scmp.eq.s32.totalorder %s15, 1
    %p80 = por %p78, %p79
    %p82 = scmp.ne.s32.totalorder %s67, %s81
    %p83 = scmp.eq.s32.totalorder %s15, 0
    %p84 = por %p82, %p83
    %s85 = ssub.s32 %s9, %s16
    %p86 = scmp.eq.s32.totalorder %s85, 0
    %s88 = sadd.s32 %s87, 1
    %s89 = scalar_select %p86, %s87, %s88
    %p92 = pneg %p86
    %p93 = scmp.eq.s32.totalorder %s9, 1
    %p94 = por %p92, %p93
    %p95 = scmp.ne.s32.totalorder %s87, %s90
    %p96 = scmp.eq.s32.totalorder %s9, 0
    %p97 = por %p95, %p96
    %p98 = scmp.ne.s32.totalorder %s87, %s90
    %p99 = scmp.eq.s32.totalorder %s14, 1
    %p100 = por %p98, %p99
    %p101 = scmp.ne.s32.totalorder %s90, %s91
    %p102 = scmp.eq.s32.totalorder %s14, 0
    %p103 = por %p101, %p102
    %p104 = scmp.ne.s32.totalorder %s90, %s91
    %p105 = scmp.eq.s32.totalorder %s15, 1
    %p106 = por %p104, %p105
    %p108 = scmp.ne.s32.totalorder %s91, %s107
    %p109 = scmp.eq.s32.totalorder %s15, 0
    %p110 = por %p108, %p109
    %p111 = scmp.le.s32.totalorder 1, %s9
    %p112 = scmp.lt.s32.totalorder %s9, 3
    %p113 = pnand %p111, %p112
    %p114 = pneg %p113
    // Predicated region
    $region9: #{yolov11_backbone.6} parent=5 // pred_check
      _
    $region10: #{yolov11_backbone.6} parent=5 // pred_check_branch
      %116 = sbr.rel (%p113) target = $region12
    $region11: #{yolov11_backbone.6} parent=5 // pred_region
      %s117 = ssub.s32 %s9, 1
      // Predicated region
      $region13: #{yolov11_backbone.6} parent=11 // pred_check
        %p118 = pneg %p56
      $region14: #{yolov11_backbone.6} parent=11 // pred_check_branch
        %120 = sbr.rel (%p118) target = $region16
      $region15: #{yolov11_backbone.6} parent=11 // pred_region
        _
      $region16: #{yolov11_backbone.6} parent=11 // pred_fallthru
        _
      // Predicated region
      $region17: #{yolov11_backbone.6} parent=11 // pred_check
        %p121 = pneg %p77
      $region18: #{yolov11_backbone.6} parent=11 // pred_check_branch
        %123 = sbr.rel (%p121) target = $region20
      $region19: #{yolov11_backbone.6} parent=11 // pred_region
        _
      $region20: #{yolov11_backbone.6} parent=11 // pred_fallthru
        _
    $region12: #{yolov11_backbone.6} parent=5 // pred_fallthru
      _
    %p124 = scmp.lt.s32.totalorder %s9, 2
    // Predicated region
    $region21: #{yolov11_backbone.6} parent=5 // pred_check
      %p125 = pneg %p124
    $region22: #{yolov11_backbone.6} parent=5 // pred_check_branch
      %127 = sbr.rel (%p125) target = $region24
    $region23: #{yolov11_backbone.6} parent=5 // pred_region
      // Predicated region
      $region25: #{yolov11_backbone.6} parent=23 // pred_check
        %p128 = pneg %p29
      $region26: #{yolov11_backbone.6} parent=23 // pred_check_branch
        %130 = sbr.rel (%p128) target = $region28
      $region27: #{yolov11_backbone.6} parent=23 // pred_region
        %p131 = scmp.lt.s32.totalorder %s9, 1
        %s132 = scalar_select %p131, %s9, 1
        %s133 = smul.addr %s132, 204
        %s134 = smul.addr %s133, 4
        %s135 = scalar_lea.vmem %s0, %s134
      $region28: #{yolov11_backbone.6} parent=23 // pred_fallthru
        _
    $region24: #{yolov11_backbone.6} parent=5 // pred_fallthru
      _
    %p136 = scmp.le.s32.totalorder 1, %s9
    %p137 = scmp.lt.s32.totalorder %s9, 3
    %p138 = pnand %p136, %p137
    %p139 = pneg %p138
    // Predicated region
    $region29: #{yolov11_backbone.6} parent=5 // pred_check
      _
    $region30: #{yolov11_backbone.6} parent=5 // pred_check_branch
      %141 = sbr.rel (%p138) target = $region32
    $region31: #{yolov11_backbone.6} parent=5 // pred_region
      %s142 = ssub.s32 %s9, 1
      %p143 = scmp.lt.s32.totalorder %s14, 1
      %s144 = scalar_select %p143, %s14, 1
      %s145 = smul.addr %s144, 204
      %s146 = smul.addr %s145, 4
      %s147 = scalar_lea.vmem %s0, %s146
      %p148 = pneg %p35
      %p149 = pneg %p32
      %p150 = pneg %p56
      %p151 = pneg %p53
      %p152 = pneg %p77
      %p153 = pneg %p74
      %p154 = pneg %p103
      %p155 = pneg %p100
      %p156 = scmp.lt.s32.totalorder %s14, 1
      %s157 = scalar_select %p156, %s14, 1
      %s158 = smul.addr %s157, 32
      %s159 = smul.addr %s158, 4
      %s160 = scalar_lea.vmem %s3, %s159
      %p161 = scmp.lt.s32.totalorder %s14, 1
      %s162 = scalar_select %p161, %s14, 1
      %s163 = smul.addr %s162, 204
      %s164 = smul.addr %s163, 4
      %s165 = scalar_lea.vmem %s0, %s164
      %p166 = scmp.lt.s32.totalorder %s14, 1
      %s167 = scalar_select %p166, %s14, 1
      %s168 = smul.addr %s167, 32
      %s169 = smul.addr %s168, 4
      %s170 = scalar_lea.vmem %s3, %s169
      %v171 = vld [vmem:[%s2] sm:$0x1]
      loop: start=0, step=1, limit=16
      $region33: #{yolov11_backbone.6} parent=31 // loop_pre_header
        _
      $region34: #{yolov11_backbone.6} parent=31 // loop_header
        %s173 = sphi 0, %s177
        %p174 = scmp.ge.s32.totalorder %s173, 16
      $region35: #{yolov11_backbone.6} parent=31 // loop_header_branch
        %176 = sbr.rel (%p174) target = $region39
      $region36: #{yolov11_backbone.6} parent=31 // loop_body
        %s178 = smul.u32 %s173, 3
        %s179 = smul.addr %s178, 4
        %s180 = scalar_lea.vmem %s165, %s179
        %v181 = vld [vmem:[%s180] sm:$0xf]
        %v182 = vld [vmem:[%s180 + $0x4] sm:$0xf]
        %v183 = vld [vmem:[%s1] sm:$0xf]
        %v184 = vld [vmem:[%s1 + $0x4] sm:$0xf]
        %v185 = vld [vmem:[%s1 + $0x8] sm:$0xf]
        %v186 = vld [vmem:[%s1 + $0xc] sm:$0xf]
        %v187 = vld [vmem:[%s1 + $0x10] sm:$0xf]
        %v188 = vld [vmem:[%s1 + $0x14] sm:$0xf]
        %v189 = vld [vmem:[%s1 + $0x18] sm:$0xf]
        %v190 = vld [vmem:[%s1 + $0x1c] sm:$0xf]
        %v191 = vld [vmem:[%s1 + $0x20] sm:$0xf]
        %v192 = vld [vmem:[%s1 + $0x24] sm:$0xf]
        %v193 = vld [vmem:[%s1 + $0x28] sm:$0xf]
        %v194 = vld [vmem:[%s1 + $0x2c] sm:$0xf]
        %v195 = vld [vmem:[%s1 + $0x30] sm:$0xf]
        %v196 = vld [vmem:[%s1 + $0x34] sm:$0xf]
        %v197 = vld [vmem:[%s1 + $0x38] sm:$0xf]
        %v198 = vld [vmem:[%s1 + $0x3c] sm:$0xf]
        %s199 = sadd.s32 %s178, 51
        %s200 = smul.addr %s199, 4
        %s201 = scalar_lea.vmem %s165, %s200
        %v202 = vld [vmem:[%s201] sm:$0xf]
        %v203 = vld [vmem:[%s201 + $0x4] sm:$0xf]
        %s204 = scalar_lea.vmem %s1, 64
        %v205 = vld [vmem:[%s204] sm:$0xf]
        %v206 = vld [vmem:[%s204 + $0x4] sm:$0xf]
        %v207 = vld [vmem:[%s204 + $0x8] sm:$0xf]
        %v208 = vld [vmem:[%s204 + $0xc] sm:$0xf]
        %v209 = vld [vmem:[%s204 + $0x10] sm:$0xf]
        %v210 = vld [vmem:[%s204 + $0x14] sm:$0xf]
        %v211 = vld [vmem:[%s204 + $0x18] sm:$0xf]
        %v212 = vld [vmem:[%s204 + $0x1c] sm:$0xf]
        %v213 = vld [vmem:[%s204 + $0x20] sm:$0xf]
        %v214 = vld [vmem:[%s204 + $0x24] sm:$0xf]
        %v215 = vld [vmem:[%s204 + $0x28] sm:$0xf]
        %v216 = vld [vmem:[%s204 + $0x2c] sm:$0xf]
        %v217 = vld [vmem:[%s204 + $0x30] sm:$0xf]
        %v218 = vld [vmem:[%s204 + $0x34] sm:$0xf]
        %v219 = vld [vmem:[%s204 + $0x38] sm:$0xf]
        %v220 = vld [vmem:[%s204 + $0x3c] sm:$0xf]
        %v223 = vunpack.c.l.b16 %v202
        %v224 = vunpack.c.l.b16 %v203
        %v225 = vpack.c.b16 %v224, %v223
        %v243 = vunpack.c.l.b16 %v205
        %v244 = vunpack.c.l.b16 %v206
        %v245 = vunpack.c.l.b16 %v207
        %v246 = vunpack.c.l.b16 %v208
        %v247 = vunpack.c.l.b16 %v209
        %v248 = vunpack.c.l.b16 %v210
        %v249 = vunpack.c.l.b16 %v211
        %v250 = vunpack.c.l.b16 %v212
        %v251 = vunpack.c.l.b16 %v213
        %v252 = vunpack.c.l.b16 %v214
        %v253 = vunpack.c.l.b16 %v215
        %v254 = vunpack.c.l.b16 %v216
        %v255 = vunpack.c.l.b16 %v217
        %v256 = vunpack.c.l.b16 %v218
        %v257 = vunpack.c.l.b16 %v219
        %v258 = vunpack.c.l.b16 %v220
        %v259 = vpack.c.b16 %v244, %v243
        %v260 = vpack.c.b16 %v246, %v245
        %v261 = vpack.c.b16 %v248, %v247
        %v262 = vpack.c.b16 %v250, %v249
        %v263 = vpack.c.b16 %v252, %v251
        %v264 = vpack.c.b16 %v254, %v253
        %v265 = vpack.c.b16 %v256, %v255
        %v266 = vpack.c.b16 %v258, %v257
        %275 = vmatpush.bf16.msra.mxu0 %v266
        %276 = vmatpush.bf16.msra.mxu0 %v265
        %277 = vmatpush.bf16.msra.mxu0 %v264
        %278 = vmatpush.bf16.msra.mxu0 %v263
        %279 = vmatpush.bf16.msra.mxu0 %v262
        %280 = vmatpush.bf16.msra.mxu0 %v261
        %281 = vmatpush.bf16.msra.mxu0 %v260
        %282 = vmatpush.bf16.msra.mxu0 %v259
        %283 = vmatmul.bf16.gmra.mxu0 %v225
        %v284 = vpop.f32.mrf.mxu0
        %v285 = vadd.f32 0.0, %v284
        %v286 = vpop.f32.mrf.mxu0
        %v287 = vadd.f32 0.0, %v286
        %288 = vdwg.mxu0
        %v291 = vunpack.c.l.b16 %v181
        %v292 = vunpack.c.l.b16 %v182
        %v293 = vpack.c.b16 %v292, %v291
        %v311 = vunpack.c.l.b16 %v183
        %v312 = vunpack.c.l.b16 %v184
        %v313 = vunpack.c.l.b16 %v185
        %v314 = vunpack.c.l.b16 %v186
        %v315 = vunpack.c.l.b16 %v187
        %v316 = vunpack.c.l.b16 %v188
        %v317 = vunpack.c.l.b16 %v189
        %v318 = vunpack.c.l.b16 %v190
        %v319 = vunpack.c.l.b16 %v191
        %v320 = vunpack.c.l.b16 %v192
        %v321 = vunpack.c.l.b16 %v193
        %v322 = vunpack.c.l.b16 %v194
        %v323 = vunpack.c.l.b16 %v195
        %v324 = vunpack.c.l.b16 %v196
        %v325 = vunpack.c.l.b16 %v197
        %v326 = vunpack.c.l.b16 %v198
        %v327 = vpack.c.b16 %v312, %v311
        %v328 = vpack.c.b16 %v314, %v313
        %v329 = vpack.c.b16 %v316, %v315
        %v330 = vpack.c.b16 %v318, %v317
        %v331 = vpack.c.b16 %v320, %v319
        %v332 = vpack.c.b16 %v322, %v321
        %v333 = vpack.c.b16 %v324, %v323
        %v334 = vpack.c.b16 %v326, %v325
        %343 = vmatpush.bf16.msra.mxu0 %v334
        %344 = vmatpush.bf16.msra.mxu0 %v333
        %345 = vmatpush.bf16.msra.mxu0 %v332
        %346 = vmatpush.bf16.msra.mxu0 %v331
        %347 = vmatpush.bf16.msra.mxu0 %v330
        %348 = vmatpush.bf16.msra.mxu0 %v329
        %349 = vmatpush.bf16.msra.mxu0 %v328
        %350 = vmatpush.bf16.msra.mxu0 %v327
        %351 = vmatmul.bf16.gmra.mxu0 %v293
        %v352 = vpop.f32.mrf.mxu0
        %v353 = vadd.f32 %v285, %v352
        %v354 = vpop.f32.mrf.mxu0
        %v355 = vadd.f32 %v287, %v354
        %356 = vdwg.mxu0
        %v357 = vld [vmem:[%s180] sm:$0xf]
        %v358 = vld [vmem:[%s180 + $0x4] sm:$0xf]
        %v359 = vld [vmem:[%s180 + $0x8] sm:$0x1]
        %s360 = scalar_lea.vmem %s1, 128
        %v361 = vld [vmem:[%s360] sm:$0xf]
        %v362 = vld [vmem:[%s360 + $0x4] sm:$0xf]
        %v363 = vld [vmem:[%s360 + $0x8] sm:$0xf]
        %v364 = vld [vmem:[%s360 + $0xc] sm:$0xf]
        %v365 = vld [vmem:[%s360 + $0x10] sm:$0xf]
        %v366 = vld [vmem:[%s360 + $0x14] sm:$0xf]
        %v367 = vld [vmem:[%s360 + $0x18] sm:$0xf]
        %v368 = vld [vmem:[%s360 + $0x1c] sm:$0xf]
        %v369 = vld [vmem:[%s360 + $0x20] sm:$0xf]
        %v370 = vld [vmem:[%s360 + $0x24] sm:$0xf]
        %v371 = vld [vmem:[%s360 + $0x28] sm:$0xf]
        %v372 = vld [vmem:[%s360 + $0x2c] sm:$0xf]
        %v373 = vld [vmem:[%s360 + $0x30] sm:$0xf]
        %v374 = vld [vmem:[%s360 + $0x34] sm:$0xf]
        %v375 = vld [vmem:[%s360 + $0x38] sm:$0xf]
        %v376 = vld [vmem:[%s360 + $0x3c] sm:$0xf]
        %v380 = vunpack.c.l.b16 %v357
        %v381 = vunpack.c.l.b16 %v358
        %v382 = vunpack.c.l.b16 %v359
        %v383 = vpack.c.b16 %v381, %v380
        %v384 = vpack.c.b16 %v382, %v382
        %vm385 = vsmask.f32 7424
        %v387 = vshrl.u32 %v383, 16
        %v389 = vshll.u32 %v383, 16
        %v391 = vrot.slane %v389, 1
        %v392 = vor.u32 %v387, %v391
        %v394 = vshll.u32 %v384, 16
        %v396 = vrot.slane %v394, 1
        %v397 = vsel %vm385, %v392, %v396
        %v415 = vunpack.c.l.b16 %v361
        %v416 = vunpack.c.l.b16 %v362
        %v417 = vunpack.c.l.b16 %v363
        %v418 = vunpack.c.l.b16 %v364
        %v419 = vunpack.c.l.b16 %v365
        %v420 = vunpack.c.l.b16 %v366
        %v421 = vunpack.c.l.b16 %v367
        %v422 = vunpack.c.l.b16 %v368
        %v423 = vunpack.c.l.b16 %v369
        %v424 = vunpack.c.l.b16 %v370
        %v425 = vunpack.c.l.b16 %v371
        %v426 = vunpack.c.l.b16 %v372
        %v427 = vunpack.c.l.b16 %v373
        %v428 = vunpack.c.l.b16 %v374
        %v429 = vunpack.c.l.b16 %v375
        %v430 = vunpack.c.l.b16 %v376
        %v431 = vpack.c.b16 %v416, %v415
        %v432 = vpack.c.b16 %v418, %v417
        %v433 = vpack.c.b16 %v420, %v419
        %v434 = vpack.c.b16 %v422, %v421
        %v435 = vpack.c.b16 %v424, %v423
        %v436 = vpack.c.b16 %v426, %v425
        %v437 = vpack.c.b16 %v428, %v427
        %v438 = vpack.c.b16 %v430, %v429
        %447 = vmatpush.bf16.msra.mxu0 %v438
        %448 = vmatpush.bf16.msra.mxu0 %v437
        %449 = vmatpush.bf16.msra.mxu0 %v436
        %450 = vmatpush.bf16.msra.mxu0 %v435
        %451 = vmatpush.bf16.msra.mxu0 %v434
        %452 = vmatpush.bf16.msra.mxu0 %v433
        %453 = vmatpush.bf16.msra.mxu0 %v432
        %454 = vmatpush.bf16.msra.mxu0 %v431
        %455 = vmatmul.bf16.gmra.mxu0 %v397
        %v456 = vpop.f32.mrf.mxu0
        %v457 = vadd.f32 0.0, %v456
        %v458 = vpop.f32.mrf.mxu0
        %v459 = vadd.f32 0.0, %v458
        %460 = vdwg.mxu0
        %v461 = vadd.f32 %v353, %v457
        %v462 = vadd.f32 %v355, %v459
        %s463 = sadd.s32 %s178, 102
        %s464 = smul.addr %s463, 4
        %s465 = scalar_lea.vmem %s165, %s464
        %v466 = vld [vmem:[%s465] sm:$0xf]
        %v467 = vld [vmem:[%s465 + $0x4] sm:$0xf]
        %s468 = scalar_lea.vmem %s1, 192
        %v469 = vld [vmem:[%s468] sm:$0xf]
        %v470 = vld [vmem:[%s468 + $0x4] sm:$0xf]
        %v471 = vld [vmem:[%s468 + $0x8] sm:$0xf]
        %v472 = vld [vmem:[%s468 + $0xc] sm:$0xf]
        %v473 = vld [vmem:[%s468 + $0x10] sm:$0xf]
        %v474 = vld [vmem:[%s468 + $0x14] sm:$0xf]
        %v475 = vld [vmem:[%s468 + $0x18] sm:$0xf]
        %v476 = vld [vmem:[%s468 + $0x1c] sm:$0xf]
        %v477 = vld [vmem:[%s468 + $0x20] sm:$0xf]
        %v478 = vld [vmem:[%s468 + $0x24] sm:$0xf]
        %v479 = vld [vmem:[%s468 + $0x28] sm:$0xf]
        %v480 = vld [vmem:[%s468 + $0x2c] sm:$0xf]
        %v481 = vld [vmem:[%s468 + $0x30] sm:$0xf]
        %v482 = vld [vmem:[%s468 + $0x34] sm:$0xf]
        %v483 = vld [vmem:[%s468 + $0x38] sm:$0xf]
        %v484 = vld [vmem:[%s468 + $0x3c] sm:$0xf]
        %v487 = vunpack.c.l.b16 %v466
        %v488 = vunpack.c.l.b16 %v467
        %v489 = vpack.c.b16 %v488, %v487
        %v507 = vunpack.c.l.b16 %v469
        %v508 = vunpack.c.l.b16 %v470
        %v509 = vunpack.c.l.b16 %v471
        %v510 = vunpack.c.l.b16 %v472
        %v511 = vunpack.c.l.b16 %v473
        %v512 = vunpack.c.l.b16 %v474
        %v513 = vunpack.c.l.b16 %v475
        %v514 = vunpack.c.l.b16 %v476
        %v515 = vunpack.c.l.b16 %v477
        %v516 = vunpack.c.l.b16 %v478
        %v517 = vunpack.c.l.b16 %v479
        %v518 = vunpack.c.l.b16 %v480
        %v519 = vunpack.c.l.b16 %v481
        %v520 = vunpack.c.l.b16 %v482
        %v521 = vunpack.c.l.b16 %v483
        %v522 = vunpack.c.l.b16 %v484
        %v523 = vpack.c.b16 %v508, %v507
        %v524 = vpack.c.b16 %v510, %v509
        %v525 = vpack.c.b16 %v512, %v511
        %v526 = vpack.c.b16 %v514, %v513
        %v527 = vpack.c.b16 %v516, %v515
        %v528 = vpack.c.b16 %v518, %v517
        %v529 = vpack.c.b16 %v520, %v519
        %v530 = vpack.c.b16 %v522, %v521
        %539 = vmatpush.bf16.msra.mxu0 %v530
        %540 = vmatpush.bf16.msra.mxu0 %v529
        %541 = vmatpush.bf16.msra.mxu0 %v528
        %542 = vmatpush.bf16.msra.mxu0 %v527
        %543 = vmatpush.bf16.msra.mxu0 %v526
        %544 = vmatpush.bf16.msra.mxu0 %v525
        %545 = vmatpush.bf16.msra.mxu0 %v524
        %546 = vmatpush.bf16.msra.mxu0 %v523
        %547 = vmatmul.bf16.gmra.mxu0 %v489
        %v548 = vpop.f32.mrf.mxu0
        %v549 = vadd.f32 0.0, %v548
        %v550 = vpop.f32.mrf.mxu0
        %v551 = vadd.f32 0.0, %v550
        %552 = vdwg.mxu0
        %v553 = vadd.f32 %v461, %v549
        %v554 = vadd.f32 %v462, %v551
        %s555 = sadd.s32 %s178, 153
        %s556 = smul.addr %s555, 4
        %s557 = scalar_lea.vmem %s165, %s556
        %v558 = vld [vmem:[%s557] sm:$0xf]
        %v559 = vld [vmem:[%s557 + $0x4] sm:$0xf]
        %s560 = scalar_lea.vmem %s1, 256
        %v561 = vld [vmem:[%s560] sm:$0xf]
        %v562 = vld [vmem:[%s560 + $0x4] sm:$0xf]
        %v563 = vld [vmem:[%s560 + $0x8] sm:$0xf]
        %v564 = vld [vmem:[%s560 + $0xc] sm:$0xf]
        %v565 = vld [vmem:[%s560 + $0x10] sm:$0xf]
        %v566 = vld [vmem:[%s560 + $0x14] sm:$0xf]
        %v567 = vld [vmem:[%s560 + $0x18] sm:$0xf]
        %v568 = vld [vmem:[%s560 + $0x1c] sm:$0xf]
        %v569 = vld [vmem:[%s560 + $0x20] sm:$0xf]
        %v570 = vld [vmem:[%s560 + $0x24] sm:$0xf]
        %v571 = vld [vmem:[%s560 + $0x28] sm:$0xf]
        %v572 = vld [vmem:[%s560 + $0x2c] sm:$0xf]
        %v573 = vld [vmem:[%s560 + $0x30] sm:$0xf]
        %v574 = vld [vmem:[%s560 + $0x34] sm:$0xf]
        %v575 = vld [vmem:[%s560 + $0x38] sm:$0xf]
        %v576 = vld [vmem:[%s560 + $0x3c] sm:$0xf]
        %v579 = vunpack.c.l.b16 %v558
        %v580 = vunpack.c.l.b16 %v559
        %v581 = vpack.c.b16 %v580, %v579
        %v599 = vunpack.c.l.b16 %v561
        %v600 = vunpack.c.l.b16 %v562
        %v601 = vunpack.c.l.b16 %v563
        %v602 = vunpack.c.l.b16 %v564
        %v603 = vunpack.c.l.b16 %v565
        %v604 = vunpack.c.l.b16 %v566
        %v605 = vunpack.c.l.b16 %v567
        %v606 = vunpack.c.l.b16 %v568
        %v607 = vunpack.c.l.b16 %v569
        %v608 = vunpack.c.l.b16 %v570
        %v609 = vunpack.c.l.b16 %v571
        %v610 = vunpack.c.l.b16 %v572
        %v611 = vunpack.c.l.b16 %v573
        %v612 = vunpack.c.l.b16 %v574
        %v613 = vunpack.c.l.b16 %v575
        %v614 = vunpack.c.l.b16 %v576
        %v615 = vpack.c.b16 %v600, %v599
        %v616 = vpack.c.b16 %v602, %v601
        %v617 = vpack.c.b16 %v604, %v603
        %v618 = vpack.c.b16 %v606, %v605
        %v619 = vpack.c.b16 %v608, %v607
        %v620 = vpack.c.b16 %v610, %v609
        %v621 = vpack.c.b16 %v612, %v611
        %v622 = vpack.c.b16 %v614, %v613
        %631 = vmatpush.bf16.msra.mxu0 %v622
        %632 = vmatpush.bf16.msra.mxu0 %v621
        %633 = vmatpush.bf16.msra.mxu0 %v620
        %634 = vmatpush.bf16.msra.mxu0 %v619
        %635 = vmatpush.bf16.msra.mxu0 %v618
        %636 = vmatpush.bf16.msra.mxu0 %v617
        %637 = vmatpush.bf16.msra.mxu0 %v616
        %638 = vmatpush.bf16.msra.mxu0 %v615
        %639 = vmatmul.bf16.gmra.mxu0 %v581
        %v640 = vpop.f32.mrf.mxu0
        %v641 = vadd.f32 0.0, %v640
        %v642 = vpop.f32.mrf.mxu0
        %v643 = vadd.f32 0.0, %v642
        %644 = vdwg.mxu0
        %v645 = vadd.f32 %v553, %v641
        %v646 = vadd.f32 %v554, %v643
        %v647 = vld [vmem:[%s465] sm:$0xf]
        %v648 = vld [vmem:[%s465 + $0x4] sm:$0xf]
        %v649 = vld [vmem:[%s465 + $0x8] sm:$0x1]
        %s650 = scalar_lea.vmem %s1, 320
        %v651 = vld [vmem:[%s650] sm:$0xf]
        %v652 = vld [vmem:[%s650 + $0x4] sm:$0xf]
        %v653 = vld [vmem:[%s650 + $0x8] sm:$0xf]
        %v654 = vld [vmem:[%s650 + $0xc] sm:$0xf]
        %v655 = vld [vmem:[%s650 + $0x10] sm:$0xf]
        %v656 = vld [vmem:[%s650 + $0x14] sm:$0xf]
        %v657 = vld [vmem:[%s650 + $0x18] sm:$0xf]
        %v658 = vld [vmem:[%s650 + $0x1c] sm:$0xf]
        %v659 = vld [vmem:[%s650 + $0x20] sm:$0xf]
        %v660 = vld [vmem:[%s650 + $0x24] sm:$0xf]
        %v661 = vld [vmem:[%s650 + $0x28] sm:$0xf]
        %v662 = vld [vmem:[%s650 + $0x2c] sm:$0xf]
        %v663 = vld [vmem:[%s650 + $0x30] sm:$0xf]
        %v664 = vld [vmem:[%s650 + $0x34] sm:$0xf]
        %v665 = vld [vmem:[%s650 + $0x38] sm:$0xf]
        %v666 = vld [vmem:[%s650 + $0x3c] sm:$0xf]
        %v670 = vunpack.c.l.b16 %v647
        %v671 = vunpack.c.l.b16 %v648
        %v672 = vunpack.c.l.b16 %v649
        %v673 = vpack.c.b16 %v671, %v670
        %v674 = vpack.c.b16 %v672, %v672
        %v676 = vshrl.u32 %v673, 16
        %v678 = vshll.u32 %v673, 16
        %v680 = vrot.slane %v678, 1
        %v681 = vor.u32 %v676, %v680
        %v683 = vshll.u32 %v674, 16
        %v685 = vrot.slane %v683, 1
        %v686 = vsel %vm385, %v681, %v685
        %v704 = vunpack.c.l.b16 %v651
        %v705 = vunpack.c.l.b16 %v652
        %v706 = vunpack.c.l.b16 %v653
        %v707 = vunpack.c.l.b16 %v654
        %v708 = vunpack.c.l.b16 %v655
        %v709 = vunpack.c.l.b16 %v656
        %v710 = vunpack.c.l.b16 %v657
        %v711 = vunpack.c.l.b16 %v658
        %v712 = vunpack.c.l.b16 %v659
        %v713 = vunpack.c.l.b16 %v660
        %v714 = vunpack.c.l.b16 %v661
        %v715 = vunpack.c.l.b16 %v662
        %v716 = vunpack.c.l.b16 %v663
        %v717 = vunpack.c.l.b16 %v664
        %v718 = vunpack.c.l.b16 %v665
        %v719 = vunpack.c.l.b16 %v666
        %v720 = vpack.c.b16 %v705, %v704
        %v721 = vpack.c.b16 %v707, %v706
        %v722 = vpack.c.b16 %v709, %v708
        %v723 = vpack.c.b16 %v711, %v710
        %v724 = vpack.c.b16 %v713, %v712
        %v725 = vpack.c.b16 %v715, %v714
        %v726 = vpack.c.b16 %v717, %v716
        %v727 = vpack.c.b16 %v719, %v718
        %736 = vmatpush.bf16.msra.mxu0 %v727
        %737 = vmatpush.bf16.msra.mxu0 %v726
        %738 = vmatpush.bf16.msra.mxu0 %v725
        %739 = vmatpush.bf16.msra.mxu0 %v724
        %740 = vmatpush.bf16.msra.mxu0 %v723
        %741 = vmatpush.bf16.msra.mxu0 %v722
        %742 = vmatpush.bf16.msra.mxu0 %v721
        %743 = vmatpush.bf16.msra.mxu0 %v720
        %744 = vmatmul.bf16.gmra.mxu0 %v686
        %v745 = vpop.f32.mrf.mxu0
        %v746 = vadd.f32 0.0, %v745
        %v747 = vpop.f32.mrf.mxu0
        %v748 = vadd.f32 0.0, %v747
        %749 = vdwg.mxu0
        %v750 = vadd.f32 %v645, %v746
        %v751 = vadd.f32 %v646, %v748
        %s752 = sadd.s32 %s173, 1
        %s753 = smul.u32 %s752, 3
        %s754 = smul.addr %s753, 4
        %s755 = scalar_lea.vmem %s165, %s754
        %v756 = vld [vmem:[%s755] sm:$0xf]
        %v757 = vld [vmem:[%s755 + $0x4] sm:$0xf]
        %s758 = scalar_lea.vmem %s1, 384
        %v759 = vld [vmem:[%s758] sm:$0xf]
        %v760 = vld [vmem:[%s758 + $0x4] sm:$0xf]
        %v761 = vld [vmem:[%s758 + $0x8] sm:$0xf]
        %v762 = vld [vmem:[%s758 + $0xc] sm:$0xf]
        %v763 = vld [vmem:[%s758 + $0x10] sm:$0xf]
        %v764 = vld [vmem:[%s758 + $0x14] sm:$0xf]
        %v765 = vld [vmem:[%s758 + $0x18] sm:$0xf]
        %v766 = vld [vmem:[%s758 + $0x1c] sm:$0xf]
        %v767 = vld [vmem:[%s758 + $0x20] sm:$0xf]
        %v768 = vld [vmem:[%s758 + $0x24] sm:$0xf]
        %v769 = vld [vmem:[%s758 + $0x28] sm:$0xf]
        %v770 = vld [vmem:[%s758 + $0x2c] sm:$0xf]
        %v771 = vld [vmem:[%s758 + $0x30] sm:$0xf]
        %v772 = vld [vmem:[%s758 + $0x34] sm:$0xf]
        %v773 = vld [vmem:[%s758 + $0x38] sm:$0xf]
        %v774 = vld [vmem:[%s758 + $0x3c] sm:$0xf]
        %v777 = vunpack.c.l.b16 %v756
        %v778 = vunpack.c.l.b16 %v757
        %v779 = vpack.c.b16 %v778, %v777
        %v797 = vunpack.c.l.b16 %v759
        %v798 = vunpack.c.l.b16 %v760
        %v799 = vunpack.c.l.b16 %v761
        %v800 = vunpack.c.l.b16 %v762
        %v801 = vunpack.c.l.b16 %v763
        %v802 = vunpack.c.l.b16 %v764
        %v803 = vunpack.c.l.b16 %v765
        %v804 = vunpack.c.l.b16 %v766
        %v805 = vunpack.c.l.b16 %v767
        %v806 = vunpack.c.l.b16 %v768
        %v807 = vunpack.c.l.b16 %v769
        %v808 = vunpack.c.l.b16 %v770
        %v809 = vunpack.c.l.b16 %v771
        %v810 = vunpack.c.l.b16 %v772
        %v811 = vunpack.c.l.b16 %v773
        %v812 = vunpack.c.l.b16 %v774
        %v813 = vpack.c.b16 %v798, %v797
        %v814 = vpack.c.b16 %v800, %v799
        %v815 = vpack.c.b16 %v802, %v801
        %v816 = vpack.c.b16 %v804, %v803
        %v817 = vpack.c.b16 %v806, %v805
        %v818 = vpack.c.b16 %v808, %v807
        %v819 = vpack.c.b16 %v810, %v809
        %v820 = vpack.c.b16 %v812, %v811
        %829 = vmatpush.bf16.msra.mxu0 %v820
        %830 = vmatpush.bf16.msra.mxu0 %v819
        %831 = vmatpush.bf16.msra.mxu0 %v818
        %832 = vmatpush.bf16.msra.mxu0 %v817
        %833 = vmatpush.bf16.msra.mxu0 %v816
        %834 = vmatpush.bf16.msra.mxu0 %v815
        %835 = vmatpush.bf16.msra.mxu0 %v814
        %836 = vmatpush.bf16.msra.mxu0 %v813
        %837 = vmatmul.bf16.gmra.mxu0 %v779
        %v838 = vpop.f32.mrf.mxu0
        %v839 = vadd.f32 0.0, %v838
        %v840 = vpop.f32.mrf.mxu0
        %v841 = vadd.f32 0.0, %v840
        %842 = vdwg.mxu0
        %v843 = vadd.f32 %v750, %v839
        %v844 = vadd.f32 %v751, %v841
        %s845 = sadd.s32 %s753, 51
        %s846 = smul.addr %s845, 4
        %s847 = scalar_lea.vmem %s165, %s846
        %v848 = vld [vmem:[%s847] sm:$0xf]
        %v849 = vld [vmem:[%s847 + $0x4] sm:$0xf]
        %s850 = scalar_lea.vmem %s1, 448
        %v851 = vld [vmem:[%s850] sm:$0xf]
        %v852 = vld [vmem:[%s850 + $0x4] sm:$0xf]
        %v853 = vld [vmem:[%s850 + $0x8] sm:$0xf]
        %v854 = vld [vmem:[%s850 + $0xc] sm:$0xf]
        %v855 = vld [vmem:[%s850 + $0x10] sm:$0xf]
        %v856 = vld [vmem:[%s850 + $0x14] sm:$0xf]
        %v857 = vld [vmem:[%s850 + $0x18] sm:$0xf]
        %v858 = vld [vmem:[%s850 + $0x1c] sm:$0xf]
        %v859 = vld [vmem:[%s850 + $0x20] sm:$0xf]
        %v860 = vld [vmem:[%s850 + $0x24] sm:$0xf]
        %v861 = vld [vmem:[%s850 + $0x28] sm:$0xf]
        %v862 = vld [vmem:[%s850 + $0x2c] sm:$0xf]
        %v863 = vld [vmem:[%s850 + $0x30] sm:$0xf]
        %v864 = vld [vmem:[%s850 + $0x34] sm:$0xf]
        %v865 = vld [vmem:[%s850 + $0x38] sm:$0xf]
        %v866 = vld [vmem:[%s850 + $0x3c] sm:$0xf]
        %v869 = vunpack.c.l.b16 %v848
        %v870 = vunpack.c.l.b16 %v849
        %v871 = vpack.c.b16 %v870, %v869
        %v889 = vunpack.c.l.b16 %v851
        %v890 = vunpack.c.l.b16 %v852
        %v891 = vunpack.c.l.b16 %v853
        %v892 = vunpack.c.l.b16 %v854
        %v893 = vunpack.c.l.b16 %v855
        %v894 = vunpack.c.l.b16 %v856
        %v895 = vunpack.c.l.b16 %v857
        %v896 = vunpack.c.l.b16 %v858
        %v897 = vunpack.c.l.b16 %v859
        %v898 = vunpack.c.l.b16 %v860
        %v899 = vunpack.c.l.b16 %v861
        %v900 = vunpack.c.l.b16 %v862
        %v901 = vunpack.c.l.b16 %v863
        %v902 = vunpack.c.l.b16 %v864
        %v903 = vunpack.c.l.b16 %v865
        %v904 = vunpack.c.l.b16 %v866
        %v905 = vpack.c.b16 %v890, %v889
        %v906 = vpack.c.b16 %v892, %v891
        %v907 = vpack.c.b16 %v894, %v893
        %v908 = vpack.c.b16 %v896, %v895
        %v909 = vpack.c.b16 %v898, %v897
        %v910 = vpack.c.b16 %v900, %v899
        %v911 = vpack.c.b16 %v902, %v901
        %v912 = vpack.c.b16 %v904, %v903
        %921 = vmatpush.bf16.msra.mxu0 %v912
        %922 = vmatpush.bf16.msra.mxu0 %v911
        %923 = vmatpush.bf16.msra.mxu0 %v910
        %924 = vmatpush.bf16.msra.mxu0 %v909
        %925 = vmatpush.bf16.msra.mxu0 %v908
        %926 = vmatpush.bf16.msra.mxu0 %v907
        %927 = vmatpush.bf16.msra.mxu0 %v906
        %928 = vmatpush.bf16.msra.mxu0 %v905
        %929 = vmatmul.bf16.gmra.mxu0 %v871
        %v930 = vpop.f32.mrf.mxu0
        %v931 = vadd.f32 0.0, %v930
        %v932 = vpop.f32.mrf.mxu0
        %v933 = vadd.f32 0.0, %v932
        %934 = vdwg.mxu0
        %v935 = vadd.f32 %v843, %v931
        %v936 = vadd.f32 %v844, %v933
        %v937 = vld [vmem:[%s755] sm:$0xf]
        %v938 = vld [vmem:[%s755 + $0x4] sm:$0xf]
        %v939 = vld [vmem:[%s755 + $0x8] sm:$0x1]
        %s940 = scalar_lea.vmem %s1, 512
        %v941 = vld [vmem:[%s940] sm:$0xf]
        %v942 = vld [vmem:[%s940 + $0x4] sm:$0xf]
        %v943 = vld [vmem:[%s940 + $0x8] sm:$0xf]
        %v944 = vld [vmem:[%s940 + $0xc] sm:$0xf]
        %v945 = vld [vmem:[%s940 + $0x10] sm:$0xf]
        %v946 = vld [vmem:[%s940 + $0x14] sm:$0xf]
        %v947 = vld [vmem:[%s940 + $0x18] sm:$0xf]
        %v948 = vld [vmem:[%s940 + $0x1c] sm:$0xf]
        %v949 = vld [vmem:[%s940 + $0x20] sm:$0xf]
        %v950 = vld [vmem:[%s940 + $0x24] sm:$0xf]
        %v951 = vld [vmem:[%s940 + $0x28] sm:$0xf]
        %v952 = vld [vmem:[%s940 + $0x2c] sm:$0xf]
        %v953 = vld [vmem:[%s940 + $0x30] sm:$0xf]
        %v954 = vld [vmem:[%s940 + $0x34] sm:$0xf]
        %v955 = vld [vmem:[%s940 + $0x38] sm:$0xf]
        %v956 = vld [vmem:[%s940 + $0x3c] sm:$0xf]
        %v960 = vunpack.c.l.b16 %v937
        %v961 = vunpack.c.l.b16 %v938
        %v962 = vunpack.c.l.b16 %v939
        %v963 = vpack.c.b16 %v961, %v960
        %v964 = vpack.c.b16 %v962, %v962
        %v966 = vshrl.u32 %v963, 16
        %v968 = vshll.u32 %v963, 16
        %v970 = vrot.slane %v968, 1
        %v971 = vor.u32 %v966, %v970
        %v973 = vshll.u32 %v964, 16
        %v975 = vrot.slane %v973, 1
        %v976 = vsel %vm385, %v971, %v975
        %v994 = vunpack.c.l.b16 %v941
        %v995 = vunpack.c.l.b16 %v942
        %v996 = vunpack.c.l.b16 %v943
        %v997 = vunpack.c.l.b16 %v944
        %v998 = vunpack.c.l.b16 %v945
        %v999 = vunpack.c.l.b16 %v946
        %v1000 = vunpack.c.l.b16 %v947
        %v1001 = vunpack.c.l.b16 %v948
        %v1002 = vunpack.c.l.b16 %v949
        %v1003 = vunpack.c.l.b16 %v950
        %v1004 = vunpack.c.l.b16 %v951
        %v1005 = vunpack.c.l.b16 %v952
        %v1006 = vunpack.c.l.b16 %v953
        %v1007 = vunpack.c.l.b16 %v954
        %v1008 = vunpack.c.l.b16 %v955
        %v1009 = vunpack.c.l.b16 %v956
        %v1010 = vpack.c.b16 %v995, %v994
        %v1011 = vpack.c.b16 %v997, %v996
        %v1012 = vpack.c.b16 %v999, %v998
        %v1013 = vpack.c.b16 %v1001, %v1000
        %v1014 = vpack.c.b16 %v1003, %v1002
        %v1015 = vpack.c.b16 %v1005, %v1004
        %v1016 = vpack.c.b16 %v1007, %v1006
        %v1017 = vpack.c.b16 %v1009, %v1008
        %1026 = vmatpush.bf16.msra.mxu0 %v1017
        %1027 = vmatpush.bf16.msra.mxu0 %v1016
        %1028 = vmatpush.bf16.msra.mxu0 %v1015
        %1029 = vmatpush.bf16.msra.mxu0 %v1014
        %1030 = vmatpush.bf16.msra.mxu0 %v1013
        %1031 = vmatpush.bf16.msra.mxu0 %v1012
        %1032 = vmatpush.bf16.msra.mxu0 %v1011
        %1033 = vmatpush.bf16.msra.mxu0 %v1010
        %1034 = vmatmul.bf16.gmra.mxu0 %v976
        %v1035 = vpop.f32.mrf.mxu0
        %v1036 = vadd.f32 0.0, %v1035
        %v1037 = vpop.f32.mrf.mxu0
        %v1038 = vadd.f32 0.0, %v1037
        %1039 = vdwg.mxu0
        %v1040 = vadd.f32 %v935, %v1036
        %v1041 = vadd.f32 %v936, %v1038
        %v1043 = vperm.slane %v171, 0
        %v1045 = vadd.f32 %v1040, %v1043
        %v1046 = vadd.f32 %v1041, %v1043
        %v1047 = vsub.f32 0.0, %v1045
        %v1048 = vsub.f32 0.0, %v1046
        %v1049 = vmul.f32 %v1047, 1.442695
        %v1050 = vpow.pop %v1049
        %v1051 = vmul.f32 %v1048, 1.442695
        %v1052 = vpow.pop %v1051
        %v1053 = vadd.f32 %v1050, 1.0
        %v1054 = vadd.f32 %v1052, 1.0
        %v1055 = vrcp.pop %v1053
        %v1056 = vrcp.pop %v1054
        %v1057 = vmul.f32 %v1045, %v1055
        %v1058 = vmul.f32 %v1046, %v1056
        %v1059 = vpack.c.bf16 %v1057, %v1057
        %v1060 = vpack.c.bf16 %v1058, %v1058
        %s1061 = smul.u32 %s173, 2
        %s1062 = smul.addr %s1061, 4
        %s1063 = scalar_lea.vmem %s170, %s1062
        %1064 = vst [vmem:[%s1063] sm:$0xf] %v1059
        %1065 = vst [vmem:[%s1063 + $0x4] sm:$0xf] %v1060
      $region37: #{yolov11_backbone.6} parent=31 // loop_footer
        %s177 = sadd.s32 1, %s173
      $region38: #{yolov11_backbone.6} parent=31 // loop_footer_branch
        %172 = sbr.rel target = $region34
      $region39: #{yolov11_backbone.6} parent=31 // loop_exit
        _
      %p1066 = scmp.lt.s32.totalorder %s14, 1
      %s1067 = scalar_select %p1066, %s14, 1
      %s1068 = smul.addr %s1067, 32
      %s1069 = smul.addr %s1068, 4
      %s1070 = scalar_lea.vmem %s3, %s1069
      // Predicated region
      $region40: #{yolov11_backbone.6} parent=31 // pred_check
        %p1071 = pneg %p100
      $region41: #{yolov11_backbone.6} parent=31 // pred_check_branch
        %1073 = sbr.rel (%p1071) target = $region43
      $region42: #{yolov11_backbone.6} parent=31 // pred_region
        _
      $region43: #{yolov11_backbone.6} parent=31 // pred_fallthru
        _
    $region32: #{yolov11_backbone.6} parent=5 // pred_fallthru
      _
    %p1074 = scmp.le.s32.totalorder 2, %s9
    // Predicated region
    $region44: #{yolov11_backbone.6} parent=5 // pred_check
      %p1075 = pneg %p1074
    $region45: #{yolov11_backbone.6} parent=5 // pred_check_branch
      %1077 = sbr.rel (%p1075) target = $region47
    $region46: #{yolov11_backbone.6} parent=5 // pred_region
      %s1078 = ssub.s32 %s9, 2
      // Predicated region
      $region48: #{yolov11_backbone.6} parent=46 // pred_check
        %p1079 = pneg %p106
      $region49: #{yolov11_backbone.6} parent=46 // pred_check_branch
        %1081 = sbr.rel (%p1079) target = $region51
      $region50: #{yolov11_backbone.6} parent=46 // pred_region
        %p1082 = scmp.lt.s32.totalorder %s15, 1
        %s1083 = scalar_select %p1082, %s15, 1
        %s1084 = smul.addr %s1083, 32
        %s1085 = smul.addr %s1084, 4
        %s1086 = scalar_lea.vmem %s3, %s1085
      $region51: #{yolov11_backbone.6} parent=46 // pred_fallthru
        _
    $region47: #{yolov11_backbone.6} parent=5 // pred_fallthru
      _
  $region6: #{yolov11_backbone.6} parent=0 // loop_footer
    %s13 = sadd.s32 1, %s9
  $region7: #{yolov11_backbone.6} parent=0 // loop_footer_branch
    %8 = sbr.rel target = $region3
  $region8: #{yolov11_backbone.6} parent=0 // loop_exit
    _

// kernel: yolov11_backbone.7
$region0: #{yolov11_backbone.7}
  #allocation0 [shape = 'u32[]', space=smem, size = 0x4, offset = 0x4, fixed_abs, tag = 'smem constant byte address 0x4 - core index']
  #allocation1 [shape = 'u32[72,128]{1,0:T(1,128)}', space=vmem, size = 0x9000, scoped, tag = 'internal scratch']
  %s0 = inlined_call_operand.vmem [shape: bf16[2,4,9,9,128], index: 0, kind: input, shape index: {}]
  %s1 = inlined_call_operand.vmem [shape: bf16[9,128,128], index: 1, kind: input, shape index: {}]
  %s2 = inlined_call_operand.vmem [shape: f32[1,128], index: 2, kind: input, shape index: {}]
  %s3 = inlined_call_operand.vmem [shape: bf16[2,8,8,128], index: 3, kind: output, shape index: {}]
  %s4 = sld [smem:[#allocation0]]
  $region52: #{yolov11_backbone.7} parent=0
    _
  %s6 = ssub.s32 1, %s4
  %s7 = scalar_select 0, %s6, %s4
  loop: start=0, step=1, limit=4
  $region2: #{yolov11_backbone.7} parent=0 // loop_pre_header
    _
  $region3: #{yolov11_backbone.7} parent=0 // loop_header
    %s9 = sphi 0, %s13
    %p10 = scmp.ge.s32.totalorder %s9, 4
    %s19 = sphi 0, %s21
    %s22 = sphi 0, %s19
    %s23 = sphi 0, %s22
    %s39 = sphi 0, %s23
    %s43 = sphi 0, %s43
    %s45 = sphi 0, %s43
    %s46 = sphi 0, %s45
    %s60 = sphi 0, %s46
    %s64 = sphi 0, %s64
    %s66 = sphi 0, %s64
    %s67 = sphi 0, %s66
    %s81 = sphi 0, %s67
    %s87 = sphi 0, %s89
    %s90 = sphi 0, %s87
    %s91 = sphi 0, %s90
    %s107 = sphi 0, %s91
  $region4: #{yolov11_backbone.7} parent=0 // loop_header_branch
    %12 = sbr.rel (%p10) target = $region8
  $region5: #{yolov11_backbone.7} parent=0 // loop_body
    %s14 = ssub.s32 %s9, 1
    %s15 = ssub.s32 %s9, 2
    %s16 = sadd.s32 %s9, 1
    %s17 = ssub.s32 %s9, %s16
    %p18 = scmp.eq.s32.totalorder %s17, 0
    %s20 = sadd.s32 %s19, 1
    %s21 = scalar_select %p18, %s19, %s20
    %p24 = pneg %p18
    %p25 = scmp.eq.s32.totalorder %s9, 1
    %p26 = por %p24, %p25
    %p27 = scmp.ne.s32.totalorder %s19, %s22
    %p28 = scmp.eq.s32.totalorder %s9, 0
    %p29 = por %p27, %p28
    %p30 = scmp.ne.s32.totalorder %s19, %s22
    %p31 = scmp.eq.s32.totalorder %s14, 1
    %p32 = por %p30, %p31
    %p33 = scmp.ne.s32.totalorder %s22, %s23
    %p34 = scmp.eq.s32.totalorder %s14, 0
    %p35 = por %p33, %p34
    %p36 = scmp.ne.s32.totalorder %s22, %s23
    %p37 = scmp.eq.s32.totalorder %s15, 1
    %p38 = por %p36, %p37
    %p40 = scmp.ne.s32.totalorder %s23, %s39
    %p41 = scmp.eq.s32.totalorder %s15, 0
    %p42 = por %p40, %p41
    %s44 = sadd.s32 %s43, 1
    %p47 = scmp.eq.s32.totalorder %s9, 1
    %p48 = scmp.ne.s32.totalorder %s43, %s45
    %p49 = scmp.eq.s32.totalorder %s9, 0
    %p50 = por %p48, %p49
    %p51 = scmp.ne.s32.totalorder %s43, %s45
    %p52 = scmp.eq.s32.totalorder %s14, 1
    %p53 = por %p51, %p52
    %p54 = scmp.ne.s32.totalorder %s45, %s46
    %p55 = scmp.eq.s32.totalorder %s14, 0
    %p56 = por %p54, %p55
    %p57 = scmp.ne.s32.totalorder %s45, %s46
    %p58 = scmp.eq.s32.totalorder %s15, 1
    %p59 = por %p57, %p58
    %p61 = scmp.ne.s32.totalorder %s46, %s60
    %p62 = scmp.eq.s32.totalorder %s15, 0
    %p63 = por %p61, %p62
    %s65 = sadd.s32 %s64, 1
    %p68 = scmp.eq.s32.totalorder %s9, 1
    %p69 = scmp.ne.s32.totalorder %s64, %s66
    %p70 = scmp.eq.s32.totalorder %s9, 0
    %p71 = por %p69, %p70
    %p72 = scmp.ne.s32.totalorder %s64, %s66
    %p73 = scmp.eq.s32.totalorder %s14, 1
    %p74 = por %p72, %p73
    %p75 = scmp.ne.s32.totalorder %s66, %s67
    %p76 = scmp.eq.s32.totalorder %s14, 0
    %p77 = por %p75, %p76
    %p78 = scmp.ne.s32.totalorder %s66, %s67
    %p79 = scmp.eq.s32.totalorder %s15, 1
    %p80 = por %p78, %p79
    %p82 = scmp.ne.s32.totalorder %s67, %s81
    %p83 = scmp.eq.s32.totalorder %s15, 0
    %p84 = por %p82, %p83
    %s85 = ssub.s32 %s9, %s16
    %p86 = scmp.eq.s32.totalorder %s85, 0
    %s88 = sadd.s32 %s87, 1
    %s89 = scalar_select %p86, %s87, %s88
    %p92 = pneg %p86
    %p93 = scmp.eq.s32.totalorder %s9, 1
    %p94 = por %p92, %p93
    %p95 = scmp.ne.s32.totalorder %s87, %s90
    %p96 = scmp.eq.s32.totalorder %s9, 0
    %p97 = por %p95, %p96
    %p98 = scmp.ne.s32.totalorder %s87, %s90
    %p99 = scmp.eq.s32.totalorder %s14, 1
    %p100 = por %p98, %p99
    %p101 = scmp.ne.s32.totalorder %s90, %s91
    %p102 = scmp.eq.s32.totalorder %s14, 0
    %p103 = por %p101, %p102
    %p104 = scmp.ne.s32.totalorder %s90, %s91
    %p105 = scmp.eq.s32.totalorder %s15, 1
    %p106 = por %p104, %p105
    %p108 = scmp.ne.s32.totalorder %s91, %s107
    %p109 = scmp.eq.s32.totalorder %s15, 0
    %p110 = por %p108, %p109
    %p111 = scmp.le.s32.totalorder 1, %s9
    %p112 = scmp.lt.s32.totalorder %s9, 3
    %p113 = pnand %p111, %p112
    %p114 = pneg %p113
    // Predicated region
    $region9: #{yolov11_backbone.7} parent=5 // pred_check
      _
    $region10: #{yolov11_backbone.7} parent=5 // pred_check_branch
      %116 = sbr.rel (%p113) target = $region12
    $region11: #{yolov11_backbone.7} parent=5 // pred_region
      %s117 = ssub.s32 %s9, 1
      // Predicated region
      $region13: #{yolov11_backbone.7} parent=11 // pred_check
        %p118 = pneg %p56
      $region14: #{yolov11_backbone.7} parent=11 // pred_check_branch
        %120 = sbr.rel (%p118) target = $region16
      $region15: #{yolov11_backbone.7} parent=11 // pred_region
        _
      $region16: #{yolov11_backbone.7} parent=11 // pred_fallthru
        _
      // Predicated region
      $region17: #{yolov11_backbone.7} parent=11 // pred_check
        %p121 = pneg %p77
      $region18: #{yolov11_backbone.7} parent=11 // pred_check_branch
        %123 = sbr.rel (%p121) target = $region20
      $region19: #{yolov11_backbone.7} parent=11 // pred_region
        _
      $region20: #{yolov11_backbone.7} parent=11 // pred_fallthru
        _
    $region12: #{yolov11_backbone.7} parent=5 // pred_fallthru
      _
    %p124 = scmp.lt.s32.totalorder %s9, 2
    // Predicated region
    $region21: #{yolov11_backbone.7} parent=5 // pred_check
      %p125 = pneg %p124
    $region22: #{yolov11_backbone.7} parent=5 // pred_check_branch
      %127 = sbr.rel (%p125) target = $region24
    $region23: #{yolov11_backbone.7} parent=5 // pred_region
      // Predicated region
      $region25: #{yolov11_backbone.7} parent=23 // pred_check
        %p128 = pneg %p29
      $region26: #{yolov11_backbone.7} parent=23 // pred_check_branch
        %130 = sbr.rel (%p128) target = $region28
      $region27: #{yolov11_backbone.7} parent=23 // pred_region
        %p131 = scmp.lt.s32.totalorder %s9, 1
        %s132 = scalar_select %p131, %s9, 1
        %s133 = smul.addr %s132, 72
        %s134 = smul.addr %s133, 4
        %s135 = scalar_lea.vmem %s0, %s134
      $region28: #{yolov11_backbone.7} parent=23 // pred_fallthru
        _
    $region24: #{yolov11_backbone.7} parent=5 // pred_fallthru
      _
    %p136 = scmp.le.s32.totalorder 1, %s9
    %p137 = scmp.lt.s32.totalorder %s9, 3
    %p138 = pnand %p136, %p137
    %p139 = pneg %p138
    // Predicated region
    $region29: #{yolov11_backbone.7} parent=5 // pred_check
      _
    $region30: #{yolov11_backbone.7} parent=5 // pred_check_branch
      %141 = sbr.rel (%p138) target = $region32
    $region31: #{yolov11_backbone.7} parent=5 // pred_region
      %s142 = ssub.s32 %s9, 1
      %p143 = scmp.lt.s32.totalorder %s14, 1
      %s144 = scalar_select %p143, %s14, 1
      %s145 = smul.addr %s144, 72
      %s146 = smul.addr %s145, 4
      %s147 = scalar_lea.vmem %s0, %s146
      %p148 = pneg %p35
      %p149 = pneg %p32
      %p150 = pneg %p56
      %p151 = pneg %p53
      %p152 = pneg %p77
      %p153 = pneg %p74
      %p154 = pneg %p103
      %p155 = pneg %p100
      %p156 = scmp.lt.s32.totalorder %s14, 1
      %s157 = scalar_select %p156, %s14, 1
      %s158 = smul.addr %s157, 8
      %s159 = smul.addr %s158, 4
      %s160 = scalar_lea.vmem %s3, %s159
      %p161 = scmp.lt.s32.totalorder %s14, 1
      %s162 = scalar_select %p161, %s14, 1
      %s163 = smul.addr %s162, 72
      %s164 = smul.addr %s163, 4
      %s165 = scalar_lea.vmem %s0, %s164
      %p166 = scmp.lt.s32.totalorder %s14, 1
      %s167 = scalar_select %p166, %s14, 1
      %s168 = smul.addr %s167, 8
      %s169 = smul.addr %s168, 4
      %s170 = scalar_lea.vmem %s3, %s169
      %v171 = vld [vmem:[%s2] sm:$0x1]
      loop: start=0, step=1, limit=8
      $region33: #{yolov11_backbone.7} parent=31 // loop_pre_header
        _
      $region34: #{yolov11_backbone.7} parent=31 // loop_header
        %s173 = sphi 0, %s177
        %p174 = scmp.ge.s32.totalorder %s173, 8
      $region35: #{yolov11_backbone.7} parent=31 // loop_header_branch
        %176 = sbr.rel (%p174) target = $region39
      $region36: #{yolov11_backbone.7} parent=31 // loop_body
        %s178 = smul.u32 %s173, 2
        %s179 = smul.addr %s178, 4
        %s180 = scalar_lea.vmem %s165, %s179
        %v181 = vld [vmem:[%s180] sm:$0xf]
        %v182 = vld [vmem:[%s1] sm:$0xf]
        %v183 = vld [vmem:[%s1 + $0x4] sm:$0xf]
        %v184 = vld [vmem:[%s1 + $0x8] sm:$0xf]
        %v185 = vld [vmem:[%s1 + $0xc] sm:$0xf]
        %v186 = vld [vmem:[%s1 + $0x10] sm:$0xf]
        %v187 = vld [vmem:[%s1 + $0x14] sm:$0xf]
        %v188 = vld [vmem:[%s1 + $0x18] sm:$0xf]
        %v189 = vld [vmem:[%s1 + $0x1c] sm:$0xf]
        %v190 = vld [vmem:[%s1 + $0x20] sm:$0xf]
        %v191 = vld [vmem:[%s1 + $0x24] sm:$0xf]
        %v192 = vld [vmem:[%s1 + $0x28] sm:$0xf]
        %v193 = vld [vmem:[%s1 + $0x2c] sm:$0xf]
        %v194 = vld [vmem:[%s1 + $0x30] sm:$0xf]
        %v195 = vld [vmem:[%s1 + $0x34] sm:$0xf]
        %v196 = vld [vmem:[%s1 + $0x38] sm:$0xf]
        %v197 = vld [vmem:[%s1 + $0x3c] sm:$0xf]
        %s198 = sadd.s32 %s178, 18
        %s199 = smul.addr %s198, 4
        %s200 = scalar_lea.vmem %s165, %s199
        %v201 = vld [vmem:[%s200] sm:$0xf]
        %s202 = scalar_lea.vmem %s1, 64
        %v203 = vld [vmem:[%s202] sm:$0xf]
        %v204 = vld [vmem:[%s202 + $0x4] sm:$0xf]
        %v205 = vld [vmem:[%s202 + $0x8] sm:$0xf]
        %v206 = vld [vmem:[%s202 + $0xc] sm:$0xf]
        %v207 = vld [vmem:[%s202 + $0x10] sm:$0xf]
        %v208 = vld [vmem:[%s202 + $0x14] sm:$0xf]
        %v209 = vld [vmem:[%s202 + $0x18] sm:$0xf]
        %v210 = vld [vmem:[%s202 + $0x1c] sm:$0xf]
        %v211 = vld [vmem:[%s202 + $0x20] sm:$0xf]
        %v212 = vld [vmem:[%s202 + $0x24] sm:$0xf]
        %v213 = vld [vmem:[%s202 + $0x28] sm:$0xf]
        %v214 = vld [vmem:[%s202 + $0x2c] sm:$0xf]
        %v215 = vld [vmem:[%s202 + $0x30] sm:$0xf]
        %v216 = vld [vmem:[%s202 + $0x34] sm:$0xf]
        %v217 = vld [vmem:[%s202 + $0x38] sm:$0xf]
        %v218 = vld [vmem:[%s202 + $0x3c] sm:$0xf]
        %v235 = vunpack.c.l.b16 %v203
        %v236 = vunpack.c.l.b16 %v204
        %v237 = vunpack.c.l.b16 %v205
        %v238 = vunpack.c.l.b16 %v206
        %v239 = vunpack.c.l.b16 %v207
        %v240 = vunpack.c.l.b16 %v208
        %v241 = vunpack.c.l.b16 %v209
        %v242 = vunpack.c.l.b16 %v210
        %v243 = vunpack.c.l.b16 %v211
        %v244 = vunpack.c.l.b16 %v212
        %v245 = vunpack.c.l.b16 %v213
        %v246 = vunpack.c.l.b16 %v214
        %v247 = vunpack.c.l.b16 %v215
        %v248 = vunpack.c.l.b16 %v216
        %v249 = vunpack.c.l.b16 %v217
        %v250 = vunpack.c.l.b16 %v218
        %v251 = vpack.c.b16 %v236, %v235
        %v252 = vpack.c.b16 %v238, %v237
        %v253 = vpack.c.b16 %v240, %v239
        %v254 = vpack.c.b16 %v242, %v241
        %v255 = vpack.c.b16 %v244, %v243
        %v256 = vpack.c.b16 %v246, %v245
        %v257 = vpack.c.b16 %v248, %v247
        %v258 = vpack.c.b16 %v250, %v249
        %267 = vmatpush.bf16.msra.mxu0 %v258
        %268 = vmatpush.bf16.msra.mxu0 %v257
        %269 = vmatpush.bf16.msra.mxu0 %v256
        %270 = vmatpush.bf16.msra.mxu0 %v255
        %271 = vmatpush.bf16.msra.mxu0 %v254
        %272 = vmatpush.bf16.msra.mxu0 %v253
        %273 = vmatpush.bf16.msra.mxu0 %v252
        %274 = vmatpush.bf16.msra.mxu0 %v251
        %275 = vmatmul.bf16.gmra.mxu0 %v201
        %v276 = vpop.f32.mrf.mxu0
        %v277 = vadd.f32 0.0, %v276
        %v278 = vpop.f32.mrf.mxu0
        %279 = vdwg.mxu0
        %v296 = vunpack.c.l.b16 %v182
        %v297 = vunpack.c.l.b16 %v183
        %v298 = vunpack.c.l.b16 %v184
        %v299 = vunpack.c.l.b16 %v185
        %v300 = vunpack.c.l.b16 %v186
        %v301 = vunpack.c.l.b16 %v187
        %v302 = vunpack.c.l.b16 %v188
        %v303 = vunpack.c.l.b16 %v189
        %v304 = vunpack.c.l.b16 %v190
        %v305 = vunpack.c.l.b16 %v191
        %v306 = vunpack.c.l.b16 %v192
        %v307 = vunpack.c.l.b16 %v193
        %v308 = vunpack.c.l.b16 %v194
        %v309 = vunpack.c.l.b16 %v195
        %v310 = vunpack.c.l.b16 %v196
        %v311 = vunpack.c.l.b16 %v197
        %v312 = vpack.c.b16 %v297, %v296
        %v313 = vpack.c.b16 %v299, %v298
        %v314 = vpack.c.b16 %v301, %v300
        %v315 = vpack.c.b16 %v303, %v302
        %v316 = vpack.c.b16 %v305, %v304
        %v317 = vpack.c.b16 %v307, %v306
        %v318 = vpack.c.b16 %v309, %v308
        %v319 = vpack.c.b16 %v311, %v310
        %328 = vmatpush.bf16.msra.mxu0 %v319
        %329 = vmatpush.bf16.msra.mxu0 %v318
        %330 = vmatpush.bf16.msra.mxu0 %v317
        %331 = vmatpush.bf16.msra.mxu0 %v316
        %332 = vmatpush.bf16.msra.mxu0 %v315
        %333 = vmatpush.bf16.msra.mxu0 %v314
        %334 = vmatpush.bf16.msra.mxu0 %v313
        %335 = vmatpush.bf16.msra.mxu0 %v312
        %336 = vmatmul.bf16.gmra.mxu0 %v181
        %v337 = vpop.f32.mrf.mxu0
        %v338 = vadd.f32 %v277, %v337
        %v339 = vpop.f32.mrf.mxu0
        %340 = vdwg.mxu0
        %v341 = vld [vmem:[%s180] sm:$0xf]
        %v342 = vld [vmem:[%s180 + $0x4] sm:$0x1]
        %s343 = scalar_lea.vmem %s1, 128
        %v344 = vld [vmem:[%s343] sm:$0xf]
        %v345 = vld [vmem:[%s343 + $0x4] sm:$0xf]
        %v346 = vld [vmem:[%s343 + $0x8] sm:$0xf]
        %v347 = vld [vmem:[%s343 + $0xc] sm:$0xf]
        %v348 = vld [vmem:[%s343 + $0x10] sm:$0xf]
        %v349 = vld [vmem:[%s343 + $0x14] sm:$0xf]
        %v350 = vld [vmem:[%s343 + $0x18] sm:$0xf]
        %v351 = vld [vmem:[%s343 + $0x1c] sm:$0xf]
        %v352 = vld [vmem:[%s343 + $0x20] sm:$0xf]
        %v353 = vld [vmem:[%s343 + $0x24] sm:$0xf]
        %v354 = vld [vmem:[%s343 + $0x28] sm:$0xf]
        %v355 = vld [vmem:[%s343 + $0x2c] sm:$0xf]
        %v356 = vld [vmem:[%s343 + $0x30] sm:$0xf]
        %v357 = vld [vmem:[%s343 + $0x34] sm:$0xf]
        %v358 = vld [vmem:[%s343 + $0x38] sm:$0xf]
        %v359 = vld [vmem:[%s343 + $0x3c] sm:$0xf]
        %v362 = vunpack.c.l.b16 %v341
        %v363 = vunpack.c.l.b16 %v342
        %v364 = vpack.c.b16 %v363, %v362
        %v366 = vshrl.u32 %v364, 16
        %v368 = vshll.u32 %v364, 16
        %v370 = vrot.slane %v368, 1
        %v371 = vor.u32 %v366, %v370
        %v389 = vunpack.c.l.b16 %v344
        %v390 = vunpack.c.l.b16 %v345
        %v391 = vunpack.c.l.b16 %v346
        %v392 = vunpack.c.l.b16 %v347
        %v393 = vunpack.c.l.b16 %v348
        %v394 = vunpack.c.l.b16 %v349
        %v395 = vunpack.c.l.b16 %v350
        %v396 = vunpack.c.l.b16 %v351
        %v397 = vunpack.c.l.b16 %v352
        %v398 = vunpack.c.l.b16 %v353
        %v399 = vunpack.c.l.b16 %v354
        %v400 = vunpack.c.l.b16 %v355
        %v401 = vunpack.c.l.b16 %v356
        %v402 = vunpack.c.l.b16 %v357
        %v403 = vunpack.c.l.b16 %v358
        %v404 = vunpack.c.l.b16 %v359
        %v405 = vpack.c.b16 %v390, %v389
        %v406 = vpack.c.b16 %v392, %v391
        %v407 = vpack.c.b16 %v394, %v393
        %v408 = vpack.c.b16 %v396, %v395
        %v409 = vpack.c.b16 %v398, %v397
        %v410 = vpack.c.b16 %v400, %v399
        %v411 = vpack.c.b16 %v402, %v401
        %v412 = vpack.c.b16 %v404, %v403
        %421 = vmatpush.bf16.msra.mxu0 %v412
        %422 = vmatpush.bf16.msra.mxu0 %v411
        %423 = vmatpush.bf16.msra.mxu0 %v410
        %424 = vmatpush.bf16.msra.mxu0 %v409
        %425 = vmatpush.bf16.msra.mxu0 %v408
        %426 = vmatpush.bf16.msra.mxu0 %v407
        %427 = vmatpush.bf16.msra.mxu0 %v406
        %428 = vmatpush.bf16.msra.mxu0 %v405
        %429 = vmatmul.bf16.gmra.mxu0 %v371
        %v430 = vpop.f32.mrf.mxu0
        %v431 = vadd.f32 0.0, %v430
        %v432 = vpop.f32.mrf.mxu0
        %433 = vdwg.mxu0
        %v434 = vadd.f32 %v338, %v431
        %s435 = sadd.s32 %s178, 36
        %s436 = smul.addr %s435, 4
        %s437 = scalar_lea.vmem %s165, %s436
        %v438 = vld [vmem:[%s437] sm:$0xf]
        %s439 = scalar_lea.vmem %s1, 192
        %v440 = vld [vmem:[%s439] sm:$0xf]
        %v441 = vld [vmem:[%s439 + $0x4] sm:$0xf]
        %v442 = vld [vmem:[%s439 + $0x8] sm:$0xf]
        %v443 = vld [vmem:[%s439 + $0xc] sm:$0xf]
        %v444 = vld [vmem:[%s439 + $0x10] sm:$0xf]
        %v445 = vld [vmem:[%s439 + $0x14] sm:$0xf]
        %v446 = vld [vmem:[%s439 + $0x18] sm:$0xf]
        %v447 = vld [vmem:[%s439 + $0x1c] sm:$0xf]
        %v448 = vld [vmem:[%s439 + $0x20] sm:$0xf]
        %v449 = vld [vmem:[%s439 + $0x24] sm:$0xf]
        %v450 = vld [vmem:[%s439 + $0x28] sm:$0xf]
        %v451 = vld [vmem:[%s439 + $0x2c] sm:$0xf]
        %v452 = vld [vmem:[%s439 + $0x30] sm:$0xf]
        %v453 = vld [vmem:[%s439 + $0x34] sm:$0xf]
        %v454 = vld [vmem:[%s439 + $0x38] sm:$0xf]
        %v455 = vld [vmem:[%s439 + $0x3c] sm:$0xf]
        %v472 = vunpack.c.l.b16 %v440
        %v473 = vunpack.c.l.b16 %v441
        %v474 = vunpack.c.l.b16 %v442
        %v475 = vunpack.c.l.b16 %v443
        %v476 = vunpack.c.l.b16 %v444
        %v477 = vunpack.c.l.b16 %v445
        %v478 = vunpack.c.l.b16 %v446
        %v479 = vunpack.c.l.b16 %v447
        %v480 = vunpack.c.l.b16 %v448
        %v481 = vunpack.c.l.b16 %v449
        %v482 = vunpack.c.l.b16 %v450
        %v483 = vunpack.c.l.b16 %v451
        %v484 = vunpack.c.l.b16 %v452
        %v485 = vunpack.c.l.b16 %v453
        %v486 = vunpack.c.l.b16 %v454
        %v487 = vunpack.c.l.b16 %v455
        %v488 = vpack.c.b16 %v473, %v472
        %v489 = vpack.c.b16 %v475, %v474
        %v490 = vpack.c.b16 %v477, %v476
        %v491 = vpack.c.b16 %v479, %v478
        %v492 = vpack.c.b16 %v481, %v480
        %v493 = vpack.c.b16 %v483, %v482
        %v494 = vpack.c.b16 %v485, %v484
        %v495 = vpack.c.b16 %v487, %v486
        %504 = vmatpush.bf16.msra.mxu0 %v495
        %505 = vmatpush.bf16.msra.mxu0 %v494
        %506 = vmatpush.bf16.msra.mxu0 %v493
        %507 = vmatpush.bf16.msra.mxu0 %v492
        %508 = vmatpush.bf16.msra.mxu0 %v491
        %509 = vmatpush.bf16.msra.mxu0 %v490
        %510 = vmatpush.bf16.msra.mxu0 %v489
        %511 = vmatpush.bf16.msra.mxu0 %v488
        %512 = vmatmul.bf16.gmra.mxu0 %v438
        %v513 = vpop.f32.mrf.mxu0
        %v514 = vadd.f32 0.0, %v513
        %v515 = vpop.f32.mrf.mxu0
        %516 = vdwg.mxu0
        %v517 = vadd.f32 %v434, %v514
        %s518 = sadd.s32 %s178, 54
        %s519 = smul.addr %s518, 4
        %s520 = scalar_lea.vmem %s165, %s519
        %v521 = vld [vmem:[%s520] sm:$0xf]
        %s522 = scalar_lea.vmem %s1, 256
        %v523 = vld [vmem:[%s522] sm:$0xf]
        %v524 = vld [vmem:[%s522 + $0x4] sm:$0xf]
        %v525 = vld [vmem:[%s522 + $0x8] sm:$0xf]
        %v526 = vld [vmem:[%s522 + $0xc] sm:$0xf]
        %v527 = vld [vmem:[%s522 + $0x10] sm:$0xf]
        %v528 = vld [vmem:[%s522 + $0x14] sm:$0xf]
        %v529 = vld [vmem:[%s522 + $0x18] sm:$0xf]
        %v530 = vld [vmem:[%s522 + $0x1c] sm:$0xf]
        %v531 = vld [vmem:[%s522 + $0x20] sm:$0xf]
        %v532 = vld [vmem:[%s522 + $0x24] sm:$0xf]
        %v533 = vld [vmem:[%s522 + $0x28] sm:$0xf]
        %v534 = vld [vmem:[%s522 + $0x2c] sm:$0xf]
        %v535 = vld [vmem:[%s522 + $0x30] sm:$0xf]
        %v536 = vld [vmem:[%s522 + $0x34] sm:$0xf]
        %v537 = vld [vmem:[%s522 + $0x38] sm:$0xf]
        %v538 = vld [vmem:[%s522 + $0x3c] sm:$0xf]
        %v555 = vunpack.c.l.b16 %v523
        %v556 = vunpack.c.l.b16 %v524
        %v557 = vunpack.c.l.b16 %v525
        %v558 = vunpack.c.l.b16 %v526
        %v559 = vunpack.c.l.b16 %v527
        %v560 = vunpack.c.l.b16 %v528
        %v561 = vunpack.c.l.b16 %v529
        %v562 = vunpack.c.l.b16 %v530
        %v563 = vunpack.c.l.b16 %v531
        %v564 = vunpack.c.l.b16 %v532
        %v565 = vunpack.c.l.b16 %v533
        %v566 = vunpack.c.l.b16 %v534
        %v567 = vunpack.c.l.b16 %v535
        %v568 = vunpack.c.l.b16 %v536
        %v569 = vunpack.c.l.b16 %v537
        %v570 = vunpack.c.l.b16 %v538
        %v571 = vpack.c.b16 %v556, %v555
        %v572 = vpack.c.b16 %v558, %v557
        %v573 = vpack.c.b16 %v560, %v559
        %v574 = vpack.c.b16 %v562, %v561
        %v575 = vpack.c.b16 %v564, %v563
        %v576 = vpack.c.b16 %v566, %v565
        %v577 = vpack.c.b16 %v568, %v567
        %v578 = vpack.c.b16 %v570, %v569
        %587 = vmatpush.bf16.msra.mxu0 %v578
        %588 = vmatpush.bf16.msra.mxu0 %v577
        %589 = vmatpush.bf16.msra.mxu0 %v576
        %590 = vmatpush.bf16.msra.mxu0 %v575
        %591 = vmatpush.bf16.msra.mxu0 %v574
        %592 = vmatpush.bf16.msra.mxu0 %v573
        %593 = vmatpush.bf16.msra.mxu0 %v572
        %594 = vmatpush.bf16.msra.mxu0 %v571
        %595 = vmatmul.bf16.gmra.mxu0 %v521
        %v596 = vpop.f32.mrf.mxu0
        %v597 = vadd.f32 0.0, %v596
        %v598 = vpop.f32.mrf.mxu0
        %599 = vdwg.mxu0
        %v600 = vadd.f32 %v517, %v597
        %v601 = vld [vmem:[%s437] sm:$0xf]
        %v602 = vld [vmem:[%s437 + $0x4] sm:$0x1]
        %s603 = scalar_lea.vmem %s1, 320
        %v604 = vld [vmem:[%s603] sm:$0xf]
        %v605 = vld [vmem:[%s603 + $0x4] sm:$0xf]
        %v606 = vld [vmem:[%s603 + $0x8] sm:$0xf]
        %v607 = vld [vmem:[%s603 + $0xc] sm:$0xf]
        %v608 = vld [vmem:[%s603 + $0x10] sm:$0xf]
        %v609 = vld [vmem:[%s603 + $0x14] sm:$0xf]
        %v610 = vld [vmem:[%s603 + $0x18] sm:$0xf]
        %v611 = vld [vmem:[%s603 + $0x1c] sm:$0xf]
        %v612 = vld [vmem:[%s603 + $0x20] sm:$0xf]
        %v613 = vld [vmem:[%s603 + $0x24] sm:$0xf]
        %v614 = vld [vmem:[%s603 + $0x28] sm:$0xf]
        %v615 = vld [vmem:[%s603 + $0x2c] sm:$0xf]
        %v616 = vld [vmem:[%s603 + $0x30] sm:$0xf]
        %v617 = vld [vmem:[%s603 + $0x34] sm:$0xf]
        %v618 = vld [vmem:[%s603 + $0x38] sm:$0xf]
        %v619 = vld [vmem:[%s603 + $0x3c] sm:$0xf]
        %v622 = vunpack.c.l.b16 %v601
        %v623 = vunpack.c.l.b16 %v602
        %v624 = vpack.c.b16 %v623, %v622
        %v626 = vshrl.u32 %v624, 16
        %v628 = vshll.u32 %v624, 16
        %v630 = vrot.slane %v628, 1
        %v631 = vor.u32 %v626, %v630
        %v649 = vunpack.c.l.b16 %v604
        %v650 = vunpack.c.l.b16 %v605
        %v651 = vunpack.c.l.b16 %v606
        %v652 = vunpack.c.l.b16 %v607
        %v653 = vunpack.c.l.b16 %v608
        %v654 = vunpack.c.l.b16 %v609
        %v655 = vunpack.c.l.b16 %v610
        %v656 = vunpack.c.l.b16 %v611
        %v657 = vunpack.c.l.b16 %v612
        %v658 = vunpack.c.l.b16 %v613
        %v659 = vunpack.c.l.b16 %v614
        %v660 = vunpack.c.l.b16 %v615
        %v661 = vunpack.c.l.b16 %v616
        %v662 = vunpack.c.l.b16 %v617
        %v663 = vunpack.c.l.b16 %v618
        %v664 = vunpack.c.l.b16 %v619
        %v665 = vpack.c.b16 %v650, %v649
        %v666 = vpack.c.b16 %v652, %v651
        %v667 = vpack.c.b16 %v654, %v653
        %v668 = vpack.c.b16 %v656, %v655
        %v669 = vpack.c.b16 %v658, %v657
        %v670 = vpack.c.b16 %v660, %v659
        %v671 = vpack.c.b16 %v662, %v661
        %v672 = vpack.c.b16 %v664, %v663
        %681 = vmatpush.bf16.msra.mxu0 %v672
        %682 = vmatpush.bf16.msra.mxu0 %v671
        %683 = vmatpush.bf16.msra.mxu0 %v670
        %684 = vmatpush.bf16.msra.mxu0 %v669
        %685 = vmatpush.bf16.msra.mxu0 %v668
        %686 = vmatpush.bf16.msra.mxu0 %v667
        %687 = vmatpush.bf16.msra.mxu0 %v666
        %688 = vmatpush.bf16.msra.mxu0 %v665
        %689 = vmatmul.bf16.gmra.mxu0 %v631
        %v690 = vpop.f32.mrf.mxu0
        %v691 = vadd.f32 0.0, %v690
        %v692 = vpop.f32.mrf.mxu0
        %693 = vdwg.mxu0
        %v694 = vadd.f32 %v600, %v691
        %s695 = sadd.s32 %s173, 1
        %s696 = smul.u32 %s695, 2
        %s697 = smul.addr %s696, 4
        %s698 = scalar_lea.vmem %s165, %s697
        %v699 = vld [vmem:[%s698] sm:$0xf]
        %s700 = scalar_lea.vmem %s1, 384
        %v701 = vld [vmem:[%s700] sm:$0xf]
        %v702 = vld [vmem:[%s700 + $0x4] sm:$0xf]
        %v703 = vld [vmem:[%s700 + $0x8] sm:$0xf]
        %v704 = vld [vmem:[%s700 + $0xc] sm:$0xf]
        %v705 = vld [vmem:[%s700 + $0x10] sm:$0xf]
        %v706 = vld [vmem:[%s700 + $0x14] sm:$0xf]
        %v707 = vld [vmem:[%s700 + $0x18] sm:$0xf]
        %v708 = vld [vmem:[%s700 + $0x1c] sm:$0xf]
        %v709 = vld [vmem:[%s700 + $0x20] sm:$0xf]
        %v710 = vld [vmem:[%s700 + $0x24] sm:$0xf]
        %v711 = vld [vmem:[%s700 + $0x28] sm:$0xf]
        %v712 = vld [vmem:[%s700 + $0x2c] sm:$0xf]
        %v713 = vld [vmem:[%s700 + $0x30] sm:$0xf]
        %v714 = vld [vmem:[%s700 + $0x34] sm:$0xf]
        %v715 = vld [vmem:[%s700 + $0x38] sm:$0xf]
        %v716 = vld [vmem:[%s700 + $0x3c] sm:$0xf]
        %v733 = vunpack.c.l.b16 %v701
        %v734 = vunpack.c.l.b16 %v702
        %v735 = vunpack.c.l.b16 %v703
        %v736 = vunpack.c.l.b16 %v704
        %v737 = vunpack.c.l.b16 %v705
        %v738 = vunpack.c.l.b16 %v706
        %v739 = vunpack.c.l.b16 %v707
        %v740 = vunpack.c.l.b16 %v708
        %v741 = vunpack.c.l.b16 %v709
        %v742 = vunpack.c.l.b16 %v710
        %v743 = vunpack.c.l.b16 %v711
        %v744 = vunpack.c.l.b16 %v712
        %v745 = vunpack.c.l.b16 %v713
        %v746 = vunpack.c.l.b16 %v714
        %v747 = vunpack.c.l.b16 %v715
        %v748 = vunpack.c.l.b16 %v716
        %v749 = vpack.c.b16 %v734, %v733
        %v750 = vpack.c.b16 %v736, %v735
        %v751 = vpack.c.b16 %v738, %v737
        %v752 = vpack.c.b16 %v740, %v739
        %v753 = vpack.c.b16 %v742, %v741
        %v754 = vpack.c.b16 %v744, %v743
        %v755 = vpack.c.b16 %v746, %v745
        %v756 = vpack.c.b16 %v748, %v747
        %765 = vmatpush.bf16.msra.mxu0 %v756
        %766 = vmatpush.bf16.msra.mxu0 %v755
        %767 = vmatpush.bf16.msra.mxu0 %v754
        %768 = vmatpush.bf16.msra.mxu0 %v753
        %769 = vmatpush.bf16.msra.mxu0 %v752
        %770 = vmatpush.bf16.msra.mxu0 %v751
        %771 = vmatpush.bf16.msra.mxu0 %v750
        %772 = vmatpush.bf16.msra.mxu0 %v749
        %773 = vmatmul.bf16.gmra.mxu0 %v699
        %v774 = vpop.f32.mrf.mxu0
        %v775 = vadd.f32 0.0, %v774
        %v776 = vpop.f32.mrf.mxu0
        %777 = vdwg.mxu0
        %v778 = vadd.f32 %v694, %v775
        %s779 = sadd.s32 %s696, 18
        %s780 = smul.addr %s779, 4
        %s781 = scalar_lea.vmem %s165, %s780
        %v782 = vld [vmem:[%s781] sm:$0xf]
        %s783 = scalar_lea.vmem %s1, 448
        %v784 = vld [vmem:[%s783] sm:$0xf]
        %v785 = vld [vmem:[%s783 + $0x4] sm:$0xf]
        %v786 = vld [vmem:[%s783 + $0x8] sm:$0xf]
        %v787 = vld [vmem:[%s783 + $0xc] sm:$0xf]
        %v788 = vld [vmem:[%s783 + $0x10] sm:$0xf]
        %v789 = vld [vmem:[%s783 + $0x14] sm:$0xf]
        %v790 = vld [vmem:[%s783 + $0x18] sm:$0xf]
        %v791 = vld [vmem:[%s783 + $0x1c] sm:$0xf]
        %v792 = vld [vmem:[%s783 + $0x20] sm:$0xf]
        %v793 = vld [vmem:[%s783 + $0x24] sm:$0xf]
        %v794 = vld [vmem:[%s783 + $0x28] sm:$0xf]
        %v795 = vld [vmem:[%s783 + $0x2c] sm:$0xf]
        %v796 = vld [vmem:[%s783 + $0x30] sm:$0xf]
        %v797 = vld [vmem:[%s783 + $0x34] sm:$0xf]
        %v798 = vld [vmem:[%s783 + $0x38] sm:$0xf]
        %v799 = vld [vmem:[%s783 + $0x3c] sm:$0xf]
        %v816 = vunpack.c.l.b16 %v784
        %v817 = vunpack.c.l.b16 %v785
        %v818 = vunpack.c.l.b16 %v786
        %v819 = vunpack.c.l.b16 %v787
        %v820 = vunpack.c.l.b16 %v788
        %v821 = vunpack.c.l.b16 %v789
        %v822 = vunpack.c.l.b16 %v790
        %v823 = vunpack.c.l.b16 %v791
        %v824 = vunpack.c.l.b16 %v792
        %v825 = vunpack.c.l.b16 %v793
        %v826 = vunpack.c.l.b16 %v794
        %v827 = vunpack.c.l.b16 %v795
        %v828 = vunpack.c.l.b16 %v796
        %v829 = vunpack.c.l.b16 %v797
        %v830 = vunpack.c.l.b16 %v798
        %v831 = vunpack.c.l.b16 %v799
        %v832 = vpack.c.b16 %v817, %v816
        %v833 = vpack.c.b16 %v819, %v818
        %v834 = vpack.c.b16 %v821, %v820
        %v835 = vpack.c.b16 %v823, %v822
        %v836 = vpack.c.b16 %v825, %v824
        %v837 = vpack.c.b16 %v827, %v826
        %v838 = vpack.c.b16 %v829, %v828
        %v839 = vpack.c.b16 %v831, %v830
        %848 = vmatpush.bf16.msra.mxu0 %v839
        %849 = vmatpush.bf16.msra.mxu0 %v838
        %850 = vmatpush.bf16.msra.mxu0 %v837
        %851 = vmatpush.bf16.msra.mxu0 %v836
        %852 = vmatpush.bf16.msra.mxu0 %v835
        %853 = vmatpush.bf16.msra.mxu0 %v834
        %854 = vmatpush.bf16.msra.mxu0 %v833
        %855 = vmatpush.bf16.msra.mxu0 %v832
        %856 = vmatmul.bf16.gmra.mxu0 %v782
        %v857 = vpop.f32.mrf.mxu0
        %v858 = vadd.f32 0.0, %v857
        %v859 = vpop.f32.mrf.mxu0
        %860 = vdwg.mxu0
        %v861 = vadd.f32 %v778, %v858
        %v862 = vld [vmem:[%s698] sm:$0xf]
        %v863 = vld [vmem:[%s698 + $0x4] sm:$0x1]
        %s864 = scalar_lea.vmem %s1, 512
        %v865 = vld [vmem:[%s864] sm:$0xf]
        %v866 = vld [vmem:[%s864 + $0x4] sm:$0xf]
        %v867 = vld [vmem:[%s864 + $0x8] sm:$0xf]
        %v868 = vld [vmem:[%s864 + $0xc] sm:$0xf]
        %v869 = vld [vmem:[%s864 + $0x10] sm:$0xf]
        %v870 = vld [vmem:[%s864 + $0x14] sm:$0xf]
        %v871 = vld [vmem:[%s864 + $0x18] sm:$0xf]
        %v872 = vld [vmem:[%s864 + $0x1c] sm:$0xf]
        %v873 = vld [vmem:[%s864 + $0x20] sm:$0xf]
        %v874 = vld [vmem:[%s864 + $0x24] sm:$0xf]
        %v875 = vld [vmem:[%s864 + $0x28] sm:$0xf]
        %v876 = vld [vmem:[%s864 + $0x2c] sm:$0xf]
        %v877 = vld [vmem:[%s864 + $0x30] sm:$0xf]
        %v878 = vld [vmem:[%s864 + $0x34] sm:$0xf]
        %v879 = vld [vmem:[%s864 + $0x38] sm:$0xf]
        %v880 = vld [vmem:[%s864 + $0x3c] sm:$0xf]
        %v883 = vunpack.c.l.b16 %v862
        %v884 = vunpack.c.l.b16 %v863
        %v885 = vpack.c.b16 %v884, %v883
        %v887 = vshrl.u32 %v885, 16
        %v889 = vshll.u32 %v885, 16
        %v891 = vrot.slane %v889, 1
        %v892 = vor.u32 %v887, %v891
        %v910 = vunpack.c.l.b16 %v865
        %v911 = vunpack.c.l.b16 %v866
        %v912 = vunpack.c.l.b16 %v867
        %v913 = vunpack.c.l.b16 %v868
        %v914 = vunpack.c.l.b16 %v869
        %v915 = vunpack.c.l.b16 %v870
        %v916 = vunpack.c.l.b16 %v871
        %v917 = vunpack.c.l.b16 %v872
        %v918 = vunpack.c.l.b16 %v873
        %v919 = vunpack.c.l.b16 %v874
        %v920 = vunpack.c.l.b16 %v875
        %v921 = vunpack.c.l.b16 %v876
        %v922 = vunpack.c.l.b16 %v877
        %v923 = vunpack.c.l.b16 %v878
        %v924 = vunpack.c.l.b16 %v879
        %v925 = vunpack.c.l.b16 %v880
        %v926 = vpack.c.b16 %v911, %v910
        %v927 = vpack.c.b16 %v913, %v912
        %v928 = vpack.c.b16 %v915, %v914
        %v929 = vpack.c.b16 %v917, %v916
        %v930 = vpack.c.b16 %v919, %v918
        %v931 = vpack.c.b16 %v921, %v920
        %v932 = vpack.c.b16 %v923, %v922
        %v933 = vpack.c.b16 %v925, %v924
        %942 = vmatpush.bf16.msra.mxu0 %v933
        %943 = vmatpush.bf16.msra.mxu0 %v932
        %944 = vmatpush.bf16.msra.mxu0 %v931
        %945 = vmatpush.bf16.msra.mxu0 %v930
        %946 = vmatpush.bf16.msra.mxu0 %v929
        %947 = vmatpush.bf16.msra.mxu0 %v928
        %948 = vmatpush.bf16.msra.mxu0 %v927
        %949 = vmatpush.bf16.msra.mxu0 %v926
        %950 = vmatmul.bf16.gmra.mxu0 %v892
        %v951 = vpop.f32.mrf.mxu0
        %v952 = vadd.f32 0.0, %v951
        %v953 = vpop.f32.mrf.mxu0
        %954 = vdwg.mxu0
        %v955 = vadd.f32 %v861, %v952
        %v957 = vperm.slane %v171, 0
        %v959 = vadd.f32 %v955, %v957
        %v960 = vsub.f32 0.0, %v959
        %v961 = vmul.f32 %v960, 1.442695
        %v962 = vpow.pop %v961
        %v963 = vadd.f32 %v962, 1.0
        %v964 = vrcp.pop %v963
        %v965 = vmul.f32 %v959, %v964
        %v966 = vpack.c.bf16 %v965, %v965
        %s967 = smul.addr %s173, 4
        %s968 = scalar_lea.vmem %s170, %s967
        %969 = vst [vmem:[%s968] sm:$0xf] %v966
      $region37: #{yolov11_backbone.7} parent=31 // loop_footer
        %s177 = sadd.s32 1, %s173
      $region38: #{yolov11_backbone.7} parent=31 // loop_footer_branch
        %172 = sbr.rel target = $region34
      $region39: #{yolov11_backbone.7} parent=31 // loop_exit
        _
      %p970 = scmp.lt.s32.totalorder %s14, 1
      %s971 = scalar_select %p970, %s14, 1
      %s972 = smul.addr %s971, 8
      %s973 = smul.addr %s972, 4
      %s974 = scalar_lea.vmem %s3, %s973
      // Predicated region
      $region40: #{yolov11_backbone.7} parent=31 // pred_check
        %p975 = pneg %p100
      $region41: #{yolov11_backbone.7} parent=31 // pred_check_branch
        %977 = sbr.rel (%p975) target = $region43
      $region42: #{yolov11_backbone.7} parent=31 // pred_region
        _
      $region43: #{yolov11_backbone.7} parent=31 // pred_fallthru
        _
    $region32: #{yolov11_backbone.7} parent=5 // pred_fallthru
      _
    %p978 = scmp.le.s32.totalorder 2, %s9
    // Predicated region
    $region44: #{yolov11_backbone.7} parent=5 // pred_check
      %p979 = pneg %p978
    $region45: #{yolov11_backbone.7} parent=5 // pred_check_branch
      %981 = sbr.rel (%p979) target = $region47
    $region46: #{yolov11_backbone.7} parent=5 // pred_region
      %s982 = ssub.s32 %s9, 2
      // Predicated region
      $region48: #{yolov11_backbone.7} parent=46 // pred_check
        %p983 = pneg %p106
      $region49: #{yolov11_backbone.7} parent=46 // pred_check_branch
        %985 = sbr.rel (%p983) target = $region51
      $region50: #{yolov11_backbone.7} parent=46 // pred_region
        %p986 = scmp.lt.s32.totalorder %s15, 1
        %s987 = scalar_select %p986, %s15, 1
        %s988 = smul.addr %s987, 8
        %s989 = smul.addr %s988, 4
        %s990 = scalar_lea.vmem %s3, %s989
      $region51: #{yolov11_backbone.7} parent=46 // pred_fallthru
        _
    $region47: #{yolov11_backbone.7} parent=5 // pred_fallthru
      _
  $region6: #{yolov11_backbone.7} parent=0 // loop_footer
    %s13 = sadd.s32 1, %s9
  $region7: #{yolov11_backbone.7} parent=0 // loop_footer_branch
    %8 = sbr.rel target = $region3
  $region8: #{yolov11_backbone.7} parent=0 // loop_exit
    _

// kernel: yolov11_backbone.8
$region0: #{yolov11_backbone.8}
  #allocation0 [shape = 'u32[]', space=smem, size = 0x4, offset = 0x4, fixed_abs, tag = 'smem constant byte address 0x4 - core index']
  #allocation1 [shape = 'u32[72,128]{1,0:T(1,128)}', space=vmem, size = 0x9000, scoped, tag = 'internal scratch']
  %s0 = inlined_call_operand.vmem [shape: bf16[2,4,5,5,128], index: 0, kind: input, shape index: {}]
  %s1 = inlined_call_operand.vmem [shape: bf16[9,128,128], index: 1, kind: input, shape index: {}]
  %s2 = inlined_call_operand.vmem [shape: f32[1,128], index: 2, kind: input, shape index: {}]
  %s3 = inlined_call_operand.vmem [shape: bf16[128,128], index: 3, kind: input, shape index: {}]
  %s4 = inlined_call_operand.vmem [shape: f32[1,128], index: 4, kind: input, shape index: {}]
  %s5 = inlined_call_operand.vmem [shape: bf16[2,4,4,128], index: 5, kind: output, shape index: {}]
  %s6 = sld [smem:[#allocation0]]
  $region60: #{yolov11_backbone.8} parent=0
    _
  %s8 = ssub.s32 1, %s6
  %s9 = scalar_select 0, %s8, %s6
  loop: start=0, step=1, limit=4
  $region2: #{yolov11_backbone.8} parent=0 // loop_pre_header
    _
  $region3: #{yolov11_backbone.8} parent=0 // loop_header
    %s11 = sphi 0, %s15
    %p12 = scmp.ge.s32.totalorder %s11, 4
    %s21 = sphi 0, %s23
    %s24 = sphi 0, %s21
    %s25 = sphi 0, %s24
    %s41 = sphi 0, %s25
    %s45 = sphi 0, %s45
    %s47 = sphi 0, %s45
    %s48 = sphi 0, %s47
    %s62 = sphi 0, %s48
    %s66 = sphi 0, %s66
    %s68 = sphi 0, %s66
    %s69 = sphi 0, %s68
    %s83 = sphi 0, %s69
    %s87 = sphi 0, %s87
    %s89 = sphi 0, %s87
    %s90 = sphi 0, %s89
    %s104 = sphi 0, %s90
    %s108 = sphi 0, %s108
    %s110 = sphi 0, %s108
    %s111 = sphi 0, %s110
    %s125 = sphi 0, %s111
    %s131 = sphi 0, %s133
    %s134 = sphi 0, %s131
    %s135 = sphi 0, %s134
    %s151 = sphi 0, %s135
  $region4: #{yolov11_backbone.8} parent=0 // loop_header_branch
    %14 = sbr.rel (%p12) target = $region8
  $region5: #{yolov11_backbone.8} parent=0 // loop_body
    %s16 = ssub.s32 %s11, 1
    %s17 = ssub.s32 %s11, 2
    %s18 = sadd.s32 %s11, 1
    %s19 = ssub.s32 %s11, %s18
    %p20 = scmp.eq.s32.totalorder %s19, 0
    %s22 = sadd.s32 %s21, 1
    %s23 = scalar_select %p20, %s21, %s22
    %p26 = pneg %p20
    %p27 = scmp.eq.s32.totalorder %s11, 1
    %p28 = por %p26, %p27
    %p29 = scmp.ne.s32.totalorder %s21, %s24
    %p30 = scmp.eq.s32.totalorder %s11, 0
    %p31 = por %p29, %p30
    %p32 = scmp.ne.s32.totalorder %s21, %s24
    %p33 = scmp.eq.s32.totalorder %s16, 1
    %p34 = por %p32, %p33
    %p35 = scmp.ne.s32.totalorder %s24, %s25
    %p36 = scmp.eq.s32.totalorder %s16, 0
    %p37 = por %p35, %p36
    %p38 = scmp.ne.s32.totalorder %s24, %s25
    %p39 = scmp.eq.s32.totalorder %s17, 1
    %p40 = por %p38, %p39
    %p42 = scmp.ne.s32.totalorder %s25, %s41
    %p43 = scmp.eq.s32.totalorder %s17, 0
    %p44 = por %p42, %p43
    %s46 = sadd.s32 %s45, 1
    %p49 = scmp.eq.s32.totalorder %s11, 1
    %p50 = scmp.ne.s32.totalorder %s45, %s47
    %p51 = scmp.eq.s32.totalorder %s11, 0
    %p52 = por %p50, %p51
    %p53 = scmp.ne.s32.totalorder %s45, %s47
    %p54 = scmp.eq.s32.totalorder %s16, 1
    %p55 = por %p53, %p54
    %p56 = scmp.ne.s32.totalorder %s47, %s48
    %p57 = scmp.eq.s32.totalorder %s16, 0
    %p58 = por %p56, %p57
    %p59 = scmp.ne.s32.totalorder %s47, %s48
    %p60 = scmp.eq.s32.totalorder %s17, 1
    %p61 = por %p59, %p60
    %p63 = scmp.ne.s32.totalorder %s48, %s62
    %p64 = scmp.eq.s32.totalorder %s17, 0
    %p65 = por %p63, %p64
    %s67 = sadd.s32 %s66, 1
    %p70 = scmp.eq.s32.totalorder %s11, 1
    %p71 = scmp.ne.s32.totalorder %s66, %s68
    %p72 = scmp.eq.s32.totalorder %s11, 0
    %p73 = por %p71, %p72
    %p74 = scmp.ne.s32.totalorder %s66, %s68
    %p75 = scmp.eq.s32.totalorder %s16, 1
    %p76 = por %p74, %p75
    %p77 = scmp.ne.s32.totalorder %s68, %s69
    %p78 = scmp.eq.s32.totalorder %s16, 0
    %p79 = por %p77, %p78
    %p80 = scmp.ne.s32.totalorder %s68, %s69
    %p81 = scmp.eq.s32.totalorder %s17, 1
    %p82 = por %p80, %p81
    %p84 = scmp.ne.s32.totalorder %s69, %s83
    %p85 = scmp.eq.s32.totalorder %s17, 0
    %p86 = por %p84, %p85
    %s88 = sadd.s32 %s87, 1
    %p91 = scmp.eq.s32.totalorder %s11, 1
    %p92 = scmp.ne.s32.totalorder %s87, %s89
    %p93 = scmp.eq.s32.totalorder %s11, 0
    %p94 = por %p92, %p93
    %p95 = scmp.ne.s32.totalorder %s87, %s89
    %p96 = scmp.eq.s32.totalorder %s16, 1
    %p97 = por %p95, %p96
    %p98 = scmp.ne.s32.totalorder %s89, %s90
    %p99 = scmp.eq.s32.totalorder %s16, 0
    %p100 = por %p98, %p99
    %p101 = scmp.ne.s32.totalorder %s89, %s90
    %p102 = scmp.eq.s32.totalorder %s17, 1
    %p103 = por %p101, %p102
    %p105 = scmp.ne.s32.totalorder %s90, %s104
    %p106 = scmp.eq.s32.totalorder %s17, 0
    %p107 = por %p105, %p106
    %s109 = sadd.s32 %s108, 1
    %p112 = scmp.eq.s32.totalorder %s11, 1
    %p113 = scmp.ne.s32.totalorder %s108, %s110
    %p114 = scmp.eq.s32.totalorder %s11, 0
    %p115 = por %p113, %p114
    %p116 = scmp.ne.s32.totalorder %s108, %s110
    %p117 = scmp.eq.s32.totalorder %s16, 1
    %p118 = por %p116, %p117
    %p119 = scmp.ne.s32.totalorder %s110, %s111
    %p120 = scmp.eq.s32.totalorder %s16, 0
    %p121 = por %p119, %p120
    %p122 = scmp.ne.s32.totalorder %s110, %s111
    %p123 = scmp.eq.s32.totalorder %s17, 1
    %p124 = por %p122, %p123
    %p126 = scmp.ne.s32.totalorder %s111, %s125
    %p127 = scmp.eq.s32.totalorder %s17, 0
    %p128 = por %p126, %p127
    %s129 = ssub.s32 %s11, %s18
    %p130 = scmp.eq.s32.totalorder %s129, 0
    %s132 = sadd.s32 %s131, 1
    %s133 = scalar_select %p130, %s131, %s132
    %p136 = pneg %p130
    %p137 = scmp.eq.s32.totalorder %s11, 1
    %p138 = por %p136, %p137
    %p139 = scmp.ne.s32.totalorder %s131, %s134
    %p140 = scmp.eq.s32.totalorder %s11, 0
    %p141 = por %p139, %p140
    %p142 = scmp.ne.s32.totalorder %s131, %s134
    %p143 = scmp.eq.s32.totalorder %s16, 1
    %p144 = por %p142, %p143
    %p145 = scmp.ne.s32.totalorder %s134, %s135
    %p146 = scmp.eq.s32.totalorder %s16, 0
    %p147 = por %p145, %p146
    %p148 = scmp.ne.s32.totalorder %s134, %s135
    %p149 = scmp.eq.s32.totalorder %s17, 1
    %p150 = por %p148, %p149
    %p152 = scmp.ne.s32.totalorder %s135, %s151
    %p153 = scmp.eq.s32.totalorder %s17, 0
    %p154 = por %p152, %p153
    %p155 = scmp.le.s32.totalorder 1, %s11
    %p156 = scmp.lt.s32.totalorder %s11, 3
    %p157 = pnand %p155, %p156
    %p158 = pneg %p157
    // Predicated region
    $region9: #{yolov11_backbone.8} parent=5 // pred_check
      _
    $region10: #{yolov11_backbone.8} parent=5 // pred_check_branch
      %160 = sbr.rel (%p157) target = $region12
    $region11: #{yolov11_backbone.8} parent=5 // pred_region
      %s161 = ssub.s32 %s11, 1
      // Predicated region
      $region13: #{yolov11_backbone.8} parent=11 // pred_check
        %p162 = pneg %p58
      $region14: #{yolov11_backbone.8} parent=11 // pred_check_branch
        %164 = sbr.rel (%p162) target = $region16
      $region15: #{yolov11_backbone.8} parent=11 // pred_region
        _
      $region16: #{yolov11_backbone.8} parent=11 // pred_fallthru
        _
      // Predicated region
      $region17: #{yolov11_backbone.8} parent=11 // pred_check
        %p165 = pneg %p79
      $region18: #{yolov11_backbone.8} parent=11 // pred_check_branch
        %167 = sbr.rel (%p165) target = $region20
      $region19: #{yolov11_backbone.8} parent=11 // pred_region
        _
      $region20: #{yolov11_backbone.8} parent=11 // pred_fallthru
        _
      // Predicated region
      $region21: #{yolov11_backbone.8} parent=11 // pred_check
        %p168 = pneg %p100
      $region22: #{yolov11_backbone.8} parent=11 // pred_check_branch
        %170 = sbr.rel (%p168) target = $region24
      $region23: #{yolov11_backbone.8} parent=11 // pred_region
        _
      $region24: #{yolov11_backbone.8} parent=11 // pred_fallthru
        _
      // Predicated region
      $region25: #{yolov11_backbone.8} parent=11 // pred_check
        %p171 = pneg %p121
      $region26: #{yolov11_backbone.8} parent=11 // pred_check_branch
        %173 = sbr.rel (%p171) target = $region28
      $region27: #{yolov11_backbone.8} parent=11 // pred_region
        _
      $region28: #{yolov11_backbone.8} parent=11 // pred_fallthru
        _
    $region12: #{yolov11_backbone.8} parent=5 // pred_fallthru
      _
    %p174 = scmp.lt.s32.totalorder %s11, 2
    // Predicated region
    $region29: #{yolov11_backbone.8} parent=5 // pred_check
      %p175 = pneg %p174
    $region30: #{yolov11_backbone.8} parent=5 // pred_check_branch
      %177 = sbr.rel (%p175) target = $region32
    $region31: #{yolov11_backbone.8} parent=5 // pred_region
      // Predicated region
      $region33: #{yolov11_backbone.8} parent=31 // pred_check
        %p178 = pneg %p31
      $region34: #{yolov11_backbone.8} parent=31 // pred_check_branch
        %180 = sbr.rel (%p178) target = $region36
      $region35: #{yolov11_backbone.8} parent=31 // pred_region
        %p181 = scmp.lt.s32.totalorder %s11, 1
        %s182 = scalar_select %p181, %s11, 1
        %s183 = smul.addr %s182, 20
        %s184 = smul.addr %s183, 4
        %s185 = scalar_lea.vmem %s0, %s184
      $region36: #{yolov11_backbone.8} parent=31 // pred_fallthru
        _
    $region32: #{yolov11_backbone.8} parent=5 // pred_fallthru
      _
    %p186 = scmp.le.s32.totalorder 1, %s11
    %p187 = scmp.lt.s32.totalorder %s11, 3
    %p188 = pnand %p186, %p187
    %p189 = pneg %p188
    // Predicated region
    $region37: #{yolov11_backbone.8} parent=5 // pred_check
      _
    $region38: #{yolov11_backbone.8} parent=5 // pred_check_branch
      %191 = sbr.rel (%p188) target = $region40
    $region39: #{yolov11_backbone.8} parent=5 // pred_region
      %s192 = ssub.s32 %s11, 1
      %p193 = scmp.lt.s32.totalorder %s16, 1
      %s194 = scalar_select %p193, %s16, 1
      %s195 = smul.addr %s194, 20
      %s196 = smul.addr %s195, 4
      %s197 = scalar_lea.vmem %s0, %s196
      %p198 = pneg %p37
      %p199 = pneg %p34
      %p200 = pneg %p58
      %p201 = pneg %p55
      %p202 = pneg %p79
      %p203 = pneg %p76
      %p204 = pneg %p100
      %p205 = pneg %p97
      %p206 = pneg %p121
      %p207 = pneg %p118
      %p208 = pneg %p147
      %p209 = pneg %p144
      %p210 = scmp.lt.s32.totalorder %s16, 1
      %s211 = scalar_select %p210, %s16, 1
      %s212 = smul.addr %s211, 4
      %s213 = smul.addr %s212, 2
      %s214 = scalar_lea.vmem %s5, %s213
      %p215 = scmp.lt.s32.totalorder %s16, 1
      %s216 = scalar_select %p215, %s16, 1
      %s217 = smul.addr %s216, 20
      %s218 = smul.addr %s217, 4
      %s219 = scalar_lea.vmem %s0, %s218
      %p220 = scmp.lt.s32.totalorder %s16, 1
      %s221 = scalar_select %p220, %s16, 1
      %s222 = smul.addr %s221, 4
      %s223 = smul.addr %s222, 2
      %s224 = scalar_lea.vmem %s5, %s223
      %v225 = vld [vmem:[%s2] sm:$0x1]
      %v226 = vld [vmem:[%s4] sm:$0x1]
      loop: start=0, step=1, limit=4
      $region41: #{yolov11_backbone.8} parent=39 // loop_pre_header
        _
      $region42: #{yolov11_backbone.8} parent=39 // loop_header
        %s228 = sphi 0, %s232
        %p229 = scmp.ge.s32.totalorder %s228, 4
      $region43: #{yolov11_backbone.8} parent=39 // loop_header_branch
        %231 = sbr.rel (%p229) target = $region47
      $region44: #{yolov11_backbone.8} parent=39 // loop_body
        %s233 = smul.addr %s228, 4
        %s234 = scalar_lea.vmem %s219, %s233
        %v235 = vld [vmem:[%s234] sm:$0x3]
        %v236 = vld [vmem:[%s1] sm:$0xf]
        %v237 = vld [vmem:[%s1 + $0x4] sm:$0xf]
        %v238 = vld [vmem:[%s1 + $0x8] sm:$0xf]
        %v239 = vld [vmem:[%s1 + $0xc] sm:$0xf]
        %v240 = vld [vmem:[%s1 + $0x10] sm:$0xf]
        %v241 = vld [vmem:[%s1 + $0x14] sm:$0xf]
        %v242 = vld [vmem:[%s1 + $0x18] sm:$0xf]
        %v243 = vld [vmem:[%s1 + $0x1c] sm:$0xf]
        %v244 = vld [vmem:[%s1 + $0x20] sm:$0xf]
        %v245 = vld [vmem:[%s1 + $0x24] sm:$0xf]
        %v246 = vld [vmem:[%s1 + $0x28] sm:$0xf]
        %v247 = vld [vmem:[%s1 + $0x2c] sm:$0xf]
        %v248 = vld [vmem:[%s1 + $0x30] sm:$0xf]
        %v249 = vld [vmem:[%s1 + $0x34] sm:$0xf]
        %v250 = vld [vmem:[%s1 + $0x38] sm:$0xf]
        %v251 = vld [vmem:[%s1 + $0x3c] sm:$0xf]
        %s252 = sadd.s32 %s228, 5
        %s253 = smul.addr %s252, 4
        %s254 = scalar_lea.vmem %s219, %s253
        %v255 = vld [vmem:[%s254] sm:$0x3]
        %s256 = scalar_lea.vmem %s1, 64
        %v257 = vld [vmem:[%s256] sm:$0xf]
        %v258 = vld [vmem:[%s256 + $0x4] sm:$0xf]
        %v259 = vld [vmem:[%s256 + $0x8] sm:$0xf]
        %v260 = vld [vmem:[%s256 + $0xc] sm:$0xf]
        %v261 = vld [vmem:[%s256 + $0x10] sm:$0xf]
        %v262 = vld [vmem:[%s256 + $0x14] sm:$0xf]
        %v263 = vld [vmem:[%s256 + $0x18] sm:$0xf]
        %v264 = vld [vmem:[%s256 + $0x1c] sm:$0xf]
        %v265 = vld [vmem:[%s256 + $0x20] sm:$0xf]
        %v266 = vld [vmem:[%s256 + $0x24] sm:$0xf]
        %v267 = vld [vmem:[%s256 + $0x28] sm:$0xf]
        %v268 = vld [vmem:[%s256 + $0x2c] sm:$0xf]
        %v269 = vld [vmem:[%s256 + $0x30] sm:$0xf]
        %v270 = vld [vmem:[%s256 + $0x34] sm:$0xf]
        %v271 = vld [vmem:[%s256 + $0x38] sm:$0xf]
        %v272 = vld [vmem:[%s256 + $0x3c] sm:$0xf]
        %v289 = vunpack.c.l.b16 %v257
        %v290 = vunpack.c.l.b16 %v258
        %v291 = vunpack.c.l.b16 %v259
        %v292 = vunpack.c.l.b16 %v260
        %v293 = vunpack.c.l.b16 %v261
        %v294 = vunpack.c.l.b16 %v262
        %v295 = vunpack.c.l.b16 %v263
        %v296 = vunpack.c.l.b16 %v264
        %v297 = vunpack.c.l.b16 %v265
        %v298 = vunpack.c.l.b16 %v266
        %v299 = vunpack.c.l.b16 %v267
        %v300 = vunpack.c.l.b16 %v268
        %v301 = vunpack.c.l.b16 %v269
        %v302 = vunpack.c.l.b16 %v270
        %v303 = vunpack.c.l.b16 %v271
        %v304 = vunpack.c.l.b16 %v272
        %v305 = vpack.c.b16 %v290, %v289
        %v306 = vpack.c.b16 %v292, %v291
        %v307 = vpack.c.b16 %v294, %v293
        %v308 = vpack.c.b16 %v296, %v295
        %v309 = vpack.c.b16 %v298, %v297
        %v310 = vpack.c.b16 %v300, %v299
        %v311 = vpack.c.b16 %v302, %v301
        %v312 = vpack.c.b16 %v304, %v303
        %321 = vmatpush.bf16.msra.mxu0 %v312
        %322 = vmatpush.bf16.msra.mxu0 %v311
        %323 = vmatpush.bf16.msra.mxu0 %v310
        %324 = vmatpush.bf16.msra.mxu0 %v309
        %325 = vmatpush.bf16.msra.mxu0 %v308
        %326 = vmatpush.bf16.msra.mxu0 %v307
        %327 = vmatpush.bf16.msra.mxu0 %v306
        %328 = vmatpush.bf16.msra.mxu0 %v305
        %329 = vmatmul.bf16.gmra.mxu0 %v255
        %v330 = vpop.f32.mrf.mxu0
        %v331 = vadd.f32 0.0, %v330
        %v332 = vpop.f32.mrf.mxu0
        %333 = vdwg.mxu0
        %v350 = vunpack.c.l.b16 %v236
        %v351 = vunpack.c.l.b16 %v237
        %v352 = vunpack.c.l.b16 %v238
        %v353 = vunpack.c.l.b16 %v239
        %v354 = vunpack.c.l.b16 %v240
        %v355 = vunpack.c.l.b16 %v241
        %v356 = vunpack.c.l.b16 %v242
        %v357 = vunpack.c.l.b16 %v243
        %v358 = vunpack.c.l.b16 %v244
        %v359 = vunpack.c.l.b16 %v245
        %v360 = vunpack.c.l.b16 %v246
        %v361 = vunpack.c.l.b16 %v247
        %v362 = vunpack.c.l.b16 %v248
        %v363 = vunpack.c.l.b16 %v249
        %v364 = vunpack.c.l.b16 %v250
        %v365 = vunpack.c.l.b16 %v251
        %v366 = vpack.c.b16 %v351, %v350
        %v367 = vpack.c.b16 %v353, %v352
        %v368 = vpack.c.b16 %v355, %v354
        %v369 = vpack.c.b16 %v357, %v356
        %v370 = vpack.c.b16 %v359, %v358
        %v371 = vpack.c.b16 %v361, %v360
        %v372 = vpack.c.b16 %v363, %v362
        %v373 = vpack.c.b16 %v365, %v364
        %382 = vmatpush.bf16.msra.mxu0 %v373
        %383 = vmatpush.bf16.msra.mxu0 %v372
        %384 = vmatpush.bf16.msra.mxu0 %v371
        %385 = vmatpush.bf16.msra.mxu0 %v370
        %386 = vmatpush.bf16.msra.mxu0 %v369
        %387 = vmatpush.bf16.msra.mxu0 %v368
        %388 = vmatpush.bf16.msra.mxu0 %v367
        %389 = vmatpush.bf16.msra.mxu0 %v366
        %390 = vmatmul.bf16.gmra.mxu0 %v235
        %v391 = vpop.f32.mrf.mxu0
        %v392 = vadd.f32 %v331, %v391
        %v393 = vpop.f32.mrf.mxu0
        %394 = vdwg.mxu0
        %v395 = vld [vmem:[%s234] sm:$0x7]
        %s396 = scalar_lea.vmem %s1, 128
        %v397 = vld [vmem:[%s396] sm:$0xf]
        %v398 = vld [vmem:[%s396 + $0x4] sm:$0xf]
        %v399 = vld [vmem:[%s396 + $0x8] sm:$0xf]
        %v400 = vld [vmem:[%s396 + $0xc] sm:$0xf]
        %v401 = vld [vmem:[%s396 + $0x10] sm:$0xf]
        %v402 = vld [vmem:[%s396 + $0x14] sm:$0xf]
        %v403 = vld [vmem:[%s396 + $0x18] sm:$0xf]
        %v404 = vld [vmem:[%s396 + $0x1c] sm:$0xf]
        %v405 = vld [vmem:[%s396 + $0x20] sm:$0xf]
        %v406 = vld [vmem:[%s396 + $0x24] sm:$0xf]
        %v407 = vld [vmem:[%s396 + $0x28] sm:$0xf]
        %v408 = vld [vmem:[%s396 + $0x2c] sm:$0xf]
        %v409 = vld [vmem:[%s396 + $0x30] sm:$0xf]
        %v410 = vld [vmem:[%s396 + $0x34] sm:$0xf]
        %v411 = vld [vmem:[%s396 + $0x38] sm:$0xf]
        %v412 = vld [vmem:[%s396 + $0x3c] sm:$0xf]
        %v414 = vunpack.c.l.b16 %v395
        %v415 = vpack.c.b16 %v414, %v414
        %v417 = vshrl.u32 %v415, 16
        %v419 = vshll.u32 %v415, 16
        %v421 = vrot.slane %v419, 1
        %v422 = vor.u32 %v417, %v421
        %v440 = vunpack.c.l.b16 %v397
        %v441 = vunpack.c.l.b16 %v398
        %v442 = vunpack.c.l.b16 %v399
        %v443 = vunpack.c.l.b16 %v400
        %v444 = vunpack.c.l.b16 %v401
        %v445 = vunpack.c.l.b16 %v402
        %v446 = vunpack.c.l.b16 %v403
        %v447 = vunpack.c.l.b16 %v404
        %v448 = vunpack.c.l.b16 %v405
        %v449 = vunpack.c.l.b16 %v406
        %v450 = vunpack.c.l.b16 %v407
        %v451 = vunpack.c.l.b16 %v408
        %v452 = vunpack.c.l.b16 %v409
        %v453 = vunpack.c.l.b16 %v410
        %v454 = vunpack.c.l.b16 %v411
        %v455 = vunpack.c.l.b16 %v412
        %v456 = vpack.c.b16 %v441, %v440
        %v457 = vpack.c.b16 %v443, %v442
        %v458 = vpack.c.b16 %v445, %v444
        %v459 = vpack.c.b16 %v447, %v446
        %v460 = vpack.c.b16 %v449, %v448
        %v461 = vpack.c.b16 %v451, %v450
        %v462 = vpack.c.b16 %v453, %v452
        %v463 = vpack.c.b16 %v455, %v454
        %472 = vmatpush.bf16.msra.mxu0 %v463
        %473 = vmatpush.bf16.msra.mxu0 %v462
        %474 = vmatpush.bf16.msra.mxu0 %v461
        %475 = vmatpush.bf16.msra.mxu0 %v460
        %476 = vmatpush.bf16.msra.mxu0 %v459
        %477 = vmatpush.bf16.msra.mxu0 %v458
        %478 = vmatpush.bf16.msra.mxu0 %v457
        %479 = vmatpush.bf16.msra.mxu0 %v456
        %480 = vmatmul.bf16.gmra.mxu0 %v422
        %v481 = vpop.f32.mrf.mxu0
        %v482 = vadd.f32 0.0, %v481
        %v483 = vpop.f32.mrf.mxu0
        %484 = vdwg.mxu0
        %v485 = vadd.f32 %v392, %v482
        %s486 = sadd.s32 %s228, 10
        %s487 = smul.addr %s486, 4
        %s488 = scalar_lea.vmem %s219, %s487
        %v489 = vld [vmem:[%s488] sm:$0x3]
        %s490 = scalar_lea.vmem %s1, 192
        %v491 = vld [vmem:[%s490] sm:$0xf]
        %v492 = vld [vmem:[%s490 + $0x4] sm:$0xf]
        %v493 = vld [vmem:[%s490 + $0x8] sm:$0xf]
        %v494 = vld [vmem:[%s490 + $0xc] sm:$0xf]
        %v495 = vld [vmem:[%s490 + $0x10] sm:$0xf]
        %v496 = vld [vmem:[%s490 + $0x14] sm:$0xf]
        %v497 = vld [vmem:[%s490 + $0x18] sm:$0xf]
        %v498 = vld [vmem:[%s490 + $0x1c] sm:$0xf]
        %v499 = vld [vmem:[%s490 + $0x20] sm:$0xf]
        %v500 = vld [vmem:[%s490 + $0x24] sm:$0xf]
        %v501 = vld [vmem:[%s490 + $0x28] sm:$0xf]
        %v502 = vld [vmem:[%s490 + $0x2c] sm:$0xf]
        %v503 = vld [vmem:[%s490 + $0x30] sm:$0xf]
        %v504 = vld [vmem:[%s490 + $0x34] sm:$0xf]
        %v505 = vld [vmem:[%s490 + $0x38] sm:$0xf]
        %v506 = vld [vmem:[%s490 + $0x3c] sm:$0xf]
        %v523 = vunpack.c.l.b16 %v491
        %v524 = vunpack.c.l.b16 %v492
        %v525 = vunpack.c.l.b16 %v493
        %v526 = vunpack.c.l.b16 %v494
        %v527 = vunpack.c.l.b16 %v495
        %v528 = vunpack.c.l.b16 %v496
        %v529 = vunpack.c.l.b16 %v497
        %v530 = vunpack.c.l.b16 %v498
        %v531 = vunpack.c.l.b16 %v499
        %v532 = vunpack.c.l.b16 %v500
        %v533 = vunpack.c.l.b16 %v501
        %v534 = vunpack.c.l.b16 %v502
        %v535 = vunpack.c.l.b16 %v503
        %v536 = vunpack.c.l.b16 %v504
        %v537 = vunpack.c.l.b16 %v505
        %v538 = vunpack.c.l.b16 %v506
        %v539 = vpack.c.b16 %v524, %v523
        %v540 = vpack.c.b16 %v526, %v525
        %v541 = vpack.c.b16 %v528, %v527
        %v542 = vpack.c.b16 %v530, %v529
        %v543 = vpack.c.b16 %v532, %v531
        %v544 = vpack.c.b16 %v534, %v533
        %v545 = vpack.c.b16 %v536, %v535
        %v546 = vpack.c.b16 %v538, %v537
        %555 = vmatpush.bf16.msra.mxu0 %v546
        %556 = vmatpush.bf16.msra.mxu0 %v545
        %557 = vmatpush.bf16.msra.mxu0 %v544
        %558 = vmatpush.bf16.msra.mxu0 %v543
        %559 = vmatpush.bf16.msra.mxu0 %v542
        %560 = vmatpush.bf16.msra.mxu0 %v541
        %561 = vmatpush.bf16.msra.mxu0 %v540
        %562 = vmatpush.bf16.msra.mxu0 %v539
        %563 = vmatmul.bf16.gmra.mxu0 %v489
        %v564 = vpop.f32.mrf.mxu0
        %v565 = vadd.f32 0.0, %v564
        %v566 = vpop.f32.mrf.mxu0
        %567 = vdwg.mxu0
        %v568 = vadd.f32 %v485, %v565
        %s569 = sadd.s32 %s228, 15
        %s570 = smul.addr %s569, 4
        %s571 = scalar_lea.vmem %s219, %s570
        %v572 = vld [vmem:[%s571] sm:$0x3]
        %s573 = scalar_lea.vmem %s1, 256
        %v574 = vld [vmem:[%s573] sm:$0xf]
        %v575 = vld [vmem:[%s573 + $0x4] sm:$0xf]
        %v576 = vld [vmem:[%s573 + $0x8] sm:$0xf]
        %v577 = vld [vmem:[%s573 + $0xc] sm:$0xf]
        %v578 = vld [vmem:[%s573 + $0x10] sm:$0xf]
        %v579 = vld [vmem:[%s573 + $0x14] sm:$0xf]
        %v580 = vld [vmem:[%s573 + $0x18] sm:$0xf]
        %v581 = vld [vmem:[%s573 + $0x1c] sm:$0xf]
        %v582 = vld [vmem:[%s573 + $0x20] sm:$0xf]
        %v583 = vld [vmem:[%s573 + $0x24] sm:$0xf]
        %v584 = vld [vmem:[%s573 + $0x28] sm:$0xf]
        %v585 = vld [vmem:[%s573 + $0x2c] sm:$0xf]
        %v586 = vld [vmem:[%s573 + $0x30] sm:$0xf]
        %v587 = vld [vmem:[%s573 + $0x34] sm:$0xf]
        %v588 = vld [vmem:[%s573 + $0x38] sm:$0xf]
        %v589 = vld [vmem:[%s573 + $0x3c] sm:$0xf]
        %v606 = vunpack.c.l.b16 %v574
        %v607 = vunpack.c.l.b16 %v575
        %v608 = vunpack.c.l.b16 %v576
        %v609 = vunpack.c.l.b16 %v577
        %v610 = vunpack.c.l.b16 %v578
        %v611 = vunpack.c.l.b16 %v579
        %v612 = vunpack.c.l.b16 %v580
        %v613 = vunpack.c.l.b16 %v581
        %v614 = vunpack.c.l.b16 %v582
        %v615 = vunpack.c.l.b16 %v583
        %v616 = vunpack.c.l.b16 %v584
        %v617 = vunpack.c.l.b16 %v585
        %v618 = vunpack.c.l.b16 %v586
        %v619 = vunpack.c.l.b16 %v587
        %v620 = vunpack.c.l.b16 %v588
        %v621 = vunpack.c.l.b16 %v589
        %v622 = vpack.c.b16 %v607, %v606
        %v623 = vpack.c.b16 %v609, %v608
        %v624 = vpack.c.b16 %v611, %v610
        %v625 = vpack.c.b16 %v613, %v612
        %v626 = vpack.c.b16 %v615, %v614
        %v627 = vpack.c.b16 %v617, %v616
        %v628 = vpack.c.b16 %v619, %v618
        %v629 = vpack.c.b16 %v621, %v620
        %638 = vmatpush.bf16.msra.mxu0 %v629
        %639 = vmatpush.bf16.msra.mxu0 %v628
        %640 = vmatpush.bf16.msra.mxu0 %v627
        %641 = vmatpush.bf16.msra.mxu0 %v626
        %642 = vmatpush.bf16.msra.mxu0 %v625
        %643 = vmatpush.bf16.msra.mxu0 %v624
        %644 = vmatpush.bf16.msra.mxu0 %v623
        %645 = vmatpush.bf16.msra.mxu0 %v622
        %646 = vmatmul.bf16.gmra.mxu0 %v572
        %v647 = vpop.f32.mrf.mxu0
        %v648 = vadd.f32 0.0, %v647
        %v649 = vpop.f32.mrf.mxu0
        %650 = vdwg.mxu0
        %v651 = vadd.f32 %v568, %v648
        %v652 = vld [vmem:[%s488] sm:$0x7]
        %s653 = scalar_lea.vmem %s1, 320
        %v654 = vld [vmem:[%s653] sm:$0xf]
        %v655 = vld [vmem:[%s653 + $0x4] sm:$0xf]
        %v656 = vld [vmem:[%s653 + $0x8] sm:$0xf]
        %v657 = vld [vmem:[%s653 + $0xc] sm:$0xf]
        %v658 = vld [vmem:[%s653 + $0x10] sm:$0xf]
        %v659 = vld [vmem:[%s653 + $0x14] sm:$0xf]
        %v660 = vld [vmem:[%s653 + $0x18] sm:$0xf]
        %v661 = vld [vmem:[%s653 + $0x1c] sm:$0xf]
        %v662 = vld [vmem:[%s653 + $0x20] sm:$0xf]
        %v663 = vld [vmem:[%s653 + $0x24] sm:$0xf]
        %v664 = vld [vmem:[%s653 + $0x28] sm:$0xf]
        %v665 = vld [vmem:[%s653 + $0x2c] sm:$0xf]
        %v666 = vld [vmem:[%s653 + $0x30] sm:$0xf]
        %v667 = vld [vmem:[%s653 + $0x34] sm:$0xf]
        %v668 = vld [vmem:[%s653 + $0x38] sm:$0xf]
        %v669 = vld [vmem:[%s653 + $0x3c] sm:$0xf]
        %v671 = vunpack.c.l.b16 %v652
        %v672 = vpack.c.b16 %v671, %v671
        %v674 = vshrl.u32 %v672, 16
        %v676 = vshll.u32 %v672, 16
        %v678 = vrot.slane %v676, 1
        %v679 = vor.u32 %v674, %v678
        %v697 = vunpack.c.l.b16 %v654
        %v698 = vunpack.c.l.b16 %v655
        %v699 = vunpack.c.l.b16 %v656
        %v700 = vunpack.c.l.b16 %v657
        %v701 = vunpack.c.l.b16 %v658
        %v702 = vunpack.c.l.b16 %v659
        %v703 = vunpack.c.l.b16 %v660
        %v704 = vunpack.c.l.b16 %v661
        %v705 = vunpack.c.l.b16 %v662
        %v706 = vunpack.c.l.b16 %v663
        %v707 = vunpack.c.l.b16 %v664
        %v708 = vunpack.c.l.b16 %v665
        %v709 = vunpack.c.l.b16 %v666
        %v710 = vunpack.c.l.b16 %v667
        %v711 = vunpack.c.l.b16 %v668
        %v712 = vunpack.c.l.b16 %v669
        %v713 = vpack.c.b16 %v698, %v697
        %v714 = vpack.c.b16 %v700, %v699
        %v715 = vpack.c.b16 %v702, %v701
        %v716 = vpack.c.b16 %v704, %v703
        %v717 = vpack.c.b16 %v706, %v705
        %v718 = vpack.c.b16 %v708, %v707
        %v719 = vpack.c.b16 %v710, %v709
        %v720 = vpack.c.b16 %v712, %v711
        %729 = vmatpush.bf16.msra.mxu0 %v720
        %730 = vmatpush.bf16.msra.mxu0 %v719
        %731 = vmatpush.bf16.msra.mxu0 %v718
        %732 = vmatpush.bf16.msra.mxu0 %v717
        %733 = vmatpush.bf16.msra.mxu0 %v716
        %734 = vmatpush.bf16.msra.mxu0 %v715
        %735 = vmatpush.bf16.msra.mxu0 %v714
        %736 = vmatpush.bf16.msra.mxu0 %v713
        %737 = vmatmul.bf16.gmra.mxu0 %v679
        %v738 = vpop.f32.mrf.mxu0
        %v739 = vadd.f32 0.0, %v738
        %v740 = vpop.f32.mrf.mxu0
        %741 = vdwg.mxu0
        %v742 = vadd.f32 %v651, %v739
        %s743 = sadd.s32 %s228, 1
        %s744 = smul.addr %s743, 4
        %s745 = scalar_lea.vmem %s219, %s744
        %v746 = vld [vmem:[%s745] sm:$0x3]
        %s747 = scalar_lea.vmem %s1, 384
        %v748 = vld [vmem:[%s747] sm:$0xf]
        %v749 = vld [vmem:[%s747 + $0x4] sm:$0xf]
        %v750 = vld [vmem:[%s747 + $0x8] sm:$0xf]
        %v751 = vld [vmem:[%s747 + $0xc] sm:$0xf]
        %v752 = vld [vmem:[%s747 + $0x10] sm:$0xf]
        %v753 = vld [vmem:[%s747 + $0x14] sm:$0xf]
        %v754 = vld [vmem:[%s747 + $0x18] sm:$0xf]
        %v755 = vld [vmem:[%s747 + $0x1c] sm:$0xf]
        %v756 = vld [vmem:[%s747 + $0x20] sm:$0xf]
        %v757 = vld [vmem:[%s747 + $0x24] sm:$0xf]
        %v758 = vld [vmem:[%s747 + $0x28] sm:$0xf]
        %v759 = vld [vmem:[%s747 + $0x2c] sm:$0xf]
        %v760 = vld [vmem:[%s747 + $0x30] sm:$0xf]
        %v761 = vld [vmem:[%s747 + $0x34] sm:$0xf]
        %v762 = vld [vmem:[%s747 + $0x38] sm:$0xf]
        %v763 = vld [vmem:[%s747 + $0x3c] sm:$0xf]
        %v780 = vunpack.c.l.b16 %v748
        %v781 = vunpack.c.l.b16 %v749
        %v782 = vunpack.c.l.b16 %v750
        %v783 = vunpack.c.l.b16 %v751
        %v784 = vunpack.c.l.b16 %v752
        %v785 = vunpack.c.l.b16 %v753
        %v786 = vunpack.c.l.b16 %v754
        %v787 = vunpack.c.l.b16 %v755
        %v788 = vunpack.c.l.b16 %v756
        %v789 = vunpack.c.l.b16 %v757
        %v790 = vunpack.c.l.b16 %v758
        %v791 = vunpack.c.l.b16 %v759
        %v792 = vunpack.c.l.b16 %v760
        %v793 = vunpack.c.l.b16 %v761
        %v794 = vunpack.c.l.b16 %v762
        %v795 = vunpack.c.l.b16 %v763
        %v796 = vpack.c.b16 %v781, %v780
        %v797 = vpack.c.b16 %v783, %v782
        %v798 = vpack.c.b16 %v785, %v784
        %v799 = vpack.c.b16 %v787, %v786
        %v800 = vpack.c.b16 %v789, %v788
        %v801 = vpack.c.b16 %v791, %v790
        %v802 = vpack.c.b16 %v793, %v792
        %v803 = vpack.c.b16 %v795, %v794
        %812 = vmatpush.bf16.msra.mxu0 %v803
        %813 = vmatpush.bf16.msra.mxu0 %v802
        %814 = vmatpush.bf16.msra.mxu0 %v801
        %815 = vmatpush.bf16.msra.mxu0 %v800
        %816 = vmatpush.bf16.msra.mxu0 %v799
        %817 = vmatpush.bf16.msra.mxu0 %v798
        %818 = vmatpush.bf16.msra.mxu0 %v797
        %819 = vmatpush.bf16.msra.mxu0 %v796
        %820 = vmatmul.bf16.gmra.mxu0 %v746
        %v821 = vpop.f32.mrf.mxu0
        %v822 = vadd.f32 0.0, %v821
        %v823 = vpop.f32.mrf.mxu0
        %824 = vdwg.mxu0
        %v825 = vadd.f32 %v742, %v822
        %s826 = sadd.s32 %s743, 5
        %s827 = smul.addr %s826, 4
        %s828 = scalar_lea.vmem %s219, %s827
        %v829 = vld [vmem:[%s828] sm:$0x3]
        %s830 = scalar_lea.vmem %s1, 448
        %v831 = vld [vmem:[%s830] sm:$0xf]
        %v832 = vld [vmem:[%s830 + $0x4] sm:$0xf]
        %v833 = vld [vmem:[%s830 + $0x8] sm:$0xf]
        %v834 = vld [vmem:[%s830 + $0xc] sm:$0xf]
        %v835 = vld [vmem:[%s830 + $0x10] sm:$0xf]
        %v836 = vld [vmem:[%s830 + $0x14] sm:$0xf]
        %v837 = vld [vmem:[%s830 + $0x18] sm:$0xf]
        %v838 = vld [vmem:[%s830 + $0x1c] sm:$0xf]
        %v839 = vld [vmem:[%s830 + $0x20] sm:$0xf]
        %v840 = vld [vmem:[%s830 + $0x24] sm:$0xf]
        %v841 = vld [vmem:[%s830 + $0x28] sm:$0xf]
        %v842 = vld [vmem:[%s830 + $0x2c] sm:$0xf]
        %v843 = vld [vmem:[%s830 + $0x30] sm:$0xf]
        %v844 = vld [vmem:[%s830 + $0x34] sm:$0xf]
        %v845 = vld [vmem:[%s830 + $0x38] sm:$0xf]
        %v846 = vld [vmem:[%s830 + $0x3c] sm:$0xf]
        %v863 = vunpack.c.l.b16 %v831
        %v864 = vunpack.c.l.b16 %v832
        %v865 = vunpack.c.l.b16 %v833
        %v866 = vunpack.c.l.b16 %v834
        %v867 = vunpack.c.l.b16 %v835
        %v868 = vunpack.c.l.b16 %v836
        %v869 = vunpack.c.l.b16 %v837
        %v870 = vunpack.c.l.b16 %v838
        %v871 = vunpack.c.l.b16 %v839
        %v872 = vunpack.c.l.b16 %v840
        %v873 = vunpack.c.l.b16 %v841
        %v874 = vunpack.c.l.b16 %v842
        %v875 = vunpack.c.l.b16 %v843
        %v876 = vunpack.c.l.b16 %v844
        %v877 = vunpack.c.l.b16 %v845
        %v878 = vunpack.c.l.b16 %v846
        %v879 = vpack.c.b16 %v864, %v863
        %v880 = vpack.c.b16 %v866, %v865
        %v881 = vpack.c.b16 %v868, %v867
        %v882 = vpack.c.b16 %v870, %v869
        %v883 = vpack.c.b16 %v872, %v871
        %v884 = vpack.c.b16 %v874, %v873
        %v885 = vpack.c.b16 %v876, %v875
        %v886 = vpack.c.b16 %v878, %v877
        %895 = vmatpush.bf16.msra.mxu0 %v886
        %896 = vmatpush.bf16.msra.mxu0 %v885
        %897 = vmatpush.bf16.msra.mxu0 %v884
        %898 = vmatpush.bf16.msra.mxu0 %v883
        %899 = vmatpush.bf16.msra.mxu0 %v882
        %900 = vmatpush.bf16.msra.mxu0 %v881
        %901 = vmatpush.bf16.msra.mxu0 %v880
        %902 = vmatpush.bf16.msra.mxu0 %v879
        %903 = vmatmul.bf16.gmra.mxu0 %v829
        %v904 = vpop.f32.mrf.mxu0
        %v905 = vadd.f32 0.0, %v904
        %v906 = vpop.f32.mrf.mxu0
        %907 = vdwg.mxu0
        %v908 = vadd.f32 %v825, %v905
        %v909 = vld [vmem:[%s745] sm:$0x7]
        %s910 = scalar_lea.vmem %s1, 512
        %v911 = vld [vmem:[%s910] sm:$0xf]
        %v912 = vld [vmem:[%s910 + $0x4] sm:$0xf]
        %v913 = vld [vmem:[%s910 + $0x8] sm:$0xf]
        %v914 = vld [vmem:[%s910 + $0xc] sm:$0xf]
        %v915 = vld [vmem:[%s910 + $0x10] sm:$0xf]
        %v916 = vld [vmem:[%s910 + $0x14] sm:$0xf]
        %v917 = vld [vmem:[%s910 + $0x18] sm:$0xf]
        %v918 = vld [vmem:[%s910 + $0x1c] sm:$0xf]
        %v919 = vld [vmem:[%s910 + $0x20] sm:$0xf]
        %v920 = vld [vmem:[%s910 + $0x24] sm:$0xf]
        %v921 = vld [vmem:[%s910 + $0x28] sm:$0xf]
        %v922 = vld [vmem:[%s910 + $0x2c] sm:$0xf]
        %v923 = vld [vmem:[%s910 + $0x30] sm:$0xf]
        %v924 = vld [vmem:[%s910 + $0x34] sm:$0xf]
        %v925 = vld [vmem:[%s910 + $0x38] sm:$0xf]
        %v926 = vld [vmem:[%s910 + $0x3c] sm:$0xf]
        %v928 = vunpack.c.l.b16 %v909
        %v929 = vpack.c.b16 %v928, %v928
        %v931 = vshrl.u32 %v929, 16
        %v933 = vshll.u32 %v929, 16
        %v935 = vrot.slane %v933, 1
        %v936 = vor.u32 %v931, %v935
        %v954 = vunpack.c.l.b16 %v911
        %v955 = vunpack.c.l.b16 %v912
        %v956 = vunpack.c.l.b16 %v913
        %v957 = vunpack.c.l.b16 %v914
        %v958 = vunpack.c.l.b16 %v915
        %v959 = vunpack.c.l.b16 %v916
        %v960 = vunpack.c.l.b16 %v917
        %v961 = vunpack.c.l.b16 %v918
        %v962 = vunpack.c.l.b16 %v919
        %v963 = vunpack.c.l.b16 %v920
        %v964 = vunpack.c.l.b16 %v921
        %v965 = vunpack.c.l.b16 %v922
        %v966 = vunpack.c.l.b16 %v923
        %v967 = vunpack.c.l.b16 %v924
        %v968 = vunpack.c.l.b16 %v925
        %v969 = vunpack.c.l.b16 %v926
        %v970 = vpack.c.b16 %v955, %v954
        %v971 = vpack.c.b16 %v957, %v956
        %v972 = vpack.c.b16 %v959, %v958
        %v973 = vpack.c.b16 %v961, %v960
        %v974 = vpack.c.b16 %v963, %v962
        %v975 = vpack.c.b16 %v965, %v964
        %v976 = vpack.c.b16 %v967, %v966
        %v977 = vpack.c.b16 %v969, %v968
        %986 = vmatpush.bf16.msra.mxu0 %v977
        %987 = vmatpush.bf16.msra.mxu0 %v976
        %988 = vmatpush.bf16.msra.mxu0 %v975
        %989 = vmatpush.bf16.msra.mxu0 %v974
        %990 = vmatpush.bf16.msra.mxu0 %v973
        %991 = vmatpush.bf16.msra.mxu0 %v972
        %992 = vmatpush.bf16.msra.mxu0 %v971
        %993 = vmatpush.bf16.msra.mxu0 %v970
        %994 = vmatmul.bf16.gmra.mxu0 %v936
        %v995 = vpop.f32.mrf.mxu0
        %v996 = vadd.f32 0.0, %v995
        %v997 = vpop.f32.mrf.mxu0
        %998 = vdwg.mxu0
        %v999 = vadd.f32 %v908, %v996
        %v1001 = vperm.slane %v225, 0
        %v1003 = vadd.f32 %v999, %v1001
        %v1004 = vsub.f32 0.0, %v1003
        %v1005 = vmul.f32 %v1004, 1.442695
        %v1006 = vpow.pop %v1005
        %v1007 = vadd.f32 %v1006, 1.0
        %v1008 = vrcp.pop %v1007
        %v1009 = vmul.f32 %v1003, %v1008
        %v1010 = vpack.c.bf16 %v1009, %v1009
        %v1011 = vld [vmem:[%s3] sm:$0xf]
        %v1012 = vld [vmem:[%s3 + $0x4] sm:$0xf]
        %v1013 = vld [vmem:[%s3 + $0x8] sm:$0xf]
        %v1014 = vld [vmem:[%s3 + $0xc] sm:$0xf]
        %v1015 = vld [vmem:[%s3 + $0x10] sm:$0xf]
        %v1016 = vld [vmem:[%s3 + $0x14] sm:$0xf]
        %v1017 = vld [vmem:[%s3 + $0x18] sm:$0xf]
        %v1018 = vld [vmem:[%s3 + $0x1c] sm:$0xf]
        %v1019 = vld [vmem:[%s3 + $0x20] sm:$0xf]
        %v1020 = vld [vmem:[%s3 + $0x24] sm:$0xf]
        %v1021 = vld [vmem:[%s3 + $0x28] sm:$0xf]
        %v1022 = vld [vmem:[%s3 + $0x2c] sm:$0xf]
        %v1023 = vld [vmem:[%s3 + $0x30] sm:$0xf]
        %v1024 = vld [vmem:[%s3 + $0x34] sm:$0xf]
        %v1025 = vld [vmem:[%s3 + $0x38] sm:$0xf]
        %v1026 = vld [vmem:[%s3 + $0x3c] sm:$0xf]
        %v1028 = vperm.slane %v226, 0
        %v1046 = vunpack.c.l.b16 %v1011
        %v1047 = vunpack.c.l.b16 %v1012
        %v1048 = vunpack.c.l.b16 %v1013
        %v1049 = vunpack.c.l.b16 %v1014
        %v1050 = vunpack.c.l.b16 %v1015
        %v1051 = vunpack.c.l.b16 %v1016
        %v1052 = vunpack.c.l.b16 %v1017
        %v1053 = vunpack.c.l.b16 %v1018
        %v1054 = vunpack.c.l.b16 %v1019
        %v1055 = vunpack.c.l.b16 %v1020
        %v1056 = vunpack.c.l.b16 %v1021
        %v1057 = vunpack.c.l.b16 %v1022
        %v1058 = vunpack.c.l.b16 %v1023
        %v1059 = vunpack.c.l.b16 %v1024
        %v1060 = vunpack.c.l.b16 %v1025
        %v1061 = vunpack.c.l.b16 %v1026
        %v1062 = vpack.c.b16 %v1047, %v1046
        %v1063 = vpack.c.b16 %v1049, %v1048
        %v1064 = vpack.c.b16 %v1051, %v1050
        %v1065 = vpack.c.b16 %v1053, %v1052
        %v1066 = vpack.c.b16 %v1055, %v1054
        %v1067 = vpack.c.b16 %v1057, %v1056
        %v1068 = vpack.c.b16 %v1059, %v1058
        %v1069 = vpack.c.b16 %v1061, %v1060
        %1078 = vmatpush.bf16.msra.mxu0 %v1069
        %1079 = vmatpush.bf16.msra.mxu0 %v1068
        %1080 = vmatpush.bf16.msra.mxu0 %v1067
        %1081 = vmatpush.bf16.msra.mxu0 %v1066
        %1082 = vmatpush.bf16.msra.mxu0 %v1065
        %1083 = vmatpush.bf16.msra.mxu0 %v1064
        %1084 = vmatpush.bf16.msra.mxu0 %v1063
        %1085 = vmatpush.bf16.msra.mxu0 %v1062
        %1086 = vmatmul.bf16.gmra.mxu0 %v1010
        %v1087 = vpop.f32.mrf.mxu0
        %v1088 = vadd.f32 %v1028, %v1087
        %v1089 = vpop.f32.mrf.mxu0
        %1090 = vdwg.mxu0
        %v1091 = vsub.f32 0.0, %v1088
        %v1092 = vmul.f32 %v1091, 1.442695
        %v1093 = vpow.pop %v1092
        %v1094 = vadd.f32 %v1093, 1.0
        %v1095 = vrcp.pop %v1094
        %v1096 = vmul.f32 %v1088, %v1095
        %v1097 = vpack.c.bf16 %v1096, %v1096
        %s1098 = smul.addr %s228, 2
        %s1099 = scalar_lea.vmem %s224, %s1098
        %1100 = vst [vmem:[%s1099] sm:$0x3] %v1097
      $region45: #{yolov11_backbone.8} parent=39 // loop_footer
        %s232 = sadd.s32 1, %s228
      $region46: #{yolov11_backbone.8} parent=39 // loop_footer_branch
        %227 = sbr.rel target = $region42
      $region47: #{yolov11_backbone.8} parent=39 // loop_exit
        _
      %p1101 = scmp.lt.s32.totalorder %s16, 1
      %s1102 = scalar_select %p1101, %s16, 1
      %s1103 = smul.addr %s1102, 4
      %s1104 = smul.addr %s1103, 2
      %s1105 = scalar_lea.vmem %s5, %s1104
      // Predicated region
      $region48: #{yolov11_backbone.8} parent=39 // pred_check
        %p1106 = pneg %p144
      $region49: #{yolov11_backbone.8} parent=39 // pred_check_branch
        %1108 = sbr.rel (%p1106) target = $region51
      $region50: #{yolov11_backbone.8} parent=39 // pred_region
        _
      $region51: #{yolov11_backbone.8} parent=39 // pred_fallthru
        _
    $region40: #{yolov11_backbone.8} parent=5 // pred_fallthru
      _
    %p1109 = scmp.le.s32.totalorder 2, %s11
    // Predicated region
    $region52: #{yolov11_backbone.8} parent=5 // pred_check
      %p1110 = pneg %p1109
    $region53: #{yolov11_backbone.8} parent=5 // pred_check_branch
      %1112 = sbr.rel (%p1110) target = $region55
    $region54: #{yolov11_backbone.8} parent=5 // pred_region
      %s1113 = ssub.s32 %s11, 2
      // Predicated region
      $region56: #{yolov11_backbone.8} parent=54 // pred_check
        %p1114 = pneg %p150
      $region57: #{yolov11_backbone.8} parent=54 // pred_check_branch
        %1116 = sbr.rel (%p1114) target = $region59
      $region58: #{yolov11_backbone.8} parent=54 // pred_region
        %p1117 = scmp.lt.s32.totalorder %s17, 1
        %s1118 = scalar_select %p1117, %s17, 1
        %s1119 = smul.addr %s1118, 4
        %s1120 = smul.addr %s1119, 2
        %s1121 = scalar_lea.vmem %s5, %s1120
      $region59: #{yolov11_backbone.8} parent=54 // pred_fallthru
        _
    $region55: #{yolov11_backbone.8} parent=5 // pred_fallthru
      _
  $region6: #{yolov11_backbone.8} parent=0 // loop_footer
    %s15 = sadd.s32 1, %s11
  $region7: #{yolov11_backbone.8} parent=0 // loop_footer_branch
    %10 = sbr.rel target = $region3
  $region8: #{yolov11_backbone.8} parent=0 // loop_exit
    _

// kernel: yolov11_backbone.9
$region0: #{yolov11_backbone.9}
  #allocation0 [shape = 'u32[]', space=smem, size = 0x4, offset = 0x4, fixed_abs, tag = 'smem constant byte address 0x4 - core index']
  #allocation1 [shape = 'u32[72,128]{1,0:T(1,128)}', space=vmem, size = 0x9000, scoped, tag = 'internal scratch']
  %s0 = inlined_call_operand.vmem [shape: bf16[2,4,3,3,128], index: 0, kind: input, shape index: {}]
  %s1 = inlined_call_operand.vmem [shape: bf16[9,128,128], index: 1, kind: input, shape index: {}]
  %s2 = inlined_call_operand.vmem [shape: f32[1,128], index: 2, kind: input, shape index: {}]
  %s3 = inlined_call_operand.vmem [shape: bf16[128,128], index: 3, kind: input, shape index: {}]
  %s4 = inlined_call_operand.vmem [shape: f32[1,128], index: 4, kind: input, shape index: {}]
  %s5 = inlined_call_operand.vmem [shape: bf16[2,2,2,128], index: 5, kind: output, shape index: {}]
  %s6 = sld [smem:[#allocation0]]
  $region60: #{yolov11_backbone.9} parent=0
    _
  %s8 = ssub.s32 1, %s6
  %s9 = scalar_select 0, %s8, %s6
  loop: start=0, step=1, limit=4
  $region2: #{yolov11_backbone.9} parent=0 // loop_pre_header
    _
  $region3: #{yolov11_backbone.9} parent=0 // loop_header
    %s11 = sphi 0, %s15
    %p12 = scmp.ge.s32.totalorder %s11, 4
    %s21 = sphi 0, %s23
    %s24 = sphi 0, %s21
    %s25 = sphi 0, %s24
    %s41 = sphi 0, %s25
    %s45 = sphi 0, %s45
    %s47 = sphi 0, %s45
    %s48 = sphi 0, %s47
    %s62 = sphi 0, %s48
    %s66 = sphi 0, %s66
    %s68 = sphi 0, %s66
    %s69 = sphi 0, %s68
    %s83 = sphi 0, %s69
    %s87 = sphi 0, %s87
    %s89 = sphi 0, %s87
    %s90 = sphi 0, %s89
    %s104 = sphi 0, %s90
    %s108 = sphi 0, %s108
    %s110 = sphi 0, %s108
    %s111 = sphi 0, %s110
    %s125 = sphi 0, %s111
    %s131 = sphi 0, %s133
    %s134 = sphi 0, %s131
    %s135 = sphi 0, %s134
    %s151 = sphi 0, %s135
  $region4: #{yolov11_backbone.9} parent=0 // loop_header_branch
    %14 = sbr.rel (%p12) target = $region8
  $region5: #{yolov11_backbone.9} parent=0 // loop_body
    %s16 = ssub.s32 %s11, 1
    %s17 = ssub.s32 %s11, 2
    %s18 = sadd.s32 %s11, 1
    %s19 = ssub.s32 %s11, %s18
    %p20 = scmp.eq.s32.totalorder %s19, 0
    %s22 = sadd.s32 %s21, 1
    %s23 = scalar_select %p20, %s21, %s22
    %p26 = pneg %p20
    %p27 = scmp.eq.s32.totalorder %s11, 1
    %p28 = por %p26, %p27
    %p29 = scmp.ne.s32.totalorder %s21, %s24
    %p30 = scmp.eq.s32.totalorder %s11, 0
    %p31 = por %p29, %p30
    %p32 = scmp.ne.s32.totalorder %s21, %s24
    %p33 = scmp.eq.s32.totalorder %s16, 1
    %p34 = por %p32, %p33
    %p35 = scmp.ne.s32.totalorder %s24, %s25
    %p36 = scmp.eq.s32.totalorder %s16, 0
    %p37 = por %p35, %p36
    %p38 = scmp.ne.s32.totalorder %s24, %s25
    %p39 = scmp.eq.s32.totalorder %s17, 1
    %p40 = por %p38, %p39
    %p42 = scmp.ne.s32.totalorder %s25, %s41
    %p43 = scmp.eq.s32.totalorder %s17, 0
    %p44 = por %p42, %p43
    %s46 = sadd.s32 %s45, 1
    %p49 = scmp.eq.s32.totalorder %s11, 1
    %p50 = scmp.ne.s32.totalorder %s45, %s47
    %p51 = scmp.eq.s32.totalorder %s11, 0
    %p52 = por %p50, %p51
    %p53 = scmp.ne.s32.totalorder %s45, %s47
    %p54 = scmp.eq.s32.totalorder %s16, 1
    %p55 = por %p53, %p54
    %p56 = scmp.ne.s32.totalorder %s47, %s48
    %p57 = scmp.eq.s32.totalorder %s16, 0
    %p58 = por %p56, %p57
    %p59 = scmp.ne.s32.totalorder %s47, %s48
    %p60 = scmp.eq.s32.totalorder %s17, 1
    %p61 = por %p59, %p60
    %p63 = scmp.ne.s32.totalorder %s48, %s62
    %p64 = scmp.eq.s32.totalorder %s17, 0
    %p65 = por %p63, %p64
    %s67 = sadd.s32 %s66, 1
    %p70 = scmp.eq.s32.totalorder %s11, 1
    %p71 = scmp.ne.s32.totalorder %s66, %s68
    %p72 = scmp.eq.s32.totalorder %s11, 0
    %p73 = por %p71, %p72
    %p74 = scmp.ne.s32.totalorder %s66, %s68
    %p75 = scmp.eq.s32.totalorder %s16, 1
    %p76 = por %p74, %p75
    %p77 = scmp.ne.s32.totalorder %s68, %s69
    %p78 = scmp.eq.s32.totalorder %s16, 0
    %p79 = por %p77, %p78
    %p80 = scmp.ne.s32.totalorder %s68, %s69
    %p81 = scmp.eq.s32.totalorder %s17, 1
    %p82 = por %p80, %p81
    %p84 = scmp.ne.s32.totalorder %s69, %s83
    %p85 = scmp.eq.s32.totalorder %s17, 0
    %p86 = por %p84, %p85
    %s88 = sadd.s32 %s87, 1
    %p91 = scmp.eq.s32.totalorder %s11, 1
    %p92 = scmp.ne.s32.totalorder %s87, %s89
    %p93 = scmp.eq.s32.totalorder %s11, 0
    %p94 = por %p92, %p93
    %p95 = scmp.ne.s32.totalorder %s87, %s89
    %p96 = scmp.eq.s32.totalorder %s16, 1
    %p97 = por %p95, %p96
    %p98 = scmp.ne.s32.totalorder %s89, %s90
    %p99 = scmp.eq.s32.totalorder %s16, 0
    %p100 = por %p98, %p99
    %p101 = scmp.ne.s32.totalorder %s89, %s90
    %p102 = scmp.eq.s32.totalorder %s17, 1
    %p103 = por %p101, %p102
    %p105 = scmp.ne.s32.totalorder %s90, %s104
    %p106 = scmp.eq.s32.totalorder %s17, 0
    %p107 = por %p105, %p106
    %s109 = sadd.s32 %s108, 1
    %p112 = scmp.eq.s32.totalorder %s11, 1
    %p113 = scmp.ne.s32.totalorder %s108, %s110
    %p114 = scmp.eq.s32.totalorder %s11, 0
    %p115 = por %p113, %p114
    %p116 = scmp.ne.s32.totalorder %s108, %s110
    %p117 = scmp.eq.s32.totalorder %s16, 1
    %p118 = por %p116, %p117
    %p119 = scmp.ne.s32.totalorder %s110, %s111
    %p120 = scmp.eq.s32.totalorder %s16, 0
    %p121 = por %p119, %p120
    %p122 = scmp.ne.s32.totalorder %s110, %s111
    %p123 = scmp.eq.s32.totalorder %s17, 1
    %p124 = por %p122, %p123
    %p126 = scmp.ne.s32.totalorder %s111, %s125
    %p127 = scmp.eq.s32.totalorder %s17, 0
    %p128 = por %p126, %p127
    %s129 = ssub.s32 %s11, %s18
    %p130 = scmp.eq.s32.totalorder %s129, 0
    %s132 = sadd.s32 %s131, 1
    %s133 = scalar_select %p130, %s131, %s132
    %p136 = pneg %p130
    %p137 = scmp.eq.s32.totalorder %s11, 1
    %p138 = por %p136, %p137
    %p139 = scmp.ne.s32.totalorder %s131, %s134
    %p140 = scmp.eq.s32.totalorder %s11, 0
    %p141 = por %p139, %p140
    %p142 = scmp.ne.s32.totalorder %s131, %s134
    %p143 = scmp.eq.s32.totalorder %s16, 1
    %p144 = por %p142, %p143
    %p145 = scmp.ne.s32.totalorder %s134, %s135
    %p146 = scmp.eq.s32.totalorder %s16, 0
    %p147 = por %p145, %p146
    %p148 = scmp.ne.s32.totalorder %s134, %s135
    %p149 = scmp.eq.s32.totalorder %s17, 1
    %p150 = por %p148, %p149
    %p152 = scmp.ne.s32.totalorder %s135, %s151
    %p153 = scmp.eq.s32.totalorder %s17, 0
    %p154 = por %p152, %p153
    %p155 = scmp.le.s32.totalorder 1, %s11
    %p156 = scmp.lt.s32.totalorder %s11, 3
    %p157 = pnand %p155, %p156
    %p158 = pneg %p157
    // Predicated region
    $region9: #{yolov11_backbone.9} parent=5 // pred_check
      _
    $region10: #{yolov11_backbone.9} parent=5 // pred_check_branch
      %160 = sbr.rel (%p157) target = $region12
    $region11: #{yolov11_backbone.9} parent=5 // pred_region
      %s161 = ssub.s32 %s11, 1
      // Predicated region
      $region13: #{yolov11_backbone.9} parent=11 // pred_check
        %p162 = pneg %p58
      $region14: #{yolov11_backbone.9} parent=11 // pred_check_branch
        %164 = sbr.rel (%p162) target = $region16
      $region15: #{yolov11_backbone.9} parent=11 // pred_region
        _
      $region16: #{yolov11_backbone.9} parent=11 // pred_fallthru
        _
      // Predicated region
      $region17: #{yolov11_backbone.9} parent=11 // pred_check
        %p165 = pneg %p79
      $region18: #{yolov11_backbone.9} parent=11 // pred_check_branch
        %167 = sbr.rel (%p165) target = $region20
      $region19: #{yolov11_backbone.9} parent=11 // pred_region
        _
      $region20: #{yolov11_backbone.9} parent=11 // pred_fallthru
        _
      // Predicated region
      $region21: #{yolov11_backbone.9} parent=11 // pred_check
        %p168 = pneg %p100
      $region22: #{yolov11_backbone.9} parent=11 // pred_check_branch
        %170 = sbr.rel (%p168) target = $region24
      $region23: #{yolov11_backbone.9} parent=11 // pred_region
        _
      $region24: #{yolov11_backbone.9} parent=11 // pred_fallthru
        _
      // Predicated region
      $region25: #{yolov11_backbone.9} parent=11 // pred_check
        %p171 = pneg %p121
      $region26: #{yolov11_backbone.9} parent=11 // pred_check_branch
        %173 = sbr.rel (%p171) target = $region28
      $region27: #{yolov11_backbone.9} parent=11 // pred_region
        _
      $region28: #{yolov11_backbone.9} parent=11 // pred_fallthru
        _
    $region12: #{yolov11_backbone.9} parent=5 // pred_fallthru
      _
    %p174 = scmp.lt.s32.totalorder %s11, 2
    // Predicated region
    $region29: #{yolov11_backbone.9} parent=5 // pred_check
      %p175 = pneg %p174
    $region30: #{yolov11_backbone.9} parent=5 // pred_check_branch
      %177 = sbr.rel (%p175) target = $region32
    $region31: #{yolov11_backbone.9} parent=5 // pred_region
      // Predicated region
      $region33: #{yolov11_backbone.9} parent=31 // pred_check
        %p178 = pneg %p31
      $region34: #{yolov11_backbone.9} parent=31 // pred_check_branch
        %180 = sbr.rel (%p178) target = $region36
      $region35: #{yolov11_backbone.9} parent=31 // pred_region
        %p181 = scmp.lt.s32.totalorder %s11, 1
        %s182 = scalar_select %p181, %s11, 1
        %s183 = smul.addr %s182, 12
        %s184 = smul.addr %s183, 2
        %s185 = scalar_lea.vmem %s0, %s184
      $region36: #{yolov11_backbone.9} parent=31 // pred_fallthru
        _
    $region32: #{yolov11_backbone.9} parent=5 // pred_fallthru
      _
    %p186 = scmp.le.s32.totalorder 1, %s11
    %p187 = scmp.lt.s32.totalorder %s11, 3
    %p188 = pnand %p186, %p187
    %p189 = pneg %p188
    // Predicated region
    $region37: #{yolov11_backbone.9} parent=5 // pred_check
      _
    $region38: #{yolov11_backbone.9} parent=5 // pred_check_branch
      %191 = sbr.rel (%p188) target = $region40
    $region39: #{yolov11_backbone.9} parent=5 // pred_region
      %s192 = ssub.s32 %s11, 1
      %p193 = scmp.lt.s32.totalorder %s16, 1
      %s194 = scalar_select %p193, %s16, 1
      %s195 = smul.addr %s194, 12
      %s196 = smul.addr %s195, 2
      %s197 = scalar_lea.vmem %s0, %s196
      %p198 = pneg %p37
      %p199 = pneg %p34
      %p200 = pneg %p58
      %p201 = pneg %p55
      %p202 = pneg %p79
      %p203 = pneg %p76
      %p204 = pneg %p100
      %p205 = pneg %p97
      %p206 = pneg %p121
      %p207 = pneg %p118
      %p208 = pneg %p147
      %p209 = pneg %p144
      %p210 = scmp.lt.s32.totalorder %s16, 1
      %s211 = scalar_select %p210, %s16, 1
      %s212 = smul.addr %s211, 2
      %s213 = scalar_lea.vmem %s5, %s212
      %p214 = scmp.lt.s32.totalorder %s16, 1
      %s215 = scalar_select %p214, %s16, 1
      %s216 = smul.addr %s215, 12
      %s217 = smul.addr %s216, 2
      %s218 = scalar_lea.vmem %s0, %s217
      %p219 = scmp.lt.s32.totalorder %s16, 1
      %s220 = scalar_select %p219, %s16, 1
      %s221 = smul.addr %s220, 2
      %s222 = scalar_lea.vmem %s5, %s221
      %v223 = vld [vmem:[%s2] sm:$0x1]
      %v224 = vld [vmem:[%s4] sm:$0x1]
      loop: start=0, step=1, limit=2
      $region41: #{yolov11_backbone.9} parent=39 // loop_pre_header
        _
      $region42: #{yolov11_backbone.9} parent=39 // loop_header
        %s226 = sphi 0, %s230
        %p227 = scmp.ge.s32.totalorder %s226, 2
      $region43: #{yolov11_backbone.9} parent=39 // loop_header_branch
        %229 = sbr.rel (%p227) target = $region47
      $region44: #{yolov11_backbone.9} parent=39 // loop_body
        %s231 = smul.addr %s226, 2
        %s232 = scalar_lea.vmem %s218, %s231
        %v233 = vld [vmem:[%s232] sm:$0x1]
        %v234 = vld [vmem:[%s1] sm:$0xf]
        %v235 = vld [vmem:[%s1 + $0x4] sm:$0xf]
        %v236 = vld [vmem:[%s1 + $0x8] sm:$0xf]
        %v237 = vld [vmem:[%s1 + $0xc] sm:$0xf]
        %v238 = vld [vmem:[%s1 + $0x10] sm:$0xf]
        %v239 = vld [vmem:[%s1 + $0x14] sm:$0xf]
        %v240 = vld [vmem:[%s1 + $0x18] sm:$0xf]
        %v241 = vld [vmem:[%s1 + $0x1c] sm:$0xf]
        %v242 = vld [vmem:[%s1 + $0x20] sm:$0xf]
        %v243 = vld [vmem:[%s1 + $0x24] sm:$0xf]
        %v244 = vld [vmem:[%s1 + $0x28] sm:$0xf]
        %v245 = vld [vmem:[%s1 + $0x2c] sm:$0xf]
        %v246 = vld [vmem:[%s1 + $0x30] sm:$0xf]
        %v247 = vld [vmem:[%s1 + $0x34] sm:$0xf]
        %v248 = vld [vmem:[%s1 + $0x38] sm:$0xf]
        %v249 = vld [vmem:[%s1 + $0x3c] sm:$0xf]
        %s250 = sadd.s32 %s226, 3
        %s251 = smul.addr %s250, 2
        %s252 = scalar_lea.vmem %s218, %s251
        %v253 = vld [vmem:[%s252] sm:$0x1]
        %s254 = scalar_lea.vmem %s1, 64
        %v255 = vld [vmem:[%s254] sm:$0xf]
        %v256 = vld [vmem:[%s254 + $0x4] sm:$0xf]
        %v257 = vld [vmem:[%s254 + $0x8] sm:$0xf]
        %v258 = vld [vmem:[%s254 + $0xc] sm:$0xf]
        %v259 = vld [vmem:[%s254 + $0x10] sm:$0xf]
        %v260 = vld [vmem:[%s254 + $0x14] sm:$0xf]
        %v261 = vld [vmem:[%s254 + $0x18] sm:$0xf]
        %v262 = vld [vmem:[%s254 + $0x1c] sm:$0xf]
        %v263 = vld [vmem:[%s254 + $0x20] sm:$0xf]
        %v264 = vld [vmem:[%s254 + $0x24] sm:$0xf]
        %v265 = vld [vmem:[%s254 + $0x28] sm:$0xf]
        %v266 = vld [vmem:[%s254 + $0x2c] sm:$0xf]
        %v267 = vld [vmem:[%s254 + $0x30] sm:$0xf]
        %v268 = vld [vmem:[%s254 + $0x34] sm:$0xf]
        %v269 = vld [vmem:[%s254 + $0x38] sm:$0xf]
        %v270 = vld [vmem:[%s254 + $0x3c] sm:$0xf]
        %v287 = vunpack.c.l.b16 %v255
        %v288 = vunpack.c.l.b16 %v256
        %v289 = vunpack.c.l.b16 %v257
        %v290 = vunpack.c.l.b16 %v258
        %v291 = vunpack.c.l.b16 %v259
        %v292 = vunpack.c.l.b16 %v260
        %v293 = vunpack.c.l.b16 %v261
        %v294 = vunpack.c.l.b16 %v262
        %v295 = vunpack.c.l.b16 %v263
        %v296 = vunpack.c.l.b16 %v264
        %v297 = vunpack.c.l.b16 %v265
        %v298 = vunpack.c.l.b16 %v266
        %v299 = vunpack.c.l.b16 %v267
        %v300 = vunpack.c.l.b16 %v268
        %v301 = vunpack.c.l.b16 %v269
        %v302 = vunpack.c.l.b16 %v270
        %v303 = vpack.c.b16 %v288, %v287
        %v304 = vpack.c.b16 %v290, %v289
        %v305 = vpack.c.b16 %v292, %v291
        %v306 = vpack.c.b16 %v294, %v293
        %v307 = vpack.c.b16 %v296, %v295
        %v308 = vpack.c.b16 %v298, %v297
        %v309 = vpack.c.b16 %v300, %v299
        %v310 = vpack.c.b16 %v302, %v301
        %319 = vmatpush.bf16.msra.mxu0 %v310
        %320 = vmatpush.bf16.msra.mxu0 %v309
        %321 = vmatpush.bf16.msra.mxu0 %v308
        %322 = vmatpush.bf16.msra.mxu0 %v307
        %323 = vmatpush.bf16.msra.mxu0 %v306
        %324 = vmatpush.bf16.msra.mxu0 %v305
        %325 = vmatpush.bf16.msra.mxu0 %v304
        %326 = vmatpush.bf16.msra.mxu0 %v303
        %327 = vmatmul.bf16.gmra.mxu0 %v253
        %v328 = vpop.f32.mrf.mxu0
        %v329 = vadd.f32 0.0, %v328
        %v330 = vpop.f32.mrf.mxu0
        %331 = vdwg.mxu0
        %v348 = vunpack.c.l.b16 %v234
        %v349 = vunpack.c.l.b16 %v235
        %v350 = vunpack.c.l.b16 %v236
        %v351 = vunpack.c.l.b16 %v237
        %v352 = vunpack.c.l.b16 %v238
        %v353 = vunpack.c.l.b16 %v239
        %v354 = vunpack.c.l.b16 %v240
        %v355 = vunpack.c.l.b16 %v241
        %v356 = vunpack.c.l.b16 %v242
        %v357 = vunpack.c.l.b16 %v243
        %v358 = vunpack.c.l.b16 %v244
        %v359 = vunpack.c.l.b16 %v245
        %v360 = vunpack.c.l.b16 %v246
        %v361 = vunpack.c.l.b16 %v247
        %v362 = vunpack.c.l.b16 %v248
        %v363 = vunpack.c.l.b16 %v249
        %v364 = vpack.c.b16 %v349, %v348
        %v365 = vpack.c.b16 %v351, %v350
        %v366 = vpack.c.b16 %v353, %v352
        %v367 = vpack.c.b16 %v355, %v354
        %v368 = vpack.c.b16 %v357, %v356
        %v369 = vpack.c.b16 %v359, %v358
        %v370 = vpack.c.b16 %v361, %v360
        %v371 = vpack.c.b16 %v363, %v362
        %380 = vmatpush.bf16.msra.mxu0 %v371
        %381 = vmatpush.bf16.msra.mxu0 %v370
        %382 = vmatpush.bf16.msra.mxu0 %v369
        %383 = vmatpush.bf16.msra.mxu0 %v368
        %384 = vmatpush.bf16.msra.mxu0 %v367
        %385 = vmatpush.bf16.msra.mxu0 %v366
        %386 = vmatpush.bf16.msra.mxu0 %v365
        %387 = vmatpush.bf16.msra.mxu0 %v364
        %388 = vmatmul.bf16.gmra.mxu0 %v233
        %v389 = vpop.f32.mrf.mxu0
        %v390 = vadd.f32 %v329, %v389
        %v391 = vpop.f32.mrf.mxu0
        %392 = vdwg.mxu0
        %v393 = vld [vmem:[%s232] sm:$0x3]
        %s394 = scalar_lea.vmem %s1, 128
        %v395 = vld [vmem:[%s394] sm:$0xf]
        %v396 = vld [vmem:[%s394 + $0x4] sm:$0xf]
        %v397 = vld [vmem:[%s394 + $0x8] sm:$0xf]
        %v398 = vld [vmem:[%s394 + $0xc] sm:$0xf]
        %v399 = vld [vmem:[%s394 + $0x10] sm:$0xf]
        %v400 = vld [vmem:[%s394 + $0x14] sm:$0xf]
        %v401 = vld [vmem:[%s394 + $0x18] sm:$0xf]
        %v402 = vld [vmem:[%s394 + $0x1c] sm:$0xf]
        %v403 = vld [vmem:[%s394 + $0x20] sm:$0xf]
        %v404 = vld [vmem:[%s394 + $0x24] sm:$0xf]
        %v405 = vld [vmem:[%s394 + $0x28] sm:$0xf]
        %v406 = vld [vmem:[%s394 + $0x2c] sm:$0xf]
        %v407 = vld [vmem:[%s394 + $0x30] sm:$0xf]
        %v408 = vld [vmem:[%s394 + $0x34] sm:$0xf]
        %v409 = vld [vmem:[%s394 + $0x38] sm:$0xf]
        %v410 = vld [vmem:[%s394 + $0x3c] sm:$0xf]
        %412 = vst [vmem:[#allocation1] ss:$4 sm:$0xff] %v393
        %v413 = vld.sshfl [vmem:[#allocation1] sm:$0xff pattern:$0x73625140]
        %v414 = vshrl.u32 %v413, 16
        %v416 = vshll.u32 %v413, 16
        %v418 = vrot.slane %v416, 1
        %v419 = vor.u32 %v414, %v418
        %v437 = vunpack.c.l.b16 %v395
        %v438 = vunpack.c.l.b16 %v396
        %v439 = vunpack.c.l.b16 %v397
        %v440 = vunpack.c.l.b16 %v398
        %v441 = vunpack.c.l.b16 %v399
        %v442 = vunpack.c.l.b16 %v400
        %v443 = vunpack.c.l.b16 %v401
        %v444 = vunpack.c.l.b16 %v402
        %v445 = vunpack.c.l.b16 %v403
        %v446 = vunpack.c.l.b16 %v404
        %v447 = vunpack.c.l.b16 %v405
        %v448 = vunpack.c.l.b16 %v406
        %v449 = vunpack.c.l.b16 %v407
        %v450 = vunpack.c.l.b16 %v408
        %v451 = vunpack.c.l.b16 %v409
        %v452 = vunpack.c.l.b16 %v410
        %v453 = vpack.c.b16 %v438, %v437
        %v454 = vpack.c.b16 %v440, %v439
        %v455 = vpack.c.b16 %v442, %v441
        %v456 = vpack.c.b16 %v444, %v443
        %v457 = vpack.c.b16 %v446, %v445
        %v458 = vpack.c.b16 %v448, %v447
        %v459 = vpack.c.b16 %v450, %v449
        %v460 = vpack.c.b16 %v452, %v451
        %469 = vmatpush.bf16.msra.mxu0 %v460
        %470 = vmatpush.bf16.msra.mxu0 %v459
        %471 = vmatpush.bf16.msra.mxu0 %v458
        %472 = vmatpush.bf16.msra.mxu0 %v457
        %473 = vmatpush.bf16.msra.mxu0 %v456
        %474 = vmatpush.bf16.msra.mxu0 %v455
        %475 = vmatpush.bf16.msra.mxu0 %v454
        %476 = vmatpush.bf16.msra.mxu0 %v453
        %477 = vmatmul.bf16.gmra.mxu0 %v419
        %v478 = vpop.f32.mrf.mxu0
        %v479 = vadd.f32 0.0, %v478
        %v480 = vpop.f32.mrf.mxu0
        %481 = vdwg.mxu0
        %v482 = vadd.f32 %v390, %v479
        %s483 = sadd.s32 %s226, 6
        %s484 = smul.addr %s483, 2
        %s485 = scalar_lea.vmem %s218, %s484
        %v486 = vld [vmem:[%s485] sm:$0x1]
        %s487 = scalar_lea.vmem %s1, 192
        %v488 = vld [vmem:[%s487] sm:$0xf]
        %v489 = vld [vmem:[%s487 + $0x4] sm:$0xf]
        %v490 = vld [vmem:[%s487 + $0x8] sm:$0xf]
        %v491 = vld [vmem:[%s487 + $0xc] sm:$0xf]
        %v492 = vld [vmem:[%s487 + $0x10] sm:$0xf]
        %v493 = vld [vmem:[%s487 + $0x14] sm:$0xf]
        %v494 = vld [vmem:[%s487 + $0x18] sm:$0xf]
        %v495 = vld [vmem:[%s487 + $0x1c] sm:$0xf]
        %v496 = vld [vmem:[%s487 + $0x20] sm:$0xf]
        %v497 = vld [vmem:[%s487 + $0x24] sm:$0xf]
        %v498 = vld [vmem:[%s487 + $0x28] sm:$0xf]
        %v499 = vld [vmem:[%s487 + $0x2c] sm:$0xf]
        %v500 = vld [vmem:[%s487 + $0x30] sm:$0xf]
        %v501 = vld [vmem:[%s487 + $0x34] sm:$0xf]
        %v502 = vld [vmem:[%s487 + $0x38] sm:$0xf]
        %v503 = vld [vmem:[%s487 + $0x3c] sm:$0xf]
        %v520 = vunpack.c.l.b16 %v488
        %v521 = vunpack.c.l.b16 %v489
        %v522 = vunpack.c.l.b16 %v490
        %v523 = vunpack.c.l.b16 %v491
        %v524 = vunpack.c.l.b16 %v492
        %v525 = vunpack.c.l.b16 %v493
        %v526 = vunpack.c.l.b16 %v494
        %v527 = vunpack.c.l.b16 %v495
        %v528 = vunpack.c.l.b16 %v496
        %v529 = vunpack.c.l.b16 %v497
        %v530 = vunpack.c.l.b16 %v498
        %v531 = vunpack.c.l.b16 %v499
        %v532 = vunpack.c.l.b16 %v500
        %v533 = vunpack.c.l.b16 %v501
        %v534 = vunpack.c.l.b16 %v502
        %v535 = vunpack.c.l.b16 %v503
        %v536 = vpack.c.b16 %v521, %v520
        %v537 = vpack.c.b16 %v523, %v522
        %v538 = vpack.c.b16 %v525, %v524
        %v539 = vpack.c.b16 %v527, %v526
        %v540 = vpack.c.b16 %v529, %v528
        %v541 = vpack.c.b16 %v531, %v530
        %v542 = vpack.c.b16 %v533, %v532
        %v543 = vpack.c.b16 %v535, %v534
        %552 = vmatpush.bf16.msra.mxu0 %v543
        %553 = vmatpush.bf16.msra.mxu0 %v542
        %554 = vmatpush.bf16.msra.mxu0 %v541
        %555 = vmatpush.bf16.msra.mxu0 %v540
        %556 = vmatpush.bf16.msra.mxu0 %v539
        %557 = vmatpush.bf16.msra.mxu0 %v538
        %558 = vmatpush.bf16.msra.mxu0 %v537
        %559 = vmatpush.bf16.msra.mxu0 %v536
        %560 = vmatmul.bf16.gmra.mxu0 %v486
        %v561 = vpop.f32.mrf.mxu0
        %v562 = vadd.f32 0.0, %v561
        %v563 = vpop.f32.mrf.mxu0
        %564 = vdwg.mxu0
        %v565 = vadd.f32 %v482, %v562
        %s566 = sadd.s32 %s226, 9
        %s567 = smul.addr %s566, 2
        %s568 = scalar_lea.vmem %s218, %s567
        %v569 = vld [vmem:[%s568] sm:$0x1]
        %s570 = scalar_lea.vmem %s1, 256
        %v571 = vld [vmem:[%s570] sm:$0xf]
        %v572 = vld [vmem:[%s570 + $0x4] sm:$0xf]
        %v573 = vld [vmem:[%s570 + $0x8] sm:$0xf]
        %v574 = vld [vmem:[%s570 + $0xc] sm:$0xf]
        %v575 = vld [vmem:[%s570 + $0x10] sm:$0xf]
        %v576 = vld [vmem:[%s570 + $0x14] sm:$0xf]
        %v577 = vld [vmem:[%s570 + $0x18] sm:$0xf]
        %v578 = vld [vmem:[%s570 + $0x1c] sm:$0xf]
        %v579 = vld [vmem:[%s570 + $0x20] sm:$0xf]
        %v580 = vld [vmem:[%s570 + $0x24] sm:$0xf]
        %v581 = vld [vmem:[%s570 + $0x28] sm:$0xf]
        %v582 = vld [vmem:[%s570 + $0x2c] sm:$0xf]
        %v583 = vld [vmem:[%s570 + $0x30] sm:$0xf]
        %v584 = vld [vmem:[%s570 + $0x34] sm:$0xf]
        %v585 = vld [vmem:[%s570 + $0x38] sm:$0xf]
        %v586 = vld [vmem:[%s570 + $0x3c] sm:$0xf]
        %v603 = vunpack.c.l.b16 %v571
        %v604 = vunpack.c.l.b16 %v572
        %v605 = vunpack.c.l.b16 %v573
        %v606 = vunpack.c.l.b16 %v574
        %v607 = vunpack.c.l.b16 %v575
        %v608 = vunpack.c.l.b16 %v576
        %v609 = vunpack.c.l.b16 %v577
        %v610 = vunpack.c.l.b16 %v578
        %v611 = vunpack.c.l.b16 %v579
        %v612 = vunpack.c.l.b16 %v580
        %v613 = vunpack.c.l.b16 %v581
        %v614 = vunpack.c.l.b16 %v582
        %v615 = vunpack.c.l.b16 %v583
        %v616 = vunpack.c.l.b16 %v584
        %v617 = vunpack.c.l.b16 %v585
        %v618 = vunpack.c.l.b16 %v586
        %v619 = vpack.c.b16 %v604, %v603
        %v620 = vpack.c.b16 %v606, %v605
        %v621 = vpack.c.b16 %v608, %v607
        %v622 = vpack.c.b16 %v610, %v609
        %v623 = vpack.c.b16 %v612, %v611
        %v624 = vpack.c.b16 %v614, %v613
        %v625 = vpack.c.b16 %v616, %v615
        %v626 = vpack.c.b16 %v618, %v617
        %635 = vmatpush.bf16.msra.mxu0 %v626
        %636 = vmatpush.bf16.msra.mxu0 %v625
        %637 = vmatpush.bf16.msra.mxu0 %v624
        %638 = vmatpush.bf16.msra.mxu0 %v623
        %639 = vmatpush.bf16.msra.mxu0 %v622
        %640 = vmatpush.bf16.msra.mxu0 %v621
        %641 = vmatpush.bf16.msra.mxu0 %v620
        %642 = vmatpush.bf16.msra.mxu0 %v619
        %643 = vmatmul.bf16.gmra.mxu0 %v569
        %v644 = vpop.f32.mrf.mxu0
        %v645 = vadd.f32 0.0, %v644
        %v646 = vpop.f32.mrf.mxu0
        %647 = vdwg.mxu0
        %v648 = vadd.f32 %v565, %v645
        %v649 = vld [vmem:[%s485] sm:$0x3]
        %s650 = scalar_lea.vmem %s1, 320
        %v651 = vld [vmem:[%s650] sm:$0xf]
        %v652 = vld [vmem:[%s650 + $0x4] sm:$0xf]
        %v653 = vld [vmem:[%s650 + $0x8] sm:$0xf]
        %v654 = vld [vmem:[%s650 + $0xc] sm:$0xf]
        %v655 = vld [vmem:[%s650 + $0x10] sm:$0xf]
        %v656 = vld [vmem:[%s650 + $0x14] sm:$0xf]
        %v657 = vld [vmem:[%s650 + $0x18] sm:$0xf]
        %v658 = vld [vmem:[%s650 + $0x1c] sm:$0xf]
        %v659 = vld [vmem:[%s650 + $0x20] sm:$0xf]
        %v660 = vld [vmem:[%s650 + $0x24] sm:$0xf]
        %v661 = vld [vmem:[%s650 + $0x28] sm:$0xf]
        %v662 = vld [vmem:[%s650 + $0x2c] sm:$0xf]
        %v663 = vld [vmem:[%s650 + $0x30] sm:$0xf]
        %v664 = vld [vmem:[%s650 + $0x34] sm:$0xf]
        %v665 = vld [vmem:[%s650 + $0x38] sm:$0xf]
        %v666 = vld [vmem:[%s650 + $0x3c] sm:$0xf]
        %668 = vst [vmem:[#allocation1] ss:$4 sm:$0xff] %v649
        %v669 = vld.sshfl [vmem:[#allocation1] sm:$0xff pattern:$0x73625140]
        %v670 = vshrl.u32 %v669, 16
        %v672 = vshll.u32 %v669, 16
        %v674 = vrot.slane %v672, 1
        %v675 = vor.u32 %v670, %v674
        %v693 = vunpack.c.l.b16 %v651
        %v694 = vunpack.c.l.b16 %v652
        %v695 = vunpack.c.l.b16 %v653
        %v696 = vunpack.c.l.b16 %v654
        %v697 = vunpack.c.l.b16 %v655
        %v698 = vunpack.c.l.b16 %v656
        %v699 = vunpack.c.l.b16 %v657
        %v700 = vunpack.c.l.b16 %v658
        %v701 = vunpack.c.l.b16 %v659
        %v702 = vunpack.c.l.b16 %v660
        %v703 = vunpack.c.l.b16 %v661
        %v704 = vunpack.c.l.b16 %v662
        %v705 = vunpack.c.l.b16 %v663
        %v706 = vunpack.c.l.b16 %v664
        %v707 = vunpack.c.l.b16 %v665
        %v708 = vunpack.c.l.b16 %v666
        %v709 = vpack.c.b16 %v694, %v693
        %v710 = vpack.c.b16 %v696, %v695
        %v711 = vpack.c.b16 %v698, %v697
        %v712 = vpack.c.b16 %v700, %v699
        %v713 = vpack.c.b16 %v702, %v701
        %v714 = vpack.c.b16 %v704, %v703
        %v715 = vpack.c.b16 %v706, %v705
        %v716 = vpack.c.b16 %v708, %v707
        %725 = vmatpush.bf16.msra.mxu0 %v716
        %726 = vmatpush.bf16.msra.mxu0 %v715
        %727 = vmatpush.bf16.msra.mxu0 %v714
        %728 = vmatpush.bf16.msra.mxu0 %v713
        %729 = vmatpush.bf16.msra.mxu0 %v712
        %730 = vmatpush.bf16.msra.mxu0 %v711
        %731 = vmatpush.bf16.msra.mxu0 %v710
        %732 = vmatpush.bf16.msra.mxu0 %v709
        %733 = vmatmul.bf16.gmra.mxu0 %v675
        %v734 = vpop.f32.mrf.mxu0
        %v735 = vadd.f32 0.0, %v734
        %v736 = vpop.f32.mrf.mxu0
        %737 = vdwg.mxu0
        %v738 = vadd.f32 %v648, %v735
        %s739 = sadd.s32 %s226, 1
        %s740 = smul.addr %s739, 2
        %s741 = scalar_lea.vmem %s218, %s740
        %v742 = vld [vmem:[%s741] sm:$0x1]
        %s743 = scalar_lea.vmem %s1, 384
        %v744 = vld [vmem:[%s743] sm:$0xf]
        %v745 = vld [vmem:[%s743 + $0x4] sm:$0xf]
        %v746 = vld [vmem:[%s743 + $0x8] sm:$0xf]
        %v747 = vld [vmem:[%s743 + $0xc] sm:$0xf]
        %v748 = vld [vmem:[%s743 + $0x10] sm:$0xf]
        %v749 = vld [vmem:[%s743 + $0x14] sm:$0xf]
        %v750 = vld [vmem:[%s743 + $0x18] sm:$0xf]
        %v751 = vld [vmem:[%s743 + $0x1c] sm:$0xf]
        %v752 = vld [vmem:[%s743 + $0x20] sm:$0xf]
        %v753 = vld [vmem:[%s743 + $0x24] sm:$0xf]
        %v754 = vld [vmem:[%s743 + $0x28] sm:$0xf]
        %v755 = vld [vmem:[%s743 + $0x2c] sm:$0xf]
        %v756 = vld [vmem:[%s743 + $0x30] sm:$0xf]
        %v757 = vld [vmem:[%s743 + $0x34] sm:$0xf]
        %v758 = vld [vmem:[%s743 + $0x38] sm:$0xf]
        %v759 = vld [vmem:[%s743 + $0x3c] sm:$0xf]
        %v776 = vunpack.c.l.b16 %v744
        %v777 = vunpack.c.l.b16 %v745
        %v778 = vunpack.c.l.b16 %v746
        %v779 = vunpack.c.l.b16 %v747
        %v780 = vunpack.c.l.b16 %v748
        %v781 = vunpack.c.l.b16 %v749
        %v782 = vunpack.c.l.b16 %v750
        %v783 = vunpack.c.l.b16 %v751
        %v784 = vunpack.c.l.b16 %v752
        %v785 = vunpack.c.l.b16 %v753
        %v786 = vunpack.c.l.b16 %v754
        %v787 = vunpack.c.l.b16 %v755
        %v788 = vunpack.c.l.b16 %v756
        %v789 = vunpack.c.l.b16 %v757
        %v790 = vunpack.c.l.b16 %v758
        %v791 = vunpack.c.l.b16 %v759
        %v792 = vpack.c.b16 %v777, %v776
        %v793 = vpack.c.b16 %v779, %v778
        %v794 = vpack.c.b16 %v781, %v780
        %v795 = vpack.c.b16 %v783, %v782
        %v796 = vpack.c.b16 %v785, %v784
        %v797 = vpack.c.b16 %v787, %v786
        %v798 = vpack.c.b16 %v789, %v788
        %v799 = vpack.c.b16 %v791, %v790
        %808 = vmatpush.bf16.msra.mxu0 %v799
        %809 = vmatpush.bf16.msra.mxu0 %v798
        %810 = vmatpush.bf16.msra.mxu0 %v797
        %811 = vmatpush.bf16.msra.mxu0 %v796
        %812 = vmatpush.bf16.msra.mxu0 %v795
        %813 = vmatpush.bf16.msra.mxu0 %v794
        %814 = vmatpush.bf16.msra.mxu0 %v793
        %815 = vmatpush.bf16.msra.mxu0 %v792
        %816 = vmatmul.bf16.gmra.mxu0 %v742
        %v817 = vpop.f32.mrf.mxu0
        %v818 = vadd.f32 0.0, %v817
        %v819 = vpop.f32.mrf.mxu0
        %820 = vdwg.mxu0
        %v821 = vadd.f32 %v738, %v818
        %s822 = sadd.s32 %s739, 3
        %s823 = smul.addr %s822, 2
        %s824 = scalar_lea.vmem %s218, %s823
        %v825 = vld [vmem:[%s824] sm:$0x1]
        %s826 = scalar_lea.vmem %s1, 448
        %v827 = vld [vmem:[%s826] sm:$0xf]
        %v828 = vld [vmem:[%s826 + $0x4] sm:$0xf]
        %v829 = vld [vmem:[%s826 + $0x8] sm:$0xf]
        %v830 = vld [vmem:[%s826 + $0xc] sm:$0xf]
        %v831 = vld [vmem:[%s826 + $0x10] sm:$0xf]
        %v832 = vld [vmem:[%s826 + $0x14] sm:$0xf]
        %v833 = vld [vmem:[%s826 + $0x18] sm:$0xf]
        %v834 = vld [vmem:[%s826 + $0x1c] sm:$0xf]
        %v835 = vld [vmem:[%s826 + $0x20] sm:$0xf]
        %v836 = vld [vmem:[%s826 + $0x24] sm:$0xf]
        %v837 = vld [vmem:[%s826 + $0x28] sm:$0xf]
        %v838 = vld [vmem:[%s826 + $0x2c] sm:$0xf]
        %v839 = vld [vmem:[%s826 + $0x30] sm:$0xf]
        %v840 = vld [vmem:[%s826 + $0x34] sm:$0xf]
        %v841 = vld [vmem:[%s826 + $0x38] sm:$0xf]
        %v842 = vld [vmem:[%s826 + $0x3c] sm:$0xf]
        %v859 = vunpack.c.l.b16 %v827
        %v860 = vunpack.c.l.b16 %v828
        %v861 = vunpack.c.l.b16 %v829
        %v862 = vunpack.c.l.b16 %v830
        %v863 = vunpack.c.l.b16 %v831
        %v864 = vunpack.c.l.b16 %v832
        %v865 = vunpack.c.l.b16 %v833
        %v866 = vunpack.c.l.b16 %v834
        %v867 = vunpack.c.l.b16 %v835
        %v868 = vunpack.c.l.b16 %v836
        %v869 = vunpack.c.l.b16 %v837
        %v870 = vunpack.c.l.b16 %v838
        %v871 = vunpack.c.l.b16 %v839
        %v872 = vunpack.c.l.b16 %v840
        %v873 = vunpack.c.l.b16 %v841
        %v874 = vunpack.c.l.b16 %v842
        %v875 = vpack.c.b16 %v860, %v859
        %v876 = vpack.c.b16 %v862, %v861
        %v877 = vpack.c.b16 %v864, %v863
        %v878 = vpack.c.b16 %v866, %v865
        %v879 = vpack.c.b16 %v868, %v867
        %v880 = vpack.c.b16 %v870, %v869
        %v881 = vpack.c.b16 %v872, %v871
        %v882 = vpack.c.b16 %v874, %v873
        %891 = vmatpush.bf16.msra.mxu0 %v882
        %892 = vmatpush.bf16.msra.mxu0 %v881
        %893 = vmatpush.bf16.msra.mxu0 %v880
        %894 = vmatpush.bf16.msra.mxu0 %v879
        %895 = vmatpush.bf16.msra.mxu0 %v878
        %896 = vmatpush.bf16.msra.mxu0 %v877
        %897 = vmatpush.bf16.msra.mxu0 %v876
        %898 = vmatpush.bf16.msra.mxu0 %v875
        %899 = vmatmul.bf16.gmra.mxu0 %v825
        %v900 = vpop.f32.mrf.mxu0
        %v901 = vadd.f32 0.0, %v900
        %v902 = vpop.f32.mrf.mxu0
        %903 = vdwg.mxu0
        %v904 = vadd.f32 %v821, %v901
        %v905 = vld [vmem:[%s741] sm:$0x3]
        %s906 = scalar_lea.vmem %s1, 512
        %v907 = vld [vmem:[%s906] sm:$0xf]
        %v908 = vld [vmem:[%s906 + $0x4] sm:$0xf]
        %v909 = vld [vmem:[%s906 + $0x8] sm:$0xf]
        %v910 = vld [vmem:[%s906 + $0xc] sm:$0xf]
        %v911 = vld [vmem:[%s906 + $0x10] sm:$0xf]
        %v912 = vld [vmem:[%s906 + $0x14] sm:$0xf]
        %v913 = vld [vmem:[%s906 + $0x18] sm:$0xf]
        %v914 = vld [vmem:[%s906 + $0x1c] sm:$0xf]
        %v915 = vld [vmem:[%s906 + $0x20] sm:$0xf]
        %v916 = vld [vmem:[%s906 + $0x24] sm:$0xf]
        %v917 = vld [vmem:[%s906 + $0x28] sm:$0xf]
        %v918 = vld [vmem:[%s906 + $0x2c] sm:$0xf]
        %v919 = vld [vmem:[%s906 + $0x30] sm:$0xf]
        %v920 = vld [vmem:[%s906 + $0x34] sm:$0xf]
        %v921 = vld [vmem:[%s906 + $0x38] sm:$0xf]
        %v922 = vld [vmem:[%s906 + $0x3c] sm:$0xf]
        %924 = vst [vmem:[#allocation1] ss:$4 sm:$0xff] %v905
        %v925 = vld.sshfl [vmem:[#allocation1] sm:$0xff pattern:$0x73625140]
        %v926 = vshrl.u32 %v925, 16
        %v928 = vshll.u32 %v925, 16
        %v930 = vrot.slane %v928, 1
        %v931 = vor.u32 %v926, %v930
        %v949 = vunpack.c.l.b16 %v907
        %v950 = vunpack.c.l.b16 %v908
        %v951 = vunpack.c.l.b16 %v909
        %v952 = vunpack.c.l.b16 %v910
        %v953 = vunpack.c.l.b16 %v911
        %v954 = vunpack.c.l.b16 %v912
        %v955 = vunpack.c.l.b16 %v913
        %v956 = vunpack.c.l.b16 %v914
        %v957 = vunpack.c.l.b16 %v915
        %v958 = vunpack.c.l.b16 %v916
        %v959 = vunpack.c.l.b16 %v917
        %v960 = vunpack.c.l.b16 %v918
        %v961 = vunpack.c.l.b16 %v919
        %v962 = vunpack.c.l.b16 %v920
        %v963 = vunpack.c.l.b16 %v921
        %v964 = vunpack.c.l.b16 %v922
        %v965 = vpack.c.b16 %v950, %v949
        %v966 = vpack.c.b16 %v952, %v951
        %v967 = vpack.c.b16 %v954, %v953
        %v968 = vpack.c.b16 %v956, %v955
        %v969 = vpack.c.b16 %v958, %v957
        %v970 = vpack.c.b16 %v960, %v959
        %v971 = vpack.c.b16 %v962, %v961
        %v972 = vpack.c.b16 %v964, %v963
        %981 = vmatpush.bf16.msra.mxu0 %v972
        %982 = vmatpush.bf16.msra.mxu0 %v971
        %983 = vmatpush.bf16.msra.mxu0 %v970
        %984 = vmatpush.bf16.msra.mxu0 %v969
        %985 = vmatpush.bf16.msra.mxu0 %v968
        %986 = vmatpush.bf16.msra.mxu0 %v967
        %987 = vmatpush.bf16.msra.mxu0 %v966
        %988 = vmatpush.bf16.msra.mxu0 %v965
        %989 = vmatmul.bf16.gmra.mxu0 %v931
        %v990 = vpop.f32.mrf.mxu0
        %v991 = vadd.f32 0.0, %v990
        %v992 = vpop.f32.mrf.mxu0
        %993 = vdwg.mxu0
        %v994 = vadd.f32 %v904, %v991
        %v996 = vperm.slane %v223, 0
        %v998 = vadd.f32 %v994, %v996
        %v999 = vsub.f32 0.0, %v998
        %v1000 = vmul.f32 %v999, 1.442695
        %v1001 = vpow.pop %v1000
        %v1002 = vadd.f32 %v1001, 1.0
        %v1003 = vrcp.pop %v1002
        %v1004 = vmul.f32 %v998, %v1003
        %v1005 = vpack.c.bf16 %v1004, %v1004
        %v1006 = vld [vmem:[%s3] sm:$0xf]
        %v1007 = vld [vmem:[%s3 + $0x4] sm:$0xf]
        %v1008 = vld [vmem:[%s3 + $0x8] sm:$0xf]
        %v1009 = vld [vmem:[%s3 + $0xc] sm:$0xf]
        %v1010 = vld [vmem:[%s3 + $0x10] sm:$0xf]
        %v1011 = vld [vmem:[%s3 + $0x14] sm:$0xf]
        %v1012 = vld [vmem:[%s3 + $0x18] sm:$0xf]
        %v1013 = vld [vmem:[%s3 + $0x1c] sm:$0xf]
        %v1014 = vld [vmem:[%s3 + $0x20] sm:$0xf]
        %v1015 = vld [vmem:[%s3 + $0x24] sm:$0xf]
        %v1016 = vld [vmem:[%s3 + $0x28] sm:$0xf]
        %v1017 = vld [vmem:[%s3 + $0x2c] sm:$0xf]
        %v1018 = vld [vmem:[%s3 + $0x30] sm:$0xf]
        %v1019 = vld [vmem:[%s3 + $0x34] sm:$0xf]
        %v1020 = vld [vmem:[%s3 + $0x38] sm:$0xf]
        %v1021 = vld [vmem:[%s3 + $0x3c] sm:$0xf]
        %v1023 = vperm.slane %v224, 0
        %v1041 = vunpack.c.l.b16 %v1006
        %v1042 = vunpack.c.l.b16 %v1007
        %v1043 = vunpack.c.l.b16 %v1008
        %v1044 = vunpack.c.l.b16 %v1009
        %v1045 = vunpack.c.l.b16 %v1010
        %v1046 = vunpack.c.l.b16 %v1011
        %v1047 = vunpack.c.l.b16 %v1012
        %v1048 = vunpack.c.l.b16 %v1013
        %v1049 = vunpack.c.l.b16 %v1014
        %v1050 = vunpack.c.l.b16 %v1015
        %v1051 = vunpack.c.l.b16 %v1016
        %v1052 = vunpack.c.l.b16 %v1017
        %v1053 = vunpack.c.l.b16 %v1018
        %v1054 = vunpack.c.l.b16 %v1019
        %v1055 = vunpack.c.l.b16 %v1020
        %v1056 = vunpack.c.l.b16 %v1021
        %v1057 = vpack.c.b16 %v1042, %v1041
        %v1058 = vpack.c.b16 %v1044, %v1043
        %v1059 = vpack.c.b16 %v1046, %v1045
        %v1060 = vpack.c.b16 %v1048, %v1047
        %v1061 = vpack.c.b16 %v1050, %v1049
        %v1062 = vpack.c.b16 %v1052, %v1051
        %v1063 = vpack.c.b16 %v1054, %v1053
        %v1064 = vpack.c.b16 %v1056, %v1055
        %1073 = vmatpush.bf16.msra.mxu0 %v1064
        %1074 = vmatpush.bf16.msra.mxu0 %v1063
        %1075 = vmatpush.bf16.msra.mxu0 %v1062
        %1076 = vmatpush.bf16.msra.mxu0 %v1061
        %1077 = vmatpush.bf16.msra.mxu0 %v1060
        %1078 = vmatpush.bf16.msra.mxu0 %v1059
        %1079 = vmatpush.bf16.msra.mxu0 %v1058
        %1080 = vmatpush.bf16.msra.mxu0 %v1057
        %1081 = vmatmul.bf16.gmra.mxu0 %v1005
        %v1082 = vpop.f32.mrf.mxu0
        %v1083 = vadd.f32 %v1023, %v1082
        %v1084 = vpop.f32.mrf.mxu0
        %1085 = vdwg.mxu0
        %v1086 = vsub.f32 0.0, %v1083
        %v1087 = vmul.f32 %v1086, 1.442695
        %v1088 = vpow.pop %v1087
        %v1089 = vadd.f32 %v1088, 1.0
        %v1090 = vrcp.pop %v1089
        %v1091 = vmul.f32 %v1083, %v1090
        %v1092 = vpack.c.bf16 %v1091, %v1091
        %s1093 = scalar_lea.vmem %s222, %s226
        %1094 = vst [vmem:[%s1093] sm:$0x1] %v1092
      $region45: #{yolov11_backbone.9} parent=39 // loop_footer
        %s230 = sadd.s32 1, %s226
      $region46: #{yolov11_backbone.9} parent=39 // loop_footer_branch
        %225 = sbr.rel target = $region42
      $region47: #{yolov11_backbone.9} parent=39 // loop_exit
        _
      %p1095 = scmp.lt.s32.totalorder %s16, 1
      %s1096 = scalar_select %p1095, %s16, 1
      %s1097 = smul.addr %s1096, 2
      %s1098 = scalar_lea.vmem %s5, %s1097
      // Predicated region
      $region48: #{yolov11_backbone.9} parent=39 // pred_check
        %p1099 = pneg %p144
      $region49: #{yolov11_backbone.9} parent=39 // pred_check_branch
        %1101 = sbr.rel (%p1099) target = $region51
      $region50: #{yolov11_backbone.9} parent=39 // pred_region
        _
      $region51: #{yolov11_backbone.9} parent=39 // pred_fallthru
        _
    $region40: #{yolov11_backbone.9} parent=5 // pred_fallthru
      _
    %p1102 = scmp.le.s32.totalorder 2, %s11
    // Predicated region
    $region52: #{yolov11_backbone.9} parent=5 // pred_check
      %p1103 = pneg %p1102
    $region53: #{yolov11_backbone.9} parent=5 // pred_check_branch
      %1105 = sbr.rel (%p1103) target = $region55
    $region54: #{yolov11_backbone.9} parent=5 // pred_region
      %s1106 = ssub.s32 %s11, 2
      // Predicated region
      $region56: #{yolov11_backbone.9} parent=54 // pred_check
        %p1107 = pneg %p150
      $region57: #{yolov11_backbone.9} parent=54 // pred_check_branch
        %1109 = sbr.rel (%p1107) target = $region59
      $region58: #{yolov11_backbone.9} parent=54 // pred_region
        %p1110 = scmp.lt.s32.totalorder %s17, 1
        %s1111 = scalar_select %p1110, %s17, 1
        %s1112 = smul.addr %s1111, 2
        %s1113 = scalar_lea.vmem %s5, %s1112
      $region59: #{yolov11_backbone.9} parent=54 // pred_fallthru
        _
    $region55: #{yolov11_backbone.9} parent=5 // pred_fallthru
      _
  $region6: #{yolov11_backbone.9} parent=0 // loop_footer
    %s15 = sadd.s32 1, %s11
  $region7: #{yolov11_backbone.9} parent=0 // loop_footer_branch
    %10 = sbr.rel target = $region3
  $region8: #{yolov11_backbone.9} parent=0 // loop_exit
    _

</llo_original>
